<compile_context>
chip_gen: v6e
topology: v6e:2x2x1
jax: 0.10.0
libtpu: 0.0.40
codegen_flags: <defaults>
</compile_context>

<pallas_src>
import functools

import jax
import jax.numpy as jnp
from jax.experimental import pallas as pl
from jax.experimental.pallas import tpu as pltpu


# -----------------------------------------------------------------------------
# Pallas kernel: one batch element per grid step.
# -----------------------------------------------------------------------------
def _guided_filter_kernel(rn_pad_ref, rn_img_ref, mask_ref, x_ref, y_ref, o_ref,
                          *, r, eps):
    # rn_pad_ref : (Hp, Wp)  = 1/N on the r-padded domain (Hp = H+2r, Wp = W+2r)
    # rn_img_ref : (H, W)    = 1/N on the image domain
    # mask_ref   : (Hp, Wp)  = 1.0 inside the true image, 0.0 on the r-border
    # x_ref/y_ref: (1, C, H+4r, W+4r)  zero-padded inputs for this batch element
    # o_ref      : (1, 1, H, W) output tile
    c = x_ref.shape[1]
    h, w = o_ref.shape[2], o_ref.shape[3]
    hp, wp = rn_pad_ref.shape
    win = 2 * r + 1

    xp = x_ref[0]                    # (C, H+4r, W+4r), f32
    yp = y_ref[0]
    rn_pad = rn_pad_ref[...]         # (Hp, Wp)
    rn_img = rn_img_ref[...]         # (H, W)
    interior = mask_ref[...]         # (Hp, Wp)

    def box(slab, oh, ow):
        # slab: (M, oh + 2r, ow + 2r) -> (M, oh, ow).
        # Border-clipped (2r+1)^2 box sum realized as a separable
        # shift-and-add over the zero-padded slab.  Pure VPU/XLU work,
        # exact f32 (no MXU, no precision emulation).
        tmp = slab[:, :, 0:ow]
        for d in range(1, win):
            tmp = tmp + slab[:, :, d:d + ow]
        out = tmp[:, 0:oh, :]
        for d in range(1, win):
            out = out + tmp[:, d:d + oh, :]
        return out

    # ---- Stage 1: single fused box pass over [x, y, x*y, x*x] --------------
    slab1 = jnp.concatenate([xp, yp, xp * yp, xp * xp], axis=0)   # (4C, H+4r, W+4r)
    means = box(slab1, hp, wp) * rn_pad                           # (4C, Hp, Wp)

    mean_x = means[0 * c:1 * c]
    mean_y = means[1 * c:2 * c]
    mean_xy = means[2 * c:3 * c]
    mean_xx = means[3 * c:4 * c]

    # Covariance / variance algebra stays in f32 (cancellation-prone).
    cov_xy = mean_xy - mean_x * mean_y
    var_x = mean_xx - mean_x * mean_x
    A = cov_xy / (var_x + eps)
    b = mean_y - A * mean_x

    # Zero A, b outside the true image so stage 2's full-window sum over the
    # padded domain equals the reference's border-clipped box filter.
    A = jnp.where(interior > 0.5, A, 0.0)
    b = jnp.where(interior > 0.5, b, 0.0)

    # ---- Stage 2: single fused box pass over [A, b] -------------------------
    slab2 = jnp.concatenate([A, b], axis=0)                       # (2C, Hp, Wp)
    means2 = box(slab2, h, w) * rn_img                            # (2C, H, W)
    mean_A = means2[:c]
    mean_b = means2[c:]

    x_valid = xp[:, 2 * r:2 * r + h, 2 * r:2 * r + w]             # (C, H, W)
    res = jnp.mean(mean_A * x_valid + mean_b, axis=0, keepdims=True)  # (1, H, W)
    o_ref[...] = res[None].astype(o_ref.dtype)                    # (1, 1, H, W)


# -----------------------------------------------------------------------------
# Wrapper: pads inputs, precomputes 1/N and the interior mask, launches kernel.
# -----------------------------------------------------------------------------
def _win_counts(n, r):
    # #image pixels in a radius-r window, for centers on the r-padded axis.
    pos = jnp.arange(-r, n + r)                      # image coordinates
    lo = jnp.maximum(pos - r, 0)
    hi = jnp.minimum(pos + r, n - 1)
    return (hi - lo + 1).astype(jnp.float32)         # (n + 2r,)


def _vmem_limit_bytes(c, h, w, r):
    hp, wp = h + 2 * r, w + 2 * r
    hp2, wp2 = h + 4 * r, w + 4 * r
    itemsize = 4
    io = itemsize * (2 * c * hp2 * wp2 + 2 * hp * wp + 2 * h * w)
    live = itemsize * c * (4 * hp2 * wp2 + 4 * hp2 * wp + 10 * hp * wp
                           + 2 * hp * w + 5 * h * w)
    est = 2 * io + live                              # in/out are double-buffered
    return int(min(100 * 2 ** 20, max(32 * 2 ** 20, 2 * est)))


def guided_filter(x, y, r, eps=1e-8):
    n_x, c_x, h_x, w_x = x.shape
    n_y, c_y, h_y, w_y = y.shape
    assert n_x == n_y
    assert h_x == h_y and w_x == w_y
    assert c_x == c_y
    assert h_x > 2 * r + 1 and w_x > 2 * r + 1

    hp, wp = h_x + 2 * r, w_x + 2 * r
    hp2, wp2 = h_x + 4 * r, w_x + 4 * r

    x = x.astype(jnp.float32)
    y = y.astype(jnp.float32)

    # Zero-pad by 2r: lets the kernel evaluate means/A/b on the r-padded domain
    # with plain static slices (no in-kernel edge concatenation).
    pad4 = ((0, 0), (0, 0), (2 * r, 2 * r), (2 * r, 2 * r))
    xp = jnp.pad(x, pad4)
    yp = jnp.pad(y, pad4)

    # Batch-invariant normalizer, hoisted: 1/N precomputed once (exact; N is a
    # small positive integer everywhere), so the kernel only multiplies.
    cnt_h = _win_counts(h_x, r)                      # (Hp,)
    cnt_w = _win_counts(w_x, r)                      # (Wp,)
    recip_n_pad = 1.0 / (cnt_h[:, None] * cnt_w[None, :])                  # (Hp, Wp)
    recip_n_img = 1.0 / (cnt_h[r:r + h_x, None] * cnt_w[None, r:r + w_x])  # (H, W)
    interior = jnp.pad(jnp.ones((h_x, w_x), jnp.float32), r)               # (Hp, Wp)

    kernel = functools.partial(_guided_filter_kernel, r=int(r), eps=float(eps))

    return pl.pallas_call(
        kernel,
        out_shape=jax.ShapeDtypeStruct((n_x, 1, h_x, w_x), x.dtype),
        grid_spec=pltpu.PrefetchScalarGridSpec(
            num_scalar_prefetch=0,
            grid=(n_x,),
            in_specs=[
                pl.BlockSpec((hp, wp), lambda n: (0, 0)),        # 1/N (padded)
                pl.BlockSpec((h_x, w_x), lambda n: (0, 0)),      # 1/N (image)
                pl.BlockSpec((hp, wp), lambda n: (0, 0)),        # interior mask
                pl.BlockSpec((1, c_x, hp2, wp2), lambda n: (n, 0, 0, 0)),
                pl.BlockSpec((1, c_x, hp2, wp2), lambda n: (n, 0, 0, 0)),
            ],
            out_specs=pl.BlockSpec((1, 1, h_x, w_x), lambda n: (n, 0, 0, 0)),
        ),
        compiler_params=pltpu.CompilerParams(
            dimension_semantics=("parallel",),
            vmem_limit_bytes=_vmem_limit_bytes(c_x, h_x, w_x, r)),
    )(recip_n_pad, recip_n_img, interior, xp, yp)


# -----------------------------------------------------------------------------
# Pure-JAX reference (mirrors the PyTorch cumsum / diff_x / diff_y code).
# -----------------------------------------------------------------------------
def _boxfilter_ref(v, r):
    cs = jnp.cumsum(v, axis=2)
    vh = jnp.concatenate(
        [cs[:, :, r:2 * r + 1],
         cs[:, :, 2 * r + 1:] - cs[:, :, :-2 * r - 1],
         cs[:, :, -1:] - cs[:, :, -2 * r - 1:-r - 1]], axis=2)
    cs = jnp.cumsum(vh, axis=3)
    return jnp.concatenate(
        [cs[:, :, :, r:2 * r + 1],
         cs[:, :, :, 2 * r + 1:] - cs[:, :, :, :-2 * r - 1],
         cs[:, :, :, -1:] - cs[:, :, :, -2 * r - 1:-r - 1]], axis=3)


def guided_filter_ref(x, y, r, eps=1e-8):
    _, _, h, w = x.shape
    N = _boxfilter_ref(jnp.ones((1, 1, h, w), x.dtype), r)
    mean_x = _boxfilter_ref(x, r) / N
    mean_y = _boxfilter_ref(y, r) / N
    cov_xy = _boxfilter_ref(x * y, r) / N - mean_x * mean_y
    var_x = _boxfilter_ref(x * x, r) / N - mean_x * mean_x
    A = cov_xy / (var_x + eps)
    b = mean_y - A * mean_x
    mean_A = _boxfilter_ref(A, r) / N
    mean_b = _boxfilter_ref(b, r) / N
    return jnp.mean(mean_A * x + mean_b, axis=1, keepdims=True)


if __name__ == "__main__":
    # GuidedFilter(r=3, eps=1e-8); deterministic "constructor" scalars.
    r, eps = 3, 1e-8
    B, C, H, W = 2, 4, 16, 16  # H, W > 2r + 1 = 7

    key = jax.random.PRNGKey(0)
    kx, ky = jax.random.split(key)
    x = jax.random.normal(kx, (B, C, H, W), dtype=jnp.float32)
    y = jax.random.normal(ky, (B, C, H, W), dtype=jnp.float32)

    out = guided_filter(x, y, r, eps)
    out = jax.block_until_ready(out)
    assert out.shape == (B, 1, H, W), out.shape

    ref = jax.block_until_ready(guided_filter_ref(x, y, r, eps))
    assert jnp.allclose(out, ref, rtol=1e-2, atol=1e-3), float(
        jnp.max(jnp.abs(out - ref)))

    print("KERNEL_OK")
</pallas_src>

<mosaic_0001>
module attributes {stable_mosaic.version = 11 : i64} {
  func.func @_guided_filter_kernel(%arg0: i32, %arg1: memref<22x22xf32, #tpu.memory_space<vmem>>, %arg2: memref<16x16xf32, #tpu.memory_space<vmem>>, %arg3: memref<22x22xf32, #tpu.memory_space<vmem>>, %arg4: memref<1x4x28x28xf32, #tpu.memory_space<vmem>>, %arg5: memref<1x4x28x28xf32, #tpu.memory_space<vmem>>, %arg6: memref<1x1x16x16xf32, #tpu.memory_space<vmem>>) attributes {dimension_semantics = [#tpu.dimension_semantics<parallel>], iteration_bounds = array<i64: 2>, scalar_prefetch = 0 : i64, scratch_operands = 0 : i64, tpu.core_type = #tpu.core_type<tc>, window_params = [{pipeline_mode = #tpu.pipeline_mode<synchronous>, transform_indices = @transform_0, window_bounds = array<i64: 22, 22>}, {pipeline_mode = #tpu.pipeline_mode<synchronous>, transform_indices = @transform_1, window_bounds = array<i64: 16, 16>}, {pipeline_mode = #tpu.pipeline_mode<synchronous>, transform_indices = @transform_2, window_bounds = array<i64: 22, 22>}, {transform_indices = @transform_3, window_bounds = array<i64: 1, 4, 28, 28>}, {transform_indices = @transform_4, window_bounds = array<i64: 1, 4, 28, 28>}, {transform_indices = @transform_5, window_bounds = array<i64: 1, 1, 16, 16>}]} {
    %c0 = arith.constant 0 : index
    %c0_0 = arith.constant 0 : index
    %c0_1 = arith.constant 0 : index
    %c0_2 = arith.constant 0 : index
    %0 = vector.load %arg4[%c0, %c0_0, %c0_1, %c0_2] : memref<1x4x28x28xf32, #tpu.memory_space<vmem>>, vector<1x4x28x28xf32>
    %1 = vector.shape_cast %0 : vector<1x4x28x28xf32> to vector<4x28x28xf32>
    %c0_3 = arith.constant 0 : index
    %c0_4 = arith.constant 0 : index
    %c0_5 = arith.constant 0 : index
    %c0_6 = arith.constant 0 : index
    %2 = vector.load %arg5[%c0_3, %c0_4, %c0_5, %c0_6] : memref<1x4x28x28xf32, #tpu.memory_space<vmem>>, vector<1x4x28x28xf32>
    %3 = vector.shape_cast %2 : vector<1x4x28x28xf32> to vector<4x28x28xf32>
    %c0_7 = arith.constant 0 : index
    %c0_8 = arith.constant 0 : index
    %4 = vector.load %arg1[%c0_7, %c0_8] : memref<22x22xf32, #tpu.memory_space<vmem>>, vector<22x22xf32>
    %c0_9 = arith.constant 0 : index
    %c0_10 = arith.constant 0 : index
    %5 = vector.load %arg2[%c0_9, %c0_10] : memref<16x16xf32, #tpu.memory_space<vmem>>, vector<16x16xf32>
    %c0_11 = arith.constant 0 : index
    %c0_12 = arith.constant 0 : index
    %6 = vector.load %arg3[%c0_11, %c0_12] : memref<22x22xf32, #tpu.memory_space<vmem>>, vector<22x22xf32>
    %7 = arith.mulf %1, %3 : vector<4x28x28xf32>
    %8 = arith.mulf %1, %1 : vector<4x28x28xf32>
    %9 = tpu.concatenate %1, %3, %7, %8 in 0 : vector<4x28x28xf32>, vector<4x28x28xf32>, vector<4x28x28xf32>, vector<4x28x28xf32> -> vector<16x28x28xf32>
    %10 = vector.extract_strided_slice %9 {offsets = [0, 0, 0], sizes = [16, 28, 22], strides = [1, 1, 1]} : vector<16x28x28xf32> to vector<16x28x22xf32>
    %11 = vector.extract_strided_slice %9 {offsets = [0, 0, 1], sizes = [16, 28, 22], strides = [1, 1, 1]} : vector<16x28x28xf32> to vector<16x28x22xf32>
    %12 = arith.addf %10, %11 : vector<16x28x22xf32>
    %13 = vector.extract_strided_slice %9 {offsets = [0, 0, 2], sizes = [16, 28, 22], strides = [1, 1, 1]} : vector<16x28x28xf32> to vector<16x28x22xf32>
    %14 = arith.addf %12, %13 : vector<16x28x22xf32>
    %15 = vector.extract_strided_slice %9 {offsets = [0, 0, 3], sizes = [16, 28, 22], strides = [1, 1, 1]} : vector<16x28x28xf32> to vector<16x28x22xf32>
    %16 = arith.addf %14, %15 : vector<16x28x22xf32>
    %17 = vector.extract_strided_slice %9 {offsets = [0, 0, 4], sizes = [16, 28, 22], strides = [1, 1, 1]} : vector<16x28x28xf32> to vector<16x28x22xf32>
    %18 = arith.addf %16, %17 : vector<16x28x22xf32>
    %19 = vector.extract_strided_slice %9 {offsets = [0, 0, 5], sizes = [16, 28, 22], strides = [1, 1, 1]} : vector<16x28x28xf32> to vector<16x28x22xf32>
    %20 = arith.addf %18, %19 : vector<16x28x22xf32>
    %21 = vector.extract_strided_slice %9 {offsets = [0, 0, 6], sizes = [16, 28, 22], strides = [1, 1, 1]} : vector<16x28x28xf32> to vector<16x28x22xf32>
    %22 = arith.addf %20, %21 : vector<16x28x22xf32>
    %23 = vector.extract_strided_slice %22 {offsets = [0, 0, 0], sizes = [16, 22, 22], strides = [1, 1, 1]} : vector<16x28x22xf32> to vector<16x22x22xf32>
    %24 = vector.extract_strided_slice %22 {offsets = [0, 1, 0], sizes = [16, 22, 22], strides = [1, 1, 1]} : vector<16x28x22xf32> to vector<16x22x22xf32>
    %25 = arith.addf %23, %24 : vector<16x22x22xf32>
    %26 = vector.extract_strided_slice %22 {offsets = [0, 2, 0], sizes = [16, 22, 22], strides = [1, 1, 1]} : vector<16x28x22xf32> to vector<16x22x22xf32>
    %27 = arith.addf %25, %26 : vector<16x22x22xf32>
    %28 = vector.extract_strided_slice %22 {offsets = [0, 3, 0], sizes = [16, 22, 22], strides = [1, 1, 1]} : vector<16x28x22xf32> to vector<16x22x22xf32>
    %29 = arith.addf %27, %28 : vector<16x22x22xf32>
    %30 = vector.extract_strided_slice %22 {offsets = [0, 4, 0], sizes = [16, 22, 22], strides = [1, 1, 1]} : vector<16x28x22xf32> to vector<16x22x22xf32>
    %31 = arith.addf %29, %30 : vector<16x22x22xf32>
    %32 = vector.extract_strided_slice %22 {offsets = [0, 5, 0], sizes = [16, 22, 22], strides = [1, 1, 1]} : vector<16x28x22xf32> to vector<16x22x22xf32>
    %33 = arith.addf %31, %32 : vector<16x22x22xf32>
    %34 = vector.extract_strided_slice %22 {offsets = [0, 6, 0], sizes = [16, 22, 22], strides = [1, 1, 1]} : vector<16x28x22xf32> to vector<16x22x22xf32>
    %35 = arith.addf %33, %34 : vector<16x22x22xf32>
    %36 = vector.shape_cast %4 : vector<22x22xf32> to vector<1x22x22xf32>
    %37 = vector.broadcast %36 : vector<1x22x22xf32> to vector<16x22x22xf32>
    %38 = arith.mulf %35, %37 : vector<16x22x22xf32>
    %39 = vector.extract_strided_slice %38 {offsets = [0, 0, 0], sizes = [4, 22, 22], strides = [1, 1, 1]} : vector<16x22x22xf32> to vector<4x22x22xf32>
    %40 = vector.extract_strided_slice %38 {offsets = [4, 0, 0], sizes = [4, 22, 22], strides = [1, 1, 1]} : vector<16x22x22xf32> to vector<4x22x22xf32>
    %41 = vector.extract_strided_slice %38 {offsets = [8, 0, 0], sizes = [4, 22, 22], strides = [1, 1, 1]} : vector<16x22x22xf32> to vector<4x22x22xf32>
    %42 = vector.extract_strided_slice %38 {offsets = [12, 0, 0], sizes = [4, 22, 22], strides = [1, 1, 1]} : vector<16x22x22xf32> to vector<4x22x22xf32>
    %43 = arith.mulf %39, %40 : vector<4x22x22xf32>
    %44 = arith.subf %41, %43 : vector<4x22x22xf32>
    %45 = arith.mulf %39, %39 : vector<4x22x22xf32>
    %46 = arith.subf %42, %45 : vector<4x22x22xf32>
    %cst = arith.constant 9.99999993E-9 : f32
    %47 = vector.broadcast %cst : f32 to vector<4x22x22xf32>
    %48 = arith.addf %46, %47 : vector<4x22x22xf32>
    %49 = arith.divf %44, %48 : vector<4x22x22xf32>
    %50 = arith.mulf %49, %39 : vector<4x22x22xf32>
    %51 = arith.subf %40, %50 : vector<4x22x22xf32>
    %cst_13 = arith.constant 5.000000e-01 : f32
    %52 = vector.broadcast %cst_13 : f32 to vector<22x22xf32>
    %53 = arith.cmpf ogt, %6, %52 : vector<22x22xf32>
    %cst_14 = arith.constant 0.000000e+00 : f32
    %54 = vector.shape_cast %53 : vector<22x22xi1> to vector<1x22x22xi1>
    %55 = vector.broadcast %54 : vector<1x22x22xi1> to vector<4x22x22xi1>
    %56 = vector.broadcast %cst_14 : f32 to vector<4x22x22xf32>
    %57 = arith.select %55, %49, %56 : vector<4x22x22xi1>, vector<4x22x22xf32>
    %cst_15 = arith.constant 5.000000e-01 : f32
    %58 = vector.broadcast %cst_15 : f32 to vector<22x22xf32>
    %59 = arith.cmpf ogt, %6, %58 : vector<22x22xf32>
    %cst_16 = arith.constant 0.000000e+00 : f32
    %60 = vector.shape_cast %59 : vector<22x22xi1> to vector<1x22x22xi1>
    %61 = vector.broadcast %60 : vector<1x22x22xi1> to vector<4x22x22xi1>
    %62 = vector.broadcast %cst_16 : f32 to vector<4x22x22xf32>
    %63 = arith.select %61, %51, %62 : vector<4x22x22xi1>, vector<4x22x22xf32>
    %64 = tpu.concatenate %57, %63 in 0 : vector<4x22x22xf32>, vector<4x22x22xf32> -> vector<8x22x22xf32>
    %65 = vector.extract_strided_slice %64 {offsets = [0, 0, 0], sizes = [8, 22, 16], strides = [1, 1, 1]} : vector<8x22x22xf32> to vector<8x22x16xf32>
    %66 = vector.extract_strided_slice %64 {offsets = [0, 0, 1], sizes = [8, 22, 16], strides = [1, 1, 1]} : vector<8x22x22xf32> to vector<8x22x16xf32>
    %67 = arith.addf %65, %66 : vector<8x22x16xf32>
    %68 = vector.extract_strided_slice %64 {offsets = [0, 0, 2], sizes = [8, 22, 16], strides = [1, 1, 1]} : vector<8x22x22xf32> to vector<8x22x16xf32>
    %69 = arith.addf %67, %68 : vector<8x22x16xf32>
    %70 = vector.extract_strided_slice %64 {offsets = [0, 0, 3], sizes = [8, 22, 16], strides = [1, 1, 1]} : vector<8x22x22xf32> to vector<8x22x16xf32>
    %71 = arith.addf %69, %70 : vector<8x22x16xf32>
    %72 = vector.extract_strided_slice %64 {offsets = [0, 0, 4], sizes = [8, 22, 16], strides = [1, 1, 1]} : vector<8x22x22xf32> to vector<8x22x16xf32>
    %73 = arith.addf %71, %72 : vector<8x22x16xf32>
    %74 = vector.extract_strided_slice %64 {offsets = [0, 0, 5], sizes = [8, 22, 16], strides = [1, 1, 1]} : vector<8x22x22xf32> to vector<8x22x16xf32>
    %75 = arith.addf %73, %74 : vector<8x22x16xf32>
    %76 = vector.extract_strided_slice %64 {offsets = [0, 0, 6], sizes = [8, 22, 16], strides = [1, 1, 1]} : vector<8x22x22xf32> to vector<8x22x16xf32>
    %77 = arith.addf %75, %76 : vector<8x22x16xf32>
    %78 = vector.extract_strided_slice %77 {offsets = [0, 0, 0], sizes = [8, 16, 16], strides = [1, 1, 1]} : vector<8x22x16xf32> to vector<8x16x16xf32>
    %79 = vector.extract_strided_slice %77 {offsets = [0, 1, 0], sizes = [8, 16, 16], strides = [1, 1, 1]} : vector<8x22x16xf32> to vector<8x16x16xf32>
    %80 = arith.addf %78, %79 : vector<8x16x16xf32>
    %81 = vector.extract_strided_slice %77 {offsets = [0, 2, 0], sizes = [8, 16, 16], strides = [1, 1, 1]} : vector<8x22x16xf32> to vector<8x16x16xf32>
    %82 = arith.addf %80, %81 : vector<8x16x16xf32>
    %83 = vector.extract_strided_slice %77 {offsets = [0, 3, 0], sizes = [8, 16, 16], strides = [1, 1, 1]} : vector<8x22x16xf32> to vector<8x16x16xf32>
    %84 = arith.addf %82, %83 : vector<8x16x16xf32>
    %85 = vector.extract_strided_slice %77 {offsets = [0, 4, 0], sizes = [8, 16, 16], strides = [1, 1, 1]} : vector<8x22x16xf32> to vector<8x16x16xf32>
    %86 = arith.addf %84, %85 : vector<8x16x16xf32>
    %87 = vector.extract_strided_slice %77 {offsets = [0, 5, 0], sizes = [8, 16, 16], strides = [1, 1, 1]} : vector<8x22x16xf32> to vector<8x16x16xf32>
    %88 = arith.addf %86, %87 : vector<8x16x16xf32>
    %89 = vector.extract_strided_slice %77 {offsets = [0, 6, 0], sizes = [8, 16, 16], strides = [1, 1, 1]} : vector<8x22x16xf32> to vector<8x16x16xf32>
    %90 = arith.addf %88, %89 : vector<8x16x16xf32>
    %91 = vector.shape_cast %5 : vector<16x16xf32> to vector<1x16x16xf32>
    %92 = vector.broadcast %91 : vector<1x16x16xf32> to vector<8x16x16xf32>
    %93 = arith.mulf %90, %92 : vector<8x16x16xf32>
    %94 = vector.extract_strided_slice %93 {offsets = [0, 0, 0], sizes = [4, 16, 16], strides = [1, 1, 1]} : vector<8x16x16xf32> to vector<4x16x16xf32>
    %95 = vector.extract_strided_slice %93 {offsets = [4, 0, 0], sizes = [4, 16, 16], strides = [1, 1, 1]} : vector<8x16x16xf32> to vector<4x16x16xf32>
    %96 = vector.extract_strided_slice %1 {offsets = [0, 6, 6], sizes = [4, 16, 16], strides = [1, 1, 1]} : vector<4x28x28xf32> to vector<4x16x16xf32>
    %97 = arith.mulf %94, %96 : vector<4x16x16xf32>
    %98 = arith.addf %97, %95 : vector<4x16x16xf32>
    %cst_17 = arith.constant dense<0.000000e+00> : vector<16x16xf32>
    %99 = vector.multi_reduction <add>, %98, %cst_17 [0] : vector<4x16x16xf32> to vector<16x16xf32>
    %100 = vector.shape_cast %99 : vector<16x16xf32> to vector<1x16x16xf32>
    %cst_18 = arith.constant 4.000000e+00 : f32
    %101 = vector.broadcast %cst_18 : f32 to vector<1x16x16xf32>
    %102 = arith.divf %100, %101 : vector<1x16x16xf32>
    %103 = vector.shape_cast %102 : vector<1x16x16xf32> to vector<1x1x16x16xf32>
    %c0_19 = arith.constant 0 : index
    %c0_20 = arith.constant 0 : index
    %c0_21 = arith.constant 0 : index
    %c0_22 = arith.constant 0 : index
    %104 = vector.load %arg6[%c0_19, %c0_20, %c0_21, %c0_22] : memref<1x1x16x16xf32, #tpu.memory_space<vmem>>, vector<1x1x16x16xf32>
    tpu.vector_store %arg6[%c0_19, %c0_20, %c0_21, %c0_22], %103 {strides = array<i32>} : memref<1x1x16x16xf32, #tpu.memory_space<vmem>>, vector<1x1x16x16xf32>,
    return
  }
  func.func @transform_0(%arg0: i32) -> (i32, i32) {
    %c0_i32 = arith.constant 0 : i32
    %c0_i32_0 = arith.constant 0 : i32
    %c0_i32_1 = arith.constant 0 : i32
    return %c0_i32, %c0_i32_0 : i32, i32
  }
  func.func @transform_1(%arg0: i32) -> (i32, i32) {
    %c0_i32 = arith.constant 0 : i32
    %c0_i32_0 = arith.constant 0 : i32
    %c0_i32_1 = arith.constant 0 : i32
    return %c0_i32, %c0_i32_0 : i32, i32
  }
  func.func @transform_2(%arg0: i32) -> (i32, i32) {
    %c0_i32 = arith.constant 0 : i32
    %c0_i32_0 = arith.constant 0 : i32
    %c0_i32_1 = arith.constant 0 : i32
    return %c0_i32, %c0_i32_0 : i32, i32
  }
  func.func @transform_3(%arg0: i32) -> (i32, i32, i32, i32) {
    %c0_i32 = arith.constant 0 : i32
    %c0_i32_0 = arith.constant 0 : i32
    %c0_i32_1 = arith.constant 0 : i32
    %c0_i32_2 = arith.constant 0 : i32
    return %arg0, %c0_i32, %c0_i32_0, %c0_i32_1 : i32, i32, i32, i32
  }
  func.func @transform_4(%arg0: i32) -> (i32, i32, i32, i32) {
    %c0_i32 = arith.constant 0 : i32
    %c0_i32_0 = arith.constant 0 : i32
    %c0_i32_1 = arith.constant 0 : i32
    %c0_i32_2 = arith.constant 0 : i32
    return %arg0, %c0_i32, %c0_i32_0, %c0_i32_1 : i32, i32, i32, i32
  }
  func.func @transform_5(%arg0: i32) -> (i32, i32, i32, i32) {
    %c0_i32 = arith.constant 0 : i32
    %c0_i32_0 = arith.constant 0 : i32
    %c0_i32_1 = arith.constant 0 : i32
    %c0_i32_2 = arith.constant 0 : i32
    return %arg0, %c0_i32, %c0_i32_0, %c0_i32_1 : i32, i32, i32, i32
  }
}

</mosaic_0001>

<llo_original>
// kernel: tpu_custom_call.1
$region0: #{tpu_custom_call.1}
  #allocation0 [shape = 'u32[]', space=smem, size = 0x4, offset = 0x4, fixed_abs, tag = 'smem constant byte address 0x4 - core index']
  #allocation1 [shape = 'u32[144,128]{1,0:T(1,128)}', space=vmem, size = 0x12000, scoped, tag = 'internal scratch']
  %s0 = inlined_call_operand.vmem [shape: f32[22,22], index: 0, kind: input, shape index: {}]
  %s1 = inlined_call_operand.vmem [shape: f32[16,16], index: 1, kind: input, shape index: {}]
  %s2 = inlined_call_operand.vmem [shape: f32[22,22], index: 2, kind: input, shape index: {}]
  %s3 = inlined_call_operand.vmem [shape: f32[2,4,28,28], index: 3, kind: input, shape index: {}]
  %s4 = inlined_call_operand.vmem [shape: f32[2,4,28,28], index: 4, kind: input, shape index: {}]
  %s5 = inlined_call_operand.hbm [shape: f32[2,1,16,16], index: 5, kind: output, shape index: {}]
  %s6 = sld [smem:[#allocation0]]
  $region53: #{tpu_custom_call.1} parent=0
    _
  %s8 = ssub.s32 1, %s6
  %s9 = scalar_select 0, %s8, %s6
  $region1: #{tpu_custom_call.1} parent=0
    #allocation2 [shape = 'u8[16384]{0}', space=vmem, size = 0x4000, scoped, tag = 'output window, operand 0']
    #allocation3 [shape = 's32[2]{0}', space=sflag, size = 0x8, scoped, tag = 'scoped memory for tpu_custom_call.1']
    %10 = vsyncpa [#allocation3], 0
    %s11 = scalar_lea.sflag [#allocation3], 1
    %12 = vsyncpa %s11, 0
    loop: start=0, step=1, limit=4
    $region2: #{tpu_custom_call.1} parent=1 // loop_pre_header
      _
    $region3: #{tpu_custom_call.1} parent=1 // loop_header
      %s14 = sphi 0, %s18
      %p15 = scmp.ge.s32.totalorder %s14, 4
      %s22 = sphi 0, %s22
      %s24 = sphi 0, %s22
      %s25 = sphi 0, %s24
      %s39 = sphi 0, %s25
      %s43 = sphi 0, %s43
      %s45 = sphi 0, %s43
      %s46 = sphi 0, %s45
      %s60 = sphi 0, %s46
      %s64 = sphi 0, %s64
      %s66 = sphi 0, %s64
      %s67 = sphi 0, %s66
      %s81 = sphi 0, %s67
      %s87 = sphi 0, %s89
      %s90 = sphi 0, %s87
      %s91 = sphi 0, %s90
      %s107 = sphi 0, %s91
      %s113 = sphi 0, %s115
      %s116 = sphi 0, %s113
      %s117 = sphi 0, %s116
      %s133 = sphi 0, %s117
      %s139 = sphi 0, %s141
      %s142 = sphi 0, %s139
      %s143 = sphi 0, %s142
      %s159 = sphi 0, %s143
    $region4: #{tpu_custom_call.1} parent=1 // loop_header_branch
      %17 = sbr.rel (%p15) target = $region8
    $region5: #{tpu_custom_call.1} parent=1 // loop_body
      %s19 = ssub.s32 %s14, 1
      %s20 = ssub.s32 %s14, 2
      %s21 = sadd.s32 %s14, 1
      %s23 = sadd.s32 %s22, 1
      %p26 = scmp.eq.s32.totalorder %s14, 1
      %p27 = scmp.ne.s32.totalorder %s22, %s24
      %p28 = scmp.eq.s32.totalorder %s14, 0
      %p29 = por %p27, %p28
      %p30 = scmp.ne.s32.totalorder %s22, %s24
      %p31 = scmp.eq.s32.totalorder %s19, 1
      %p32 = por %p30, %p31
      %p33 = scmp.ne.s32.totalorder %s24, %s25
      %p34 = scmp.eq.s32.totalorder %s19, 0
      %p35 = por %p33, %p34
      %p36 = scmp.ne.s32.totalorder %s24, %s25
      %p37 = scmp.eq.s32.totalorder %s20, 1
      %p38 = por %p36, %p37
      %p40 = scmp.ne.s32.totalorder %s25, %s39
      %p41 = scmp.eq.s32.totalorder %s20, 0
      %p42 = por %p40, %p41
      %s44 = sadd.s32 %s43, 1
      %p47 = scmp.eq.s32.totalorder %s14, 1
      %p48 = scmp.ne.s32.totalorder %s43, %s45
      %p49 = scmp.eq.s32.totalorder %s14, 0
      %p50 = por %p48, %p49
      %p51 = scmp.ne.s32.totalorder %s43, %s45
      %p52 = scmp.eq.s32.totalorder %s19, 1
      %p53 = por %p51, %p52
      %p54 = scmp.ne.s32.totalorder %s45, %s46
      %p55 = scmp.eq.s32.totalorder %s19, 0
      %p56 = por %p54, %p55
      %p57 = scmp.ne.s32.totalorder %s45, %s46
      %p58 = scmp.eq.s32.totalorder %s20, 1
      %p59 = por %p57, %p58
      %p61 = scmp.ne.s32.totalorder %s46, %s60
      %p62 = scmp.eq.s32.totalorder %s20, 0
      %p63 = por %p61, %p62
      %s65 = sadd.s32 %s64, 1
      %p68 = scmp.eq.s32.totalorder %s14, 1
      %p69 = scmp.ne.s32.totalorder %s64, %s66
      %p70 = scmp.eq.s32.totalorder %s14, 0
      %p71 = por %p69, %p70
      %p72 = scmp.ne.s32.totalorder %s64, %s66
      %p73 = scmp.eq.s32.totalorder %s19, 1
      %p74 = por %p72, %p73
      %p75 = scmp.ne.s32.totalorder %s66, %s67
      %p76 = scmp.eq.s32.totalorder %s19, 0
      %p77 = por %p75, %p76
      %p78 = scmp.ne.s32.totalorder %s66, %s67
      %p79 = scmp.eq.s32.totalorder %s20, 1
      %p80 = por %p78, %p79
      %p82 = scmp.ne.s32.totalorder %s67, %s81
      %p83 = scmp.eq.s32.totalorder %s20, 0
      %p84 = por %p82, %p83
      %s85 = ssub.s32 %s14, %s21
      %p86 = scmp.eq.s32.totalorder %s85, 0
      %s88 = sadd.s32 %s87, 1
      %s89 = scalar_select %p86, %s87, %s88
      %p92 = pneg %p86
      %p93 = scmp.eq.s32.totalorder %s14, 1
      %p94 = por %p92, %p93
      %p95 = scmp.ne.s32.totalorder %s87, %s90
      %p96 = scmp.eq.s32.totalorder %s14, 0
      %p97 = por %p95, %p96
      %p98 = scmp.ne.s32.totalorder %s87, %s90
      %p99 = scmp.eq.s32.totalorder %s19, 1
      %p100 = por %p98, %p99
      %p101 = scmp.ne.s32.totalorder %s90, %s91
      %p102 = scmp.eq.s32.totalorder %s19, 0
      %p103 = por %p101, %p102
      %p104 = scmp.ne.s32.totalorder %s90, %s91
      %p105 = scmp.eq.s32.totalorder %s20, 1
      %p106 = por %p104, %p105
      %p108 = scmp.ne.s32.totalorder %s91, %s107
      %p109 = scmp.eq.s32.totalorder %s20, 0
      %p110 = por %p108, %p109
      %s111 = ssub.s32 %s14, %s21
      %p112 = scmp.eq.s32.totalorder %s111, 0
      %s114 = sadd.s32 %s113, 1
      %s115 = scalar_select %p112, %s113, %s114
      %p118 = pneg %p112
      %p119 = scmp.eq.s32.totalorder %s14, 1
      %p120 = por %p118, %p119
      %p121 = scmp.ne.s32.totalorder %s113, %s116
      %p122 = scmp.eq.s32.totalorder %s14, 0
      %p123 = por %p121, %p122
      %p124 = scmp.ne.s32.totalorder %s113, %s116
      %p125 = scmp.eq.s32.totalorder %s19, 1
      %p126 = por %p124, %p125
      %p127 = scmp.ne.s32.totalorder %s116, %s117
      %p128 = scmp.eq.s32.totalorder %s19, 0
      %p129 = por %p127, %p128
      %p130 = scmp.ne.s32.totalorder %s116, %s117
      %p131 = scmp.eq.s32.totalorder %s20, 1
      %p132 = por %p130, %p131
      %p134 = scmp.ne.s32.totalorder %s117, %s133
      %p135 = scmp.eq.s32.totalorder %s20, 0
      %p136 = por %p134, %p135
      %s137 = ssub.s32 %s14, %s21
      %p138 = scmp.eq.s32.totalorder %s137, 0
      %s140 = sadd.s32 %s139, 1
      %s141 = scalar_select %p138, %s139, %s140
      %p144 = pneg %p138
      %p145 = scmp.eq.s32.totalorder %s14, 1
      %p146 = por %p144, %p145
      %p147 = scmp.ne.s32.totalorder %s139, %s142
      %p148 = scmp.eq.s32.totalorder %s14, 0
      %p149 = por %p147, %p148
      %p150 = scmp.ne.s32.totalorder %s139, %s142
      %p151 = scmp.eq.s32.totalorder %s19, 1
      %p152 = por %p150, %p151
      %p153 = scmp.ne.s32.totalorder %s142, %s143
      %p154 = scmp.eq.s32.totalorder %s19, 0
      %p155 = por %p153, %p154
      %p156 = scmp.ne.s32.totalorder %s142, %s143
      %p157 = scmp.eq.s32.totalorder %s20, 1
      %p158 = por %p156, %p157
      %p160 = scmp.ne.s32.totalorder %s143, %s159
      %p161 = scmp.eq.s32.totalorder %s20, 0
      %p162 = por %p160, %p161
      %p163 = scmp.le.s32.totalorder 1, %s14
      %p164 = scmp.lt.s32.totalorder %s14, 3
      %p165 = pnand %p163, %p164
      %p166 = pneg %p165
      // Predicated region
      $region9: #{tpu_custom_call.1} parent=5 // pred_check
        _
      $region10: #{tpu_custom_call.1} parent=5 // pred_check_branch
        %168 = sbr.rel (%p165) target = $region12
      $region11: #{tpu_custom_call.1} parent=5 // pred_region
        %s169 = ssub.s32 %s14, 1
        // Predicated region
        $region13: #{tpu_custom_call.1} parent=11 // pred_check
          %p170 = pneg %p35
        $region14: #{tpu_custom_call.1} parent=11 // pred_check_branch
          %172 = sbr.rel (%p170) target = $region16
        $region15: #{tpu_custom_call.1} parent=11 // pred_region
          _
        $region16: #{tpu_custom_call.1} parent=11 // pred_fallthru
          _
        // Predicated region
        $region17: #{tpu_custom_call.1} parent=11 // pred_check
          %p173 = pneg %p56
        $region18: #{tpu_custom_call.1} parent=11 // pred_check_branch
          %175 = sbr.rel (%p173) target = $region20
        $region19: #{tpu_custom_call.1} parent=11 // pred_region
          _
        $region20: #{tpu_custom_call.1} parent=11 // pred_fallthru
          _
        // Predicated region
        $region21: #{tpu_custom_call.1} parent=11 // pred_check
          %p176 = pneg %p77
        $region22: #{tpu_custom_call.1} parent=11 // pred_check_branch
          %178 = sbr.rel (%p176) target = $region24
        $region23: #{tpu_custom_call.1} parent=11 // pred_region
          _
        $region24: #{tpu_custom_call.1} parent=11 // pred_fallthru
          _
      $region12: #{tpu_custom_call.1} parent=5 // pred_fallthru
        _
      %p179 = scmp.lt.s32.totalorder %s14, 2
      // Predicated region
      $region25: #{tpu_custom_call.1} parent=5 // pred_check
        %p180 = pneg %p179
      $region26: #{tpu_custom_call.1} parent=5 // pred_check_branch
        %182 = sbr.rel (%p180) target = $region28
      $region27: #{tpu_custom_call.1} parent=5 // pred_region
        // Predicated region
        $region29: #{tpu_custom_call.1} parent=27 // pred_check
          %p183 = pneg %p97
        $region30: #{tpu_custom_call.1} parent=27 // pred_check_branch
          %185 = sbr.rel (%p183) target = $region32
        $region31: #{tpu_custom_call.1} parent=27 // pred_region
          %p186 = scmp.lt.s32.totalorder %s14, 1
          %s187 = scalar_select %p186, %s14, 1
          %s188 = smul.addr %s187, 16
          %s189 = smul.addr %s188, 8
          %s190 = scalar_lea.vmem %s3, %s189
        $region32: #{tpu_custom_call.1} parent=27 // pred_fallthru
          _
        // Predicated region
        $region33: #{tpu_custom_call.1} parent=27 // pred_check
          %p191 = pneg %p123
        $region34: #{tpu_custom_call.1} parent=27 // pred_check_branch
          %193 = sbr.rel (%p191) target = $region36
        $region35: #{tpu_custom_call.1} parent=27 // pred_region
          %p194 = scmp.lt.s32.totalorder %s14, 1
          %s195 = scalar_select %p194, %s14, 1
          %s196 = smul.addr %s195, 16
          %s197 = smul.addr %s196, 8
          %s198 = scalar_lea.vmem %s4, %s197
        $region36: #{tpu_custom_call.1} parent=27 // pred_fallthru
          _
      $region28: #{tpu_custom_call.1} parent=5 // pred_fallthru
        _
      %p199 = scmp.le.s32.totalorder 1, %s14
      %p200 = scmp.lt.s32.totalorder %s14, 3
      %p201 = pnand %p199, %p200
      %p202 = pneg %p201
      // Predicated region
      $region37: #{tpu_custom_call.1} parent=5 // pred_check
        _
      $region38: #{tpu_custom_call.1} parent=5 // pred_check_branch
        %204 = sbr.rel (%p201) target = $region40
      $region39: #{tpu_custom_call.1} parent=5 // pred_region
        %s205 = ssub.s32 %s14, 1
        %p206 = pneg %p35
        %p207 = pneg %p32
        %p208 = pneg %p56
        %p209 = pneg %p53
        %p210 = pneg %p77
        %p211 = pneg %p74
        %p212 = scmp.lt.s32.totalorder %s19, 1
        %s213 = scalar_select %p212, %s19, 1
        %s214 = smul.addr %s213, 16
        %s215 = smul.addr %s214, 8
        %s216 = scalar_lea.vmem %s3, %s215
        %p217 = pneg %p103
        %p218 = pneg %p100
        %p219 = scmp.lt.s32.totalorder %s19, 1
        %s220 = scalar_select %p219, %s19, 1
        %s221 = smul.addr %s220, 16
        %s222 = smul.addr %s221, 8
        %s223 = scalar_lea.vmem %s4, %s222
        %p224 = pneg %p129
        %p225 = pneg %p126
        %p226 = pneg %p155
        %p227 = pneg %p152
        %s228 = sand.u32 %s142, 1
        %s229 = scalar_lea.sflag [#allocation3], %s228
        %s230 = sand.u32 %s142, 1
        %s231 = smul.addr %s230, 16
        %s232 = scalar_lea.vmem [#allocation2], %s231
        %p233 = scmp.lt.s32.totalorder %s19, 1
        %s234 = scalar_select %p233, %s19, 1
        %s235 = smul.addr %s234, 16
        %s236 = smul.addr %s235, 8
        %s237 = scalar_lea.vmem %s3, %s236
        %p238 = scmp.lt.s32.totalorder %s19, 1
        %s239 = scalar_select %p238, %s19, 1
        %s240 = smul.addr %s239, 16
        %s241 = smul.addr %s240, 8
        %s242 = scalar_lea.vmem %s4, %s241
        %v243 = vld [vmem:[%s237] sm:$0xff]
        %v244 = vld [vmem:[%s237 + $0x8] sm:$0xff]
        %v245 = vld [vmem:[%s237 + $0x10] sm:$0xff]
        %v246 = vld [vmem:[%s237 + $0x18] sm:$0xf]
        %v247 = vld [vmem:[%s237 + $0x20] sm:$0xff]
        %v248 = vld [vmem:[%s237 + $0x28] sm:$0xff]
        %v249 = vld [vmem:[%s237 + $0x30] sm:$0xff]
        %v250 = vld [vmem:[%s237 + $0x38] sm:$0xf]
        %v251 = vld [vmem:[%s237 + $0x40] sm:$0xff]
        %v252 = vld [vmem:[%s237 + $0x48] sm:$0xff]
        %v253 = vld [vmem:[%s237 + $0x50] sm:$0xff]
        %v254 = vld [vmem:[%s237 + $0x58] sm:$0xf]
        %v255 = vld [vmem:[%s237 + $0x60] sm:$0xff]
        %v256 = vld [vmem:[%s237 + $0x68] sm:$0xff]
        %v257 = vld [vmem:[%s237 + $0x70] sm:$0xff]
        %v258 = vld [vmem:[%s237 + $0x78] sm:$0xf]
        %v259 = vld [vmem:[%s242] sm:$0xff]
        %v260 = vld [vmem:[%s242 + $0x8] sm:$0xff]
        %v261 = vld [vmem:[%s242 + $0x10] sm:$0xff]
        %v262 = vld [vmem:[%s242 + $0x18] sm:$0xf]
        %v263 = vld [vmem:[%s242 + $0x20] sm:$0xff]
        %v264 = vld [vmem:[%s242 + $0x28] sm:$0xff]
        %v265 = vld [vmem:[%s242 + $0x30] sm:$0xff]
        %v266 = vld [vmem:[%s242 + $0x38] sm:$0xf]
        %v267 = vld [vmem:[%s242 + $0x40] sm:$0xff]
        %v268 = vld [vmem:[%s242 + $0x48] sm:$0xff]
        %v269 = vld [vmem:[%s242 + $0x50] sm:$0xff]
        %v270 = vld [vmem:[%s242 + $0x58] sm:$0xf]
        %v271 = vld [vmem:[%s242 + $0x60] sm:$0xff]
        %v272 = vld [vmem:[%s242 + $0x68] sm:$0xff]
        %v273 = vld [vmem:[%s242 + $0x70] sm:$0xff]
        %v274 = vld [vmem:[%s242 + $0x78] sm:$0xf]
        %v275 = vld [vmem:[%s0] sm:$0xff]
        %v276 = vld [vmem:[%s0 + $0x8] sm:$0xff]
        %v277 = vld [vmem:[%s0 + $0x10] sm:$0x3f]
        %v278 = vld [vmem:[%s1] sm:$0xff]
        %v279 = vld [vmem:[%s1 + $0x8] sm:$0xff]
        %v280 = vld [vmem:[%s2] sm:$0xff]
        %v281 = vld [vmem:[%s2 + $0x8] sm:$0xff]
        %v282 = vld [vmem:[%s2 + $0x10] sm:$0x3f]
        %v283 = vmul.f32 %v243, %v259
        %v284 = vmul.f32 %v244, %v260
        %v285 = vmul.f32 %v245, %v261
        %v286 = vmul.f32 %v246, %v262
        %v287 = vmul.f32 %v247, %v263
        %v288 = vmul.f32 %v248, %v264
        %v289 = vmul.f32 %v249, %v265
        %v290 = vmul.f32 %v250, %v266
        %v291 = vmul.f32 %v251, %v267
        %v292 = vmul.f32 %v252, %v268
        %v293 = vmul.f32 %v253, %v269
        %v294 = vmul.f32 %v254, %v270
        %v295 = vmul.f32 %v255, %v271
        %v296 = vmul.f32 %v256, %v272
        %v297 = vmul.f32 %v257, %v273
        %v298 = vmul.f32 %v258, %v274
        %v299 = vmul.f32 %v243, %v243
        %v300 = vmul.f32 %v244, %v244
        %v301 = vmul.f32 %v245, %v245
        %v302 = vmul.f32 %v246, %v246
        %v303 = vmul.f32 %v247, %v247
        %v304 = vmul.f32 %v248, %v248
        %v305 = vmul.f32 %v249, %v249
        %v306 = vmul.f32 %v250, %v250
        %v307 = vmul.f32 %v251, %v251
        %v308 = vmul.f32 %v252, %v252
        %v309 = vmul.f32 %v253, %v253
        %v310 = vmul.f32 %v254, %v254
        %v311 = vmul.f32 %v255, %v255
        %v312 = vmul.f32 %v256, %v256
        %v313 = vmul.f32 %v257, %v257
        %v314 = vmul.f32 %v258, %v258
        %379 = vrot.lane.b32.xlu0 %v243, 127
        %v380 = vpop.permute.xlu0 %379
        %381 = vrot.lane.b32.xlu0 %v244, 127
        %v382 = vpop.permute.xlu0 %381
        %383 = vrot.lane.b32.xlu0 %v245, 127
        %v384 = vpop.permute.xlu0 %383
        %385 = vrot.lane.b32.xlu0 %v246, 127
        %v386 = vpop.permute.xlu0 %385
        %387 = vrot.lane.b32.xlu0 %v247, 127
        %v388 = vpop.permute.xlu0 %387
        %389 = vrot.lane.b32.xlu0 %v248, 127
        %v390 = vpop.permute.xlu0 %389
        %391 = vrot.lane.b32.xlu0 %v249, 127
        %v392 = vpop.permute.xlu0 %391
        %393 = vrot.lane.b32.xlu0 %v250, 127
        %v394 = vpop.permute.xlu0 %393
        %395 = vrot.lane.b32.xlu0 %v251, 127
        %v396 = vpop.permute.xlu0 %395
        %397 = vrot.lane.b32.xlu0 %v252, 127
        %v398 = vpop.permute.xlu0 %397
        %399 = vrot.lane.b32.xlu0 %v253, 127
        %v400 = vpop.permute.xlu0 %399
        %401 = vrot.lane.b32.xlu0 %v254, 127
        %v402 = vpop.permute.xlu0 %401
        %403 = vrot.lane.b32.xlu0 %v255, 127
        %v404 = vpop.permute.xlu0 %403
        %405 = vrot.lane.b32.xlu0 %v256, 127
        %v406 = vpop.permute.xlu0 %405
        %407 = vrot.lane.b32.xlu0 %v257, 127
        %v408 = vpop.permute.xlu0 %407
        %409 = vrot.lane.b32.xlu0 %v258, 127
        %v410 = vpop.permute.xlu0 %409
        %411 = vrot.lane.b32.xlu0 %v259, 127
        %v412 = vpop.permute.xlu0 %411
        %413 = vrot.lane.b32.xlu0 %v260, 127
        %v414 = vpop.permute.xlu0 %413
        %415 = vrot.lane.b32.xlu0 %v261, 127
        %v416 = vpop.permute.xlu0 %415
        %417 = vrot.lane.b32.xlu0 %v262, 127
        %v418 = vpop.permute.xlu0 %417
        %419 = vrot.lane.b32.xlu0 %v263, 127
        %v420 = vpop.permute.xlu0 %419
        %421 = vrot.lane.b32.xlu0 %v264, 127
        %v422 = vpop.permute.xlu0 %421
        %423 = vrot.lane.b32.xlu0 %v265, 127
        %v424 = vpop.permute.xlu0 %423
        %425 = vrot.lane.b32.xlu0 %v266, 127
        %v426 = vpop.permute.xlu0 %425
        %427 = vrot.lane.b32.xlu0 %v267, 127
        %v428 = vpop.permute.xlu0 %427
        %429 = vrot.lane.b32.xlu0 %v268, 127
        %v430 = vpop.permute.xlu0 %429
        %431 = vrot.lane.b32.xlu0 %v269, 127
        %v432 = vpop.permute.xlu0 %431
        %433 = vrot.lane.b32.xlu0 %v270, 127
        %v434 = vpop.permute.xlu0 %433
        %435 = vrot.lane.b32.xlu0 %v271, 127
        %v436 = vpop.permute.xlu0 %435
        %437 = vrot.lane.b32.xlu0 %v272, 127
        %v438 = vpop.permute.xlu0 %437
        %439 = vrot.lane.b32.xlu0 %v273, 127
        %v440 = vpop.permute.xlu0 %439
        %441 = vrot.lane.b32.xlu0 %v274, 127
        %v442 = vpop.permute.xlu0 %441
        %443 = vrot.lane.b32.xlu0 %v283, 127
        %v444 = vpop.permute.xlu0 %443
        %445 = vrot.lane.b32.xlu0 %v284, 127
        %v446 = vpop.permute.xlu0 %445
        %447 = vrot.lane.b32.xlu0 %v285, 127
        %v448 = vpop.permute.xlu0 %447
        %449 = vrot.lane.b32.xlu0 %v286, 127
        %v450 = vpop.permute.xlu0 %449
        %451 = vrot.lane.b32.xlu0 %v287, 127
        %v452 = vpop.permute.xlu0 %451
        %453 = vrot.lane.b32.xlu0 %v288, 127
        %v454 = vpop.permute.xlu0 %453
        %455 = vrot.lane.b32.xlu0 %v289, 127
        %v456 = vpop.permute.xlu0 %455
        %457 = vrot.lane.b32.xlu0 %v290, 127
        %v458 = vpop.permute.xlu0 %457
        %459 = vrot.lane.b32.xlu0 %v291, 127
        %v460 = vpop.permute.xlu0 %459
        %461 = vrot.lane.b32.xlu0 %v292, 127
        %v462 = vpop.permute.xlu0 %461
        %463 = vrot.lane.b32.xlu0 %v293, 127
        %v464 = vpop.permute.xlu0 %463
        %465 = vrot.lane.b32.xlu0 %v294, 127
        %v466 = vpop.permute.xlu0 %465
        %467 = vrot.lane.b32.xlu0 %v295, 127
        %v468 = vpop.permute.xlu0 %467
        %469 = vrot.lane.b32.xlu0 %v296, 127
        %v470 = vpop.permute.xlu0 %469
        %471 = vrot.lane.b32.xlu0 %v297, 127
        %v472 = vpop.permute.xlu0 %471
        %473 = vrot.lane.b32.xlu0 %v298, 127
        %v474 = vpop.permute.xlu0 %473
        %475 = vrot.lane.b32.xlu0 %v299, 127
        %v476 = vpop.permute.xlu0 %475
        %477 = vrot.lane.b32.xlu0 %v300, 127
        %v478 = vpop.permute.xlu0 %477
        %479 = vrot.lane.b32.xlu0 %v301, 127
        %v480 = vpop.permute.xlu0 %479
        %481 = vrot.lane.b32.xlu0 %v302, 127
        %v482 = vpop.permute.xlu0 %481
        %483 = vrot.lane.b32.xlu0 %v303, 127
        %v484 = vpop.permute.xlu0 %483
        %485 = vrot.lane.b32.xlu0 %v304, 127
        %v486 = vpop.permute.xlu0 %485
        %487 = vrot.lane.b32.xlu0 %v305, 127
        %v488 = vpop.permute.xlu0 %487
        %489 = vrot.lane.b32.xlu0 %v306, 127
        %v490 = vpop.permute.xlu0 %489
        %491 = vrot.lane.b32.xlu0 %v307, 127
        %v492 = vpop.permute.xlu0 %491
        %493 = vrot.lane.b32.xlu0 %v308, 127
        %v494 = vpop.permute.xlu0 %493
        %495 = vrot.lane.b32.xlu0 %v309, 127
        %v496 = vpop.permute.xlu0 %495
        %497 = vrot.lane.b32.xlu0 %v310, 127
        %v498 = vpop.permute.xlu0 %497
        %499 = vrot.lane.b32.xlu0 %v311, 127
        %v500 = vpop.permute.xlu0 %499
        %501 = vrot.lane.b32.xlu0 %v312, 127
        %v502 = vpop.permute.xlu0 %501
        %503 = vrot.lane.b32.xlu0 %v313, 127
        %v504 = vpop.permute.xlu0 %503
        %505 = vrot.lane.b32.xlu0 %v314, 127
        %v506 = vpop.permute.xlu0 %505
        %v571 = vadd.f32 %v243, %v380
        %v572 = vadd.f32 %v244, %v382
        %v573 = vadd.f32 %v245, %v384
        %v574 = vadd.f32 %v246, %v386
        %v575 = vadd.f32 %v247, %v388
        %v576 = vadd.f32 %v248, %v390
        %v577 = vadd.f32 %v249, %v392
        %v578 = vadd.f32 %v250, %v394
        %v579 = vadd.f32 %v251, %v396
        %v580 = vadd.f32 %v252, %v398
        %v581 = vadd.f32 %v253, %v400
        %v582 = vadd.f32 %v254, %v402
        %v583 = vadd.f32 %v255, %v404
        %v584 = vadd.f32 %v256, %v406
        %v585 = vadd.f32 %v257, %v408
        %v586 = vadd.f32 %v258, %v410
        %v587 = vadd.f32 %v259, %v412
        %v588 = vadd.f32 %v260, %v414
        %v589 = vadd.f32 %v261, %v416
        %v590 = vadd.f32 %v262, %v418
        %v591 = vadd.f32 %v263, %v420
        %v592 = vadd.f32 %v264, %v422
        %v593 = vadd.f32 %v265, %v424
        %v594 = vadd.f32 %v266, %v426
        %v595 = vadd.f32 %v267, %v428
        %v596 = vadd.f32 %v268, %v430
        %v597 = vadd.f32 %v269, %v432
        %v598 = vadd.f32 %v270, %v434
        %v599 = vadd.f32 %v271, %v436
        %v600 = vadd.f32 %v272, %v438
        %v601 = vadd.f32 %v273, %v440
        %v602 = vadd.f32 %v274, %v442
        %v603 = vadd.f32 %v283, %v444
        %v604 = vadd.f32 %v284, %v446
        %v605 = vadd.f32 %v285, %v448
        %v606 = vadd.f32 %v286, %v450
        %v607 = vadd.f32 %v287, %v452
        %v608 = vadd.f32 %v288, %v454
        %v609 = vadd.f32 %v289, %v456
        %v610 = vadd.f32 %v290, %v458
        %v611 = vadd.f32 %v291, %v460
        %v612 = vadd.f32 %v292, %v462
        %v613 = vadd.f32 %v293, %v464
        %v614 = vadd.f32 %v294, %v466
        %v615 = vadd.f32 %v295, %v468
        %v616 = vadd.f32 %v296, %v470
        %v617 = vadd.f32 %v297, %v472
        %v618 = vadd.f32 %v298, %v474
        %v619 = vadd.f32 %v299, %v476
        %v620 = vadd.f32 %v300, %v478
        %v621 = vadd.f32 %v301, %v480
        %v622 = vadd.f32 %v302, %v482
        %v623 = vadd.f32 %v303, %v484
        %v624 = vadd.f32 %v304, %v486
        %v625 = vadd.f32 %v305, %v488
        %v626 = vadd.f32 %v306, %v490
        %v627 = vadd.f32 %v307, %v492
        %v628 = vadd.f32 %v308, %v494
        %v629 = vadd.f32 %v309, %v496
        %v630 = vadd.f32 %v310, %v498
        %v631 = vadd.f32 %v311, %v500
        %v632 = vadd.f32 %v312, %v502
        %v633 = vadd.f32 %v313, %v504
        %v634 = vadd.f32 %v314, %v506
        %635 = vrot.lane.b32.xlu0 %v243, 126
        %v636 = vpop.permute.xlu0 %635
        %637 = vrot.lane.b32.xlu0 %v244, 126
        %v638 = vpop.permute.xlu0 %637
        %639 = vrot.lane.b32.xlu0 %v245, 126
        %v640 = vpop.permute.xlu0 %639
        %641 = vrot.lane.b32.xlu0 %v246, 126
        %v642 = vpop.permute.xlu0 %641
        %643 = vrot.lane.b32.xlu0 %v247, 126
        %v644 = vpop.permute.xlu0 %643
        %645 = vrot.lane.b32.xlu0 %v248, 126
        %v646 = vpop.permute.xlu0 %645
        %647 = vrot.lane.b32.xlu0 %v249, 126
        %v648 = vpop.permute.xlu0 %647
        %649 = vrot.lane.b32.xlu0 %v250, 126
        %v650 = vpop.permute.xlu0 %649
        %651 = vrot.lane.b32.xlu0 %v251, 126
        %v652 = vpop.permute.xlu0 %651
        %653 = vrot.lane.b32.xlu0 %v252, 126
        %v654 = vpop.permute.xlu0 %653
        %655 = vrot.lane.b32.xlu0 %v253, 126
        %v656 = vpop.permute.xlu0 %655
        %657 = vrot.lane.b32.xlu0 %v254, 126
        %v658 = vpop.permute.xlu0 %657
        %659 = vrot.lane.b32.xlu0 %v255, 126
        %v660 = vpop.permute.xlu0 %659
        %661 = vrot.lane.b32.xlu0 %v256, 126
        %v662 = vpop.permute.xlu0 %661
        %663 = vrot.lane.b32.xlu0 %v257, 126
        %v664 = vpop.permute.xlu0 %663
        %665 = vrot.lane.b32.xlu0 %v258, 126
        %v666 = vpop.permute.xlu0 %665
        %667 = vrot.lane.b32.xlu0 %v259, 126
        %v668 = vpop.permute.xlu0 %667
        %669 = vrot.lane.b32.xlu0 %v260, 126
        %v670 = vpop.permute.xlu0 %669
        %671 = vrot.lane.b32.xlu0 %v261, 126
        %v672 = vpop.permute.xlu0 %671
        %673 = vrot.lane.b32.xlu0 %v262, 126
        %v674 = vpop.permute.xlu0 %673
        %675 = vrot.lane.b32.xlu0 %v263, 126
        %v676 = vpop.permute.xlu0 %675
        %677 = vrot.lane.b32.xlu0 %v264, 126
        %v678 = vpop.permute.xlu0 %677
        %679 = vrot.lane.b32.xlu0 %v265, 126
        %v680 = vpop.permute.xlu0 %679
        %681 = vrot.lane.b32.xlu0 %v266, 126
        %v682 = vpop.permute.xlu0 %681
        %683 = vrot.lane.b32.xlu0 %v267, 126
        %v684 = vpop.permute.xlu0 %683
        %685 = vrot.lane.b32.xlu0 %v268, 126
        %v686 = vpop.permute.xlu0 %685
        %687 = vrot.lane.b32.xlu0 %v269, 126
        %v688 = vpop.permute.xlu0 %687
        %689 = vrot.lane.b32.xlu0 %v270, 126
        %v690 = vpop.permute.xlu0 %689
        %691 = vrot.lane.b32.xlu0 %v271, 126
        %v692 = vpop.permute.xlu0 %691
        %693 = vrot.lane.b32.xlu0 %v272, 126
        %v694 = vpop.permute.xlu0 %693
        %695 = vrot.lane.b32.xlu0 %v273, 126
        %v696 = vpop.permute.xlu0 %695
        %697 = vrot.lane.b32.xlu0 %v274, 126
        %v698 = vpop.permute.xlu0 %697
        %699 = vrot.lane.b32.xlu0 %v283, 126
        %v700 = vpop.permute.xlu0 %699
        %701 = vrot.lane.b32.xlu0 %v284, 126
        %v702 = vpop.permute.xlu0 %701
        %703 = vrot.lane.b32.xlu0 %v285, 126
        %v704 = vpop.permute.xlu0 %703
        %705 = vrot.lane.b32.xlu0 %v286, 126
        %v706 = vpop.permute.xlu0 %705
        %707 = vrot.lane.b32.xlu0 %v287, 126
        %v708 = vpop.permute.xlu0 %707
        %709 = vrot.lane.b32.xlu0 %v288, 126
        %v710 = vpop.permute.xlu0 %709
        %711 = vrot.lane.b32.xlu0 %v289, 126
        %v712 = vpop.permute.xlu0 %711
        %713 = vrot.lane.b32.xlu0 %v290, 126
        %v714 = vpop.permute.xlu0 %713
        %715 = vrot.lane.b32.xlu0 %v291, 126
        %v716 = vpop.permute.xlu0 %715
        %717 = vrot.lane.b32.xlu0 %v292, 126
        %v718 = vpop.permute.xlu0 %717
        %719 = vrot.lane.b32.xlu0 %v293, 126
        %v720 = vpop.permute.xlu0 %719
        %721 = vrot.lane.b32.xlu0 %v294, 126
        %v722 = vpop.permute.xlu0 %721
        %723 = vrot.lane.b32.xlu0 %v295, 126
        %v724 = vpop.permute.xlu0 %723
        %725 = vrot.lane.b32.xlu0 %v296, 126
        %v726 = vpop.permute.xlu0 %725
        %727 = vrot.lane.b32.xlu0 %v297, 126
        %v728 = vpop.permute.xlu0 %727
        %729 = vrot.lane.b32.xlu0 %v298, 126
        %v730 = vpop.permute.xlu0 %729
        %731 = vrot.lane.b32.xlu0 %v299, 126
        %v732 = vpop.permute.xlu0 %731
        %733 = vrot.lane.b32.xlu0 %v300, 126
        %v734 = vpop.permute.xlu0 %733
        %735 = vrot.lane.b32.xlu0 %v301, 126
        %v736 = vpop.permute.xlu0 %735
        %737 = vrot.lane.b32.xlu0 %v302, 126
        %v738 = vpop.permute.xlu0 %737
        %739 = vrot.lane.b32.xlu0 %v303, 126
        %v740 = vpop.permute.xlu0 %739
        %741 = vrot.lane.b32.xlu0 %v304, 126
        %v742 = vpop.permute.xlu0 %741
        %743 = vrot.lane.b32.xlu0 %v305, 126
        %v744 = vpop.permute.xlu0 %743
        %745 = vrot.lane.b32.xlu0 %v306, 126
        %v746 = vpop.permute.xlu0 %745
        %747 = vrot.lane.b32.xlu0 %v307, 126
        %v748 = vpop.permute.xlu0 %747
        %749 = vrot.lane.b32.xlu0 %v308, 126
        %v750 = vpop.permute.xlu0 %749
        %751 = vrot.lane.b32.xlu0 %v309, 126
        %v752 = vpop.permute.xlu0 %751
        %753 = vrot.lane.b32.xlu0 %v310, 126
        %v754 = vpop.permute.xlu0 %753
        %755 = vrot.lane.b32.xlu0 %v311, 126
        %v756 = vpop.permute.xlu0 %755
        %757 = vrot.lane.b32.xlu0 %v312, 126
        %v758 = vpop.permute.xlu0 %757
        %759 = vrot.lane.b32.xlu0 %v313, 126
        %v760 = vpop.permute.xlu0 %759
        %761 = vrot.lane.b32.xlu0 %v314, 126
        %v762 = vpop.permute.xlu0 %761
        %v827 = vadd.f32 %v571, %v636
        %v828 = vadd.f32 %v572, %v638
        %v829 = vadd.f32 %v573, %v640
        %v830 = vadd.f32 %v574, %v642
        %v831 = vadd.f32 %v575, %v644
        %v832 = vadd.f32 %v576, %v646
        %v833 = vadd.f32 %v577, %v648
        %v834 = vadd.f32 %v578, %v650
        %v835 = vadd.f32 %v579, %v652
        %v836 = vadd.f32 %v580, %v654
        %v837 = vadd.f32 %v581, %v656
        %v838 = vadd.f32 %v582, %v658
        %v839 = vadd.f32 %v583, %v660
        %v840 = vadd.f32 %v584, %v662
        %v841 = vadd.f32 %v585, %v664
        %v842 = vadd.f32 %v586, %v666
        %v843 = vadd.f32 %v587, %v668
        %v844 = vadd.f32 %v588, %v670
        %v845 = vadd.f32 %v589, %v672
        %v846 = vadd.f32 %v590, %v674
        %v847 = vadd.f32 %v591, %v676
        %v848 = vadd.f32 %v592, %v678
        %v849 = vadd.f32 %v593, %v680
        %v850 = vadd.f32 %v594, %v682
        %v851 = vadd.f32 %v595, %v684
        %v852 = vadd.f32 %v596, %v686
        %v853 = vadd.f32 %v597, %v688
        %v854 = vadd.f32 %v598, %v690
        %v855 = vadd.f32 %v599, %v692
        %v856 = vadd.f32 %v600, %v694
        %v857 = vadd.f32 %v601, %v696
        %v858 = vadd.f32 %v602, %v698
        %v859 = vadd.f32 %v603, %v700
        %v860 = vadd.f32 %v604, %v702
        %v861 = vadd.f32 %v605, %v704
        %v862 = vadd.f32 %v606, %v706
        %v863 = vadd.f32 %v607, %v708
        %v864 = vadd.f32 %v608, %v710
        %v865 = vadd.f32 %v609, %v712
        %v866 = vadd.f32 %v610, %v714
        %v867 = vadd.f32 %v611, %v716
        %v868 = vadd.f32 %v612, %v718
        %v869 = vadd.f32 %v613, %v720
        %v870 = vadd.f32 %v614, %v722
        %v871 = vadd.f32 %v615, %v724
        %v872 = vadd.f32 %v616, %v726
        %v873 = vadd.f32 %v617, %v728
        %v874 = vadd.f32 %v618, %v730
        %v875 = vadd.f32 %v619, %v732
        %v876 = vadd.f32 %v620, %v734
        %v877 = vadd.f32 %v621, %v736
        %v878 = vadd.f32 %v622, %v738
        %v879 = vadd.f32 %v623, %v740
        %v880 = vadd.f32 %v624, %v742
        %v881 = vadd.f32 %v625, %v744
        %v882 = vadd.f32 %v626, %v746
        %v883 = vadd.f32 %v627, %v748
        %v884 = vadd.f32 %v628, %v750
        %v885 = vadd.f32 %v629, %v752
        %v886 = vadd.f32 %v630, %v754
        %v887 = vadd.f32 %v631, %v756
        %v888 = vadd.f32 %v632, %v758
        %v889 = vadd.f32 %v633, %v760
        %v890 = vadd.f32 %v634, %v762
        %891 = vrot.lane.b32.xlu0 %v243, 125
        %v892 = vpop.permute.xlu0 %891
        %893 = vrot.lane.b32.xlu0 %v244, 125
        %v894 = vpop.permute.xlu0 %893
        %895 = vrot.lane.b32.xlu0 %v245, 125
        %v896 = vpop.permute.xlu0 %895
        %897 = vrot.lane.b32.xlu0 %v246, 125
        %v898 = vpop.permute.xlu0 %897
        %899 = vrot.lane.b32.xlu0 %v247, 125
        %v900 = vpop.permute.xlu0 %899
        %901 = vrot.lane.b32.xlu0 %v248, 125
        %v902 = vpop.permute.xlu0 %901
        %903 = vrot.lane.b32.xlu0 %v249, 125
        %v904 = vpop.permute.xlu0 %903
        %905 = vrot.lane.b32.xlu0 %v250, 125
        %v906 = vpop.permute.xlu0 %905
        %907 = vrot.lane.b32.xlu0 %v251, 125
        %v908 = vpop.permute.xlu0 %907
        %909 = vrot.lane.b32.xlu0 %v252, 125
        %v910 = vpop.permute.xlu0 %909
        %911 = vrot.lane.b32.xlu0 %v253, 125
        %v912 = vpop.permute.xlu0 %911
        %913 = vrot.lane.b32.xlu0 %v254, 125
        %v914 = vpop.permute.xlu0 %913
        %915 = vrot.lane.b32.xlu0 %v255, 125
        %v916 = vpop.permute.xlu0 %915
        %917 = vrot.lane.b32.xlu0 %v256, 125
        %v918 = vpop.permute.xlu0 %917
        %919 = vrot.lane.b32.xlu0 %v257, 125
        %v920 = vpop.permute.xlu0 %919
        %921 = vrot.lane.b32.xlu0 %v258, 125
        %v922 = vpop.permute.xlu0 %921
        %923 = vrot.lane.b32.xlu0 %v259, 125
        %v924 = vpop.permute.xlu0 %923
        %925 = vrot.lane.b32.xlu0 %v260, 125
        %v926 = vpop.permute.xlu0 %925
        %927 = vrot.lane.b32.xlu0 %v261, 125
        %v928 = vpop.permute.xlu0 %927
        %929 = vrot.lane.b32.xlu0 %v262, 125
        %v930 = vpop.permute.xlu0 %929
        %931 = vrot.lane.b32.xlu0 %v263, 125
        %v932 = vpop.permute.xlu0 %931
        %933 = vrot.lane.b32.xlu0 %v264, 125
        %v934 = vpop.permute.xlu0 %933
        %935 = vrot.lane.b32.xlu0 %v265, 125
        %v936 = vpop.permute.xlu0 %935
        %937 = vrot.lane.b32.xlu0 %v266, 125
        %v938 = vpop.permute.xlu0 %937
        %939 = vrot.lane.b32.xlu0 %v267, 125
        %v940 = vpop.permute.xlu0 %939
        %941 = vrot.lane.b32.xlu0 %v268, 125
        %v942 = vpop.permute.xlu0 %941
        %943 = vrot.lane.b32.xlu0 %v269, 125
        %v944 = vpop.permute.xlu0 %943
        %945 = vrot.lane.b32.xlu0 %v270, 125
        %v946 = vpop.permute.xlu0 %945
        %947 = vrot.lane.b32.xlu0 %v271, 125
        %v948 = vpop.permute.xlu0 %947
        %949 = vrot.lane.b32.xlu0 %v272, 125
        %v950 = vpop.permute.xlu0 %949
        %951 = vrot.lane.b32.xlu0 %v273, 125
        %v952 = vpop.permute.xlu0 %951
        %953 = vrot.lane.b32.xlu0 %v274, 125
        %v954 = vpop.permute.xlu0 %953
        %955 = vrot.lane.b32.xlu0 %v283, 125
        %v956 = vpop.permute.xlu0 %955
        %957 = vrot.lane.b32.xlu0 %v284, 125
        %v958 = vpop.permute.xlu0 %957
        %959 = vrot.lane.b32.xlu0 %v285, 125
        %v960 = vpop.permute.xlu0 %959
        %961 = vrot.lane.b32.xlu0 %v286, 125
        %v962 = vpop.permute.xlu0 %961
        %963 = vrot.lane.b32.xlu0 %v287, 125
        %v964 = vpop.permute.xlu0 %963
        %965 = vrot.lane.b32.xlu0 %v288, 125
        %v966 = vpop.permute.xlu0 %965
        %967 = vrot.lane.b32.xlu0 %v289, 125
        %v968 = vpop.permute.xlu0 %967
        %969 = vrot.lane.b32.xlu0 %v290, 125
        %v970 = vpop.permute.xlu0 %969
        %971 = vrot.lane.b32.xlu0 %v291, 125
        %v972 = vpop.permute.xlu0 %971
        %973 = vrot.lane.b32.xlu0 %v292, 125
        %v974 = vpop.permute.xlu0 %973
        %975 = vrot.lane.b32.xlu0 %v293, 125
        %v976 = vpop.permute.xlu0 %975
        %977 = vrot.lane.b32.xlu0 %v294, 125
        %v978 = vpop.permute.xlu0 %977
        %979 = vrot.lane.b32.xlu0 %v295, 125
        %v980 = vpop.permute.xlu0 %979
        %981 = vrot.lane.b32.xlu0 %v296, 125
        %v982 = vpop.permute.xlu0 %981
        %983 = vrot.lane.b32.xlu0 %v297, 125
        %v984 = vpop.permute.xlu0 %983
        %985 = vrot.lane.b32.xlu0 %v298, 125
        %v986 = vpop.permute.xlu0 %985
        %987 = vrot.lane.b32.xlu0 %v299, 125
        %v988 = vpop.permute.xlu0 %987
        %989 = vrot.lane.b32.xlu0 %v300, 125
        %v990 = vpop.permute.xlu0 %989
        %991 = vrot.lane.b32.xlu0 %v301, 125
        %v992 = vpop.permute.xlu0 %991
        %993 = vrot.lane.b32.xlu0 %v302, 125
        %v994 = vpop.permute.xlu0 %993
        %995 = vrot.lane.b32.xlu0 %v303, 125
        %v996 = vpop.permute.xlu0 %995
        %997 = vrot.lane.b32.xlu0 %v304, 125
        %v998 = vpop.permute.xlu0 %997
        %999 = vrot.lane.b32.xlu0 %v305, 125
        %v1000 = vpop.permute.xlu0 %999
        %1001 = vrot.lane.b32.xlu0 %v306, 125
        %v1002 = vpop.permute.xlu0 %1001
        %1003 = vrot.lane.b32.xlu0 %v307, 125
        %v1004 = vpop.permute.xlu0 %1003
        %1005 = vrot.lane.b32.xlu0 %v308, 125
        %v1006 = vpop.permute.xlu0 %1005
        %1007 = vrot.lane.b32.xlu0 %v309, 125
        %v1008 = vpop.permute.xlu0 %1007
        %1009 = vrot.lane.b32.xlu0 %v310, 125
        %v1010 = vpop.permute.xlu0 %1009
        %1011 = vrot.lane.b32.xlu0 %v311, 125
        %v1012 = vpop.permute.xlu0 %1011
        %1013 = vrot.lane.b32.xlu0 %v312, 125
        %v1014 = vpop.permute.xlu0 %1013
        %1015 = vrot.lane.b32.xlu0 %v313, 125
        %v1016 = vpop.permute.xlu0 %1015
        %1017 = vrot.lane.b32.xlu0 %v314, 125
        %v1018 = vpop.permute.xlu0 %1017
        %v1083 = vadd.f32 %v827, %v892
        %v1084 = vadd.f32 %v828, %v894
        %v1085 = vadd.f32 %v829, %v896
        %v1086 = vadd.f32 %v830, %v898
        %v1087 = vadd.f32 %v831, %v900
        %v1088 = vadd.f32 %v832, %v902
        %v1089 = vadd.f32 %v833, %v904
        %v1090 = vadd.f32 %v834, %v906
        %v1091 = vadd.f32 %v835, %v908
        %v1092 = vadd.f32 %v836, %v910
        %v1093 = vadd.f32 %v837, %v912
        %v1094 = vadd.f32 %v838, %v914
        %v1095 = vadd.f32 %v839, %v916
        %v1096 = vadd.f32 %v840, %v918
        %v1097 = vadd.f32 %v841, %v920
        %v1098 = vadd.f32 %v842, %v922
        %v1099 = vadd.f32 %v843, %v924
        %v1100 = vadd.f32 %v844, %v926
        %v1101 = vadd.f32 %v845, %v928
        %v1102 = vadd.f32 %v846, %v930
        %v1103 = vadd.f32 %v847, %v932
        %v1104 = vadd.f32 %v848, %v934
        %v1105 = vadd.f32 %v849, %v936
        %v1106 = vadd.f32 %v850, %v938
        %v1107 = vadd.f32 %v851, %v940
        %v1108 = vadd.f32 %v852, %v942
        %v1109 = vadd.f32 %v853, %v944
        %v1110 = vadd.f32 %v854, %v946
        %v1111 = vadd.f32 %v855, %v948
        %v1112 = vadd.f32 %v856, %v950
        %v1113 = vadd.f32 %v857, %v952
        %v1114 = vadd.f32 %v858, %v954
        %v1115 = vadd.f32 %v859, %v956
        %v1116 = vadd.f32 %v860, %v958
        %v1117 = vadd.f32 %v861, %v960
        %v1118 = vadd.f32 %v862, %v962
        %v1119 = vadd.f32 %v863, %v964
        %v1120 = vadd.f32 %v864, %v966
        %v1121 = vadd.f32 %v865, %v968
        %v1122 = vadd.f32 %v866, %v970
        %v1123 = vadd.f32 %v867, %v972
        %v1124 = vadd.f32 %v868, %v974
        %v1125 = vadd.f32 %v869, %v976
        %v1126 = vadd.f32 %v870, %v978
        %v1127 = vadd.f32 %v871, %v980
        %v1128 = vadd.f32 %v872, %v982
        %v1129 = vadd.f32 %v873, %v984
        %v1130 = vadd.f32 %v874, %v986
        %v1131 = vadd.f32 %v875, %v988
        %v1132 = vadd.f32 %v876, %v990
        %v1133 = vadd.f32 %v877, %v992
        %v1134 = vadd.f32 %v878, %v994
        %v1135 = vadd.f32 %v879, %v996
        %v1136 = vadd.f32 %v880, %v998
        %v1137 = vadd.f32 %v881, %v1000
        %v1138 = vadd.f32 %v882, %v1002
        %v1139 = vadd.f32 %v883, %v1004
        %v1140 = vadd.f32 %v884, %v1006
        %v1141 = vadd.f32 %v885, %v1008
        %v1142 = vadd.f32 %v886, %v1010
        %v1143 = vadd.f32 %v887, %v1012
        %v1144 = vadd.f32 %v888, %v1014
        %v1145 = vadd.f32 %v889, %v1016
        %v1146 = vadd.f32 %v890, %v1018
        %1147 = vrot.lane.b32.xlu0 %v243, 124
        %v1148 = vpop.permute.xlu0 %1147
        %1149 = vrot.lane.b32.xlu0 %v244, 124
        %v1150 = vpop.permute.xlu0 %1149
        %1151 = vrot.lane.b32.xlu0 %v245, 124
        %v1152 = vpop.permute.xlu0 %1151
        %1153 = vrot.lane.b32.xlu0 %v246, 124
        %v1154 = vpop.permute.xlu0 %1153
        %1155 = vrot.lane.b32.xlu0 %v247, 124
        %v1156 = vpop.permute.xlu0 %1155
        %1157 = vrot.lane.b32.xlu0 %v248, 124
        %v1158 = vpop.permute.xlu0 %1157
        %1159 = vrot.lane.b32.xlu0 %v249, 124
        %v1160 = vpop.permute.xlu0 %1159
        %1161 = vrot.lane.b32.xlu0 %v250, 124
        %v1162 = vpop.permute.xlu0 %1161
        %1163 = vrot.lane.b32.xlu0 %v251, 124
        %v1164 = vpop.permute.xlu0 %1163
        %1165 = vrot.lane.b32.xlu0 %v252, 124
        %v1166 = vpop.permute.xlu0 %1165
        %1167 = vrot.lane.b32.xlu0 %v253, 124
        %v1168 = vpop.permute.xlu0 %1167
        %1169 = vrot.lane.b32.xlu0 %v254, 124
        %v1170 = vpop.permute.xlu0 %1169
        %1171 = vrot.lane.b32.xlu0 %v255, 124
        %v1172 = vpop.permute.xlu0 %1171
        %1173 = vrot.lane.b32.xlu0 %v256, 124
        %v1174 = vpop.permute.xlu0 %1173
        %1175 = vrot.lane.b32.xlu0 %v257, 124
        %v1176 = vpop.permute.xlu0 %1175
        %1177 = vrot.lane.b32.xlu0 %v258, 124
        %v1178 = vpop.permute.xlu0 %1177
        %1179 = vrot.lane.b32.xlu0 %v259, 124
        %v1180 = vpop.permute.xlu0 %1179
        %1181 = vrot.lane.b32.xlu0 %v260, 124
        %v1182 = vpop.permute.xlu0 %1181
        %1183 = vrot.lane.b32.xlu0 %v261, 124
        %v1184 = vpop.permute.xlu0 %1183
        %1185 = vrot.lane.b32.xlu0 %v262, 124
        %v1186 = vpop.permute.xlu0 %1185
        %1187 = vrot.lane.b32.xlu0 %v263, 124
        %v1188 = vpop.permute.xlu0 %1187
        %1189 = vrot.lane.b32.xlu0 %v264, 124
        %v1190 = vpop.permute.xlu0 %1189
        %1191 = vrot.lane.b32.xlu0 %v265, 124
        %v1192 = vpop.permute.xlu0 %1191
        %1193 = vrot.lane.b32.xlu0 %v266, 124
        %v1194 = vpop.permute.xlu0 %1193
        %1195 = vrot.lane.b32.xlu0 %v267, 124
        %v1196 = vpop.permute.xlu0 %1195
        %1197 = vrot.lane.b32.xlu0 %v268, 124
        %v1198 = vpop.permute.xlu0 %1197
        %1199 = vrot.lane.b32.xlu0 %v269, 124
        %v1200 = vpop.permute.xlu0 %1199
        %1201 = vrot.lane.b32.xlu0 %v270, 124
        %v1202 = vpop.permute.xlu0 %1201
        %1203 = vrot.lane.b32.xlu0 %v271, 124
        %v1204 = vpop.permute.xlu0 %1203
        %1205 = vrot.lane.b32.xlu0 %v272, 124
        %v1206 = vpop.permute.xlu0 %1205
        %1207 = vrot.lane.b32.xlu0 %v273, 124
        %v1208 = vpop.permute.xlu0 %1207
        %1209 = vrot.lane.b32.xlu0 %v274, 124
        %v1210 = vpop.permute.xlu0 %1209
        %1211 = vrot.lane.b32.xlu0 %v283, 124
        %v1212 = vpop.permute.xlu0 %1211
        %1213 = vrot.lane.b32.xlu0 %v284, 124
        %v1214 = vpop.permute.xlu0 %1213
        %1215 = vrot.lane.b32.xlu0 %v285, 124
        %v1216 = vpop.permute.xlu0 %1215
        %1217 = vrot.lane.b32.xlu0 %v286, 124
        %v1218 = vpop.permute.xlu0 %1217
        %1219 = vrot.lane.b32.xlu0 %v287, 124
        %v1220 = vpop.permute.xlu0 %1219
        %1221 = vrot.lane.b32.xlu0 %v288, 124
        %v1222 = vpop.permute.xlu0 %1221
        %1223 = vrot.lane.b32.xlu0 %v289, 124
        %v1224 = vpop.permute.xlu0 %1223
        %1225 = vrot.lane.b32.xlu0 %v290, 124
        %v1226 = vpop.permute.xlu0 %1225
        %1227 = vrot.lane.b32.xlu0 %v291, 124
        %v1228 = vpop.permute.xlu0 %1227
        %1229 = vrot.lane.b32.xlu0 %v292, 124
        %v1230 = vpop.permute.xlu0 %1229
        %1231 = vrot.lane.b32.xlu0 %v293, 124
        %v1232 = vpop.permute.xlu0 %1231
        %1233 = vrot.lane.b32.xlu0 %v294, 124
        %v1234 = vpop.permute.xlu0 %1233
        %1235 = vrot.lane.b32.xlu0 %v295, 124
        %v1236 = vpop.permute.xlu0 %1235
        %1237 = vrot.lane.b32.xlu0 %v296, 124
        %v1238 = vpop.permute.xlu0 %1237
        %1239 = vrot.lane.b32.xlu0 %v297, 124
        %v1240 = vpop.permute.xlu0 %1239
        %1241 = vrot.lane.b32.xlu0 %v298, 124
        %v1242 = vpop.permute.xlu0 %1241
        %1243 = vrot.lane.b32.xlu0 %v299, 124
        %v1244 = vpop.permute.xlu0 %1243
        %1245 = vrot.lane.b32.xlu0 %v300, 124
        %v1246 = vpop.permute.xlu0 %1245
        %1247 = vrot.lane.b32.xlu0 %v301, 124
        %v1248 = vpop.permute.xlu0 %1247
        %1249 = vrot.lane.b32.xlu0 %v302, 124
        %v1250 = vpop.permute.xlu0 %1249
        %1251 = vrot.lane.b32.xlu0 %v303, 124
        %v1252 = vpop.permute.xlu0 %1251
        %1253 = vrot.lane.b32.xlu0 %v304, 124
        %v1254 = vpop.permute.xlu0 %1253
        %1255 = vrot.lane.b32.xlu0 %v305, 124
        %v1256 = vpop.permute.xlu0 %1255
        %1257 = vrot.lane.b32.xlu0 %v306, 124
        %v1258 = vpop.permute.xlu0 %1257
        %1259 = vrot.lane.b32.xlu0 %v307, 124
        %v1260 = vpop.permute.xlu0 %1259
        %1261 = vrot.lane.b32.xlu0 %v308, 124
        %v1262 = vpop.permute.xlu0 %1261
        %1263 = vrot.lane.b32.xlu0 %v309, 124
        %v1264 = vpop.permute.xlu0 %1263
        %1265 = vrot.lane.b32.xlu0 %v310, 124
        %v1266 = vpop.permute.xlu0 %1265
        %1267 = vrot.lane.b32.xlu0 %v311, 124
        %v1268 = vpop.permute.xlu0 %1267
        %1269 = vrot.lane.b32.xlu0 %v312, 124
        %v1270 = vpop.permute.xlu0 %1269
        %1271 = vrot.lane.b32.xlu0 %v313, 124
        %v1272 = vpop.permute.xlu0 %1271
        %1273 = vrot.lane.b32.xlu0 %v314, 124
        %v1274 = vpop.permute.xlu0 %1273
        %v1339 = vadd.f32 %v1083, %v1148
        %v1340 = vadd.f32 %v1084, %v1150
        %v1341 = vadd.f32 %v1085, %v1152
        %v1342 = vadd.f32 %v1086, %v1154
        %v1343 = vadd.f32 %v1087, %v1156
        %v1344 = vadd.f32 %v1088, %v1158
        %v1345 = vadd.f32 %v1089, %v1160
        %v1346 = vadd.f32 %v1090, %v1162
        %v1347 = vadd.f32 %v1091, %v1164
        %v1348 = vadd.f32 %v1092, %v1166
        %v1349 = vadd.f32 %v1093, %v1168
        %v1350 = vadd.f32 %v1094, %v1170
        %v1351 = vadd.f32 %v1095, %v1172
        %v1352 = vadd.f32 %v1096, %v1174
        %v1353 = vadd.f32 %v1097, %v1176
        %v1354 = vadd.f32 %v1098, %v1178
        %v1355 = vadd.f32 %v1099, %v1180
        %v1356 = vadd.f32 %v1100, %v1182
        %v1357 = vadd.f32 %v1101, %v1184
        %v1358 = vadd.f32 %v1102, %v1186
        %v1359 = vadd.f32 %v1103, %v1188
        %v1360 = vadd.f32 %v1104, %v1190
        %v1361 = vadd.f32 %v1105, %v1192
        %v1362 = vadd.f32 %v1106, %v1194
        %v1363 = vadd.f32 %v1107, %v1196
        %v1364 = vadd.f32 %v1108, %v1198
        %v1365 = vadd.f32 %v1109, %v1200
        %v1366 = vadd.f32 %v1110, %v1202
        %v1367 = vadd.f32 %v1111, %v1204
        %v1368 = vadd.f32 %v1112, %v1206
        %v1369 = vadd.f32 %v1113, %v1208
        %v1370 = vadd.f32 %v1114, %v1210
        %v1371 = vadd.f32 %v1115, %v1212
        %v1372 = vadd.f32 %v1116, %v1214
        %v1373 = vadd.f32 %v1117, %v1216
        %v1374 = vadd.f32 %v1118, %v1218
        %v1375 = vadd.f32 %v1119, %v1220
        %v1376 = vadd.f32 %v1120, %v1222
        %v1377 = vadd.f32 %v1121, %v1224
        %v1378 = vadd.f32 %v1122, %v1226
        %v1379 = vadd.f32 %v1123, %v1228
        %v1380 = vadd.f32 %v1124, %v1230
        %v1381 = vadd.f32 %v1125, %v1232
        %v1382 = vadd.f32 %v1126, %v1234
        %v1383 = vadd.f32 %v1127, %v1236
        %v1384 = vadd.f32 %v1128, %v1238
        %v1385 = vadd.f32 %v1129, %v1240
        %v1386 = vadd.f32 %v1130, %v1242
        %v1387 = vadd.f32 %v1131, %v1244
        %v1388 = vadd.f32 %v1132, %v1246
        %v1389 = vadd.f32 %v1133, %v1248
        %v1390 = vadd.f32 %v1134, %v1250
        %v1391 = vadd.f32 %v1135, %v1252
        %v1392 = vadd.f32 %v1136, %v1254
        %v1393 = vadd.f32 %v1137, %v1256
        %v1394 = vadd.f32 %v1138, %v1258
        %v1395 = vadd.f32 %v1139, %v1260
        %v1396 = vadd.f32 %v1140, %v1262
        %v1397 = vadd.f32 %v1141, %v1264
        %v1398 = vadd.f32 %v1142, %v1266
        %v1399 = vadd.f32 %v1143, %v1268
        %v1400 = vadd.f32 %v1144, %v1270
        %v1401 = vadd.f32 %v1145, %v1272
        %v1402 = vadd.f32 %v1146, %v1274
        %1403 = vrot.lane.b32.xlu0 %v243, 123
        %v1404 = vpop.permute.xlu0 %1403
        %1405 = vrot.lane.b32.xlu0 %v244, 123
        %v1406 = vpop.permute.xlu0 %1405
        %1407 = vrot.lane.b32.xlu0 %v245, 123
        %v1408 = vpop.permute.xlu0 %1407
        %1409 = vrot.lane.b32.xlu0 %v246, 123
        %v1410 = vpop.permute.xlu0 %1409
        %1411 = vrot.lane.b32.xlu0 %v247, 123
        %v1412 = vpop.permute.xlu0 %1411
        %1413 = vrot.lane.b32.xlu0 %v248, 123
        %v1414 = vpop.permute.xlu0 %1413
        %1415 = vrot.lane.b32.xlu0 %v249, 123
        %v1416 = vpop.permute.xlu0 %1415
        %1417 = vrot.lane.b32.xlu0 %v250, 123
        %v1418 = vpop.permute.xlu0 %1417
        %1419 = vrot.lane.b32.xlu0 %v251, 123
        %v1420 = vpop.permute.xlu0 %1419
        %1421 = vrot.lane.b32.xlu0 %v252, 123
        %v1422 = vpop.permute.xlu0 %1421
        %1423 = vrot.lane.b32.xlu0 %v253, 123
        %v1424 = vpop.permute.xlu0 %1423
        %1425 = vrot.lane.b32.xlu0 %v254, 123
        %v1426 = vpop.permute.xlu0 %1425
        %1427 = vrot.lane.b32.xlu0 %v255, 123
        %v1428 = vpop.permute.xlu0 %1427
        %1429 = vrot.lane.b32.xlu0 %v256, 123
        %v1430 = vpop.permute.xlu0 %1429
        %1431 = vrot.lane.b32.xlu0 %v257, 123
        %v1432 = vpop.permute.xlu0 %1431
        %1433 = vrot.lane.b32.xlu0 %v258, 123
        %v1434 = vpop.permute.xlu0 %1433
        %1435 = vrot.lane.b32.xlu0 %v259, 123
        %v1436 = vpop.permute.xlu0 %1435
        %1437 = vrot.lane.b32.xlu0 %v260, 123
        %v1438 = vpop.permute.xlu0 %1437
        %1439 = vrot.lane.b32.xlu0 %v261, 123
        %v1440 = vpop.permute.xlu0 %1439
        %1441 = vrot.lane.b32.xlu0 %v262, 123
        %v1442 = vpop.permute.xlu0 %1441
        %1443 = vrot.lane.b32.xlu0 %v263, 123
        %v1444 = vpop.permute.xlu0 %1443
        %1445 = vrot.lane.b32.xlu0 %v264, 123
        %v1446 = vpop.permute.xlu0 %1445
        %1447 = vrot.lane.b32.xlu0 %v265, 123
        %v1448 = vpop.permute.xlu0 %1447
        %1449 = vrot.lane.b32.xlu0 %v266, 123
        %v1450 = vpop.permute.xlu0 %1449
        %1451 = vrot.lane.b32.xlu0 %v267, 123
        %v1452 = vpop.permute.xlu0 %1451
        %1453 = vrot.lane.b32.xlu0 %v268, 123
        %v1454 = vpop.permute.xlu0 %1453
        %1455 = vrot.lane.b32.xlu0 %v269, 123
        %v1456 = vpop.permute.xlu0 %1455
        %1457 = vrot.lane.b32.xlu0 %v270, 123
        %v1458 = vpop.permute.xlu0 %1457
        %1459 = vrot.lane.b32.xlu0 %v271, 123
        %v1460 = vpop.permute.xlu0 %1459
        %1461 = vrot.lane.b32.xlu0 %v272, 123
        %v1462 = vpop.permute.xlu0 %1461
        %1463 = vrot.lane.b32.xlu0 %v273, 123
        %v1464 = vpop.permute.xlu0 %1463
        %1465 = vrot.lane.b32.xlu0 %v274, 123
        %v1466 = vpop.permute.xlu0 %1465
        %1467 = vrot.lane.b32.xlu0 %v283, 123
        %v1468 = vpop.permute.xlu0 %1467
        %1469 = vrot.lane.b32.xlu0 %v284, 123
        %v1470 = vpop.permute.xlu0 %1469
        %1471 = vrot.lane.b32.xlu0 %v285, 123
        %v1472 = vpop.permute.xlu0 %1471
        %1473 = vrot.lane.b32.xlu0 %v286, 123
        %v1474 = vpop.permute.xlu0 %1473
        %1475 = vrot.lane.b32.xlu0 %v287, 123
        %v1476 = vpop.permute.xlu0 %1475
        %1477 = vrot.lane.b32.xlu0 %v288, 123
        %v1478 = vpop.permute.xlu0 %1477
        %1479 = vrot.lane.b32.xlu0 %v289, 123
        %v1480 = vpop.permute.xlu0 %1479
        %1481 = vrot.lane.b32.xlu0 %v290, 123
        %v1482 = vpop.permute.xlu0 %1481
        %1483 = vrot.lane.b32.xlu0 %v291, 123
        %v1484 = vpop.permute.xlu0 %1483
        %1485 = vrot.lane.b32.xlu0 %v292, 123
        %v1486 = vpop.permute.xlu0 %1485
        %1487 = vrot.lane.b32.xlu0 %v293, 123
        %v1488 = vpop.permute.xlu0 %1487
        %1489 = vrot.lane.b32.xlu0 %v294, 123
        %v1490 = vpop.permute.xlu0 %1489
        %1491 = vrot.lane.b32.xlu0 %v295, 123
        %v1492 = vpop.permute.xlu0 %1491
        %1493 = vrot.lane.b32.xlu0 %v296, 123
        %v1494 = vpop.permute.xlu0 %1493
        %1495 = vrot.lane.b32.xlu0 %v297, 123
        %v1496 = vpop.permute.xlu0 %1495
        %1497 = vrot.lane.b32.xlu0 %v298, 123
        %v1498 = vpop.permute.xlu0 %1497
        %1499 = vrot.lane.b32.xlu0 %v299, 123
        %v1500 = vpop.permute.xlu0 %1499
        %1501 = vrot.lane.b32.xlu0 %v300, 123
        %v1502 = vpop.permute.xlu0 %1501
        %1503 = vrot.lane.b32.xlu0 %v301, 123
        %v1504 = vpop.permute.xlu0 %1503
        %1505 = vrot.lane.b32.xlu0 %v302, 123
        %v1506 = vpop.permute.xlu0 %1505
        %1507 = vrot.lane.b32.xlu0 %v303, 123
        %v1508 = vpop.permute.xlu0 %1507
        %1509 = vrot.lane.b32.xlu0 %v304, 123
        %v1510 = vpop.permute.xlu0 %1509
        %1511 = vrot.lane.b32.xlu0 %v305, 123
        %v1512 = vpop.permute.xlu0 %1511
        %1513 = vrot.lane.b32.xlu0 %v306, 123
        %v1514 = vpop.permute.xlu0 %1513
        %1515 = vrot.lane.b32.xlu0 %v307, 123
        %v1516 = vpop.permute.xlu0 %1515
        %1517 = vrot.lane.b32.xlu0 %v308, 123
        %v1518 = vpop.permute.xlu0 %1517
        %1519 = vrot.lane.b32.xlu0 %v309, 123
        %v1520 = vpop.permute.xlu0 %1519
        %1521 = vrot.lane.b32.xlu0 %v310, 123
        %v1522 = vpop.permute.xlu0 %1521
        %1523 = vrot.lane.b32.xlu0 %v311, 123
        %v1524 = vpop.permute.xlu0 %1523
        %1525 = vrot.lane.b32.xlu0 %v312, 123
        %v1526 = vpop.permute.xlu0 %1525
        %1527 = vrot.lane.b32.xlu0 %v313, 123
        %v1528 = vpop.permute.xlu0 %1527
        %1529 = vrot.lane.b32.xlu0 %v314, 123
        %v1530 = vpop.permute.xlu0 %1529
        %v1595 = vadd.f32 %v1339, %v1404
        %v1596 = vadd.f32 %v1340, %v1406
        %v1597 = vadd.f32 %v1341, %v1408
        %v1598 = vadd.f32 %v1342, %v1410
        %v1599 = vadd.f32 %v1343, %v1412
        %v1600 = vadd.f32 %v1344, %v1414
        %v1601 = vadd.f32 %v1345, %v1416
        %v1602 = vadd.f32 %v1346, %v1418
        %v1603 = vadd.f32 %v1347, %v1420
        %v1604 = vadd.f32 %v1348, %v1422
        %v1605 = vadd.f32 %v1349, %v1424
        %v1606 = vadd.f32 %v1350, %v1426
        %v1607 = vadd.f32 %v1351, %v1428
        %v1608 = vadd.f32 %v1352, %v1430
        %v1609 = vadd.f32 %v1353, %v1432
        %v1610 = vadd.f32 %v1354, %v1434
        %v1611 = vadd.f32 %v1355, %v1436
        %v1612 = vadd.f32 %v1356, %v1438
        %v1613 = vadd.f32 %v1357, %v1440
        %v1614 = vadd.f32 %v1358, %v1442
        %v1615 = vadd.f32 %v1359, %v1444
        %v1616 = vadd.f32 %v1360, %v1446
        %v1617 = vadd.f32 %v1361, %v1448
        %v1618 = vadd.f32 %v1362, %v1450
        %v1619 = vadd.f32 %v1363, %v1452
        %v1620 = vadd.f32 %v1364, %v1454
        %v1621 = vadd.f32 %v1365, %v1456
        %v1622 = vadd.f32 %v1366, %v1458
        %v1623 = vadd.f32 %v1367, %v1460
        %v1624 = vadd.f32 %v1368, %v1462
        %v1625 = vadd.f32 %v1369, %v1464
        %v1626 = vadd.f32 %v1370, %v1466
        %v1627 = vadd.f32 %v1371, %v1468
        %v1628 = vadd.f32 %v1372, %v1470
        %v1629 = vadd.f32 %v1373, %v1472
        %v1630 = vadd.f32 %v1374, %v1474
        %v1631 = vadd.f32 %v1375, %v1476
        %v1632 = vadd.f32 %v1376, %v1478
        %v1633 = vadd.f32 %v1377, %v1480
        %v1634 = vadd.f32 %v1378, %v1482
        %v1635 = vadd.f32 %v1379, %v1484
        %v1636 = vadd.f32 %v1380, %v1486
        %v1637 = vadd.f32 %v1381, %v1488
        %v1638 = vadd.f32 %v1382, %v1490
        %v1639 = vadd.f32 %v1383, %v1492
        %v1640 = vadd.f32 %v1384, %v1494
        %v1641 = vadd.f32 %v1385, %v1496
        %v1642 = vadd.f32 %v1386, %v1498
        %v1643 = vadd.f32 %v1387, %v1500
        %v1644 = vadd.f32 %v1388, %v1502
        %v1645 = vadd.f32 %v1389, %v1504
        %v1646 = vadd.f32 %v1390, %v1506
        %v1647 = vadd.f32 %v1391, %v1508
        %v1648 = vadd.f32 %v1392, %v1510
        %v1649 = vadd.f32 %v1393, %v1512
        %v1650 = vadd.f32 %v1394, %v1514
        %v1651 = vadd.f32 %v1395, %v1516
        %v1652 = vadd.f32 %v1396, %v1518
        %v1653 = vadd.f32 %v1397, %v1520
        %v1654 = vadd.f32 %v1398, %v1522
        %v1655 = vadd.f32 %v1399, %v1524
        %v1656 = vadd.f32 %v1400, %v1526
        %v1657 = vadd.f32 %v1401, %v1528
        %v1658 = vadd.f32 %v1402, %v1530
        %1659 = vrot.lane.b32.xlu0 %v243, 122
        %v1660 = vpop.permute.xlu0 %1659
        %1661 = vrot.lane.b32.xlu0 %v244, 122
        %v1662 = vpop.permute.xlu0 %1661
        %1663 = vrot.lane.b32.xlu0 %v245, 122
        %v1664 = vpop.permute.xlu0 %1663
        %1665 = vrot.lane.b32.xlu0 %v246, 122
        %v1666 = vpop.permute.xlu0 %1665
        %1667 = vrot.lane.b32.xlu0 %v247, 122
        %v1668 = vpop.permute.xlu0 %1667
        %1669 = vrot.lane.b32.xlu0 %v248, 122
        %v1670 = vpop.permute.xlu0 %1669
        %1671 = vrot.lane.b32.xlu0 %v249, 122
        %v1672 = vpop.permute.xlu0 %1671
        %1673 = vrot.lane.b32.xlu0 %v250, 122
        %v1674 = vpop.permute.xlu0 %1673
        %1675 = vrot.lane.b32.xlu0 %v251, 122
        %v1676 = vpop.permute.xlu0 %1675
        %1677 = vrot.lane.b32.xlu0 %v252, 122
        %v1678 = vpop.permute.xlu0 %1677
        %1679 = vrot.lane.b32.xlu0 %v253, 122
        %v1680 = vpop.permute.xlu0 %1679
        %1681 = vrot.lane.b32.xlu0 %v254, 122
        %v1682 = vpop.permute.xlu0 %1681
        %1683 = vrot.lane.b32.xlu0 %v255, 122
        %v1684 = vpop.permute.xlu0 %1683
        %1685 = vrot.lane.b32.xlu0 %v256, 122
        %v1686 = vpop.permute.xlu0 %1685
        %1687 = vrot.lane.b32.xlu0 %v257, 122
        %v1688 = vpop.permute.xlu0 %1687
        %1689 = vrot.lane.b32.xlu0 %v258, 122
        %v1690 = vpop.permute.xlu0 %1689
        %1691 = vrot.lane.b32.xlu0 %v259, 122
        %v1692 = vpop.permute.xlu0 %1691
        %1693 = vrot.lane.b32.xlu0 %v260, 122
        %v1694 = vpop.permute.xlu0 %1693
        %1695 = vrot.lane.b32.xlu0 %v261, 122
        %v1696 = vpop.permute.xlu0 %1695
        %1697 = vrot.lane.b32.xlu0 %v262, 122
        %v1698 = vpop.permute.xlu0 %1697
        %1699 = vrot.lane.b32.xlu0 %v263, 122
        %v1700 = vpop.permute.xlu0 %1699
        %1701 = vrot.lane.b32.xlu0 %v264, 122
        %v1702 = vpop.permute.xlu0 %1701
        %1703 = vrot.lane.b32.xlu0 %v265, 122
        %v1704 = vpop.permute.xlu0 %1703
        %1705 = vrot.lane.b32.xlu0 %v266, 122
        %v1706 = vpop.permute.xlu0 %1705
        %1707 = vrot.lane.b32.xlu0 %v267, 122
        %v1708 = vpop.permute.xlu0 %1707
        %1709 = vrot.lane.b32.xlu0 %v268, 122
        %v1710 = vpop.permute.xlu0 %1709
        %1711 = vrot.lane.b32.xlu0 %v269, 122
        %v1712 = vpop.permute.xlu0 %1711
        %1713 = vrot.lane.b32.xlu0 %v270, 122
        %v1714 = vpop.permute.xlu0 %1713
        %1715 = vrot.lane.b32.xlu0 %v271, 122
        %v1716 = vpop.permute.xlu0 %1715
        %1717 = vrot.lane.b32.xlu0 %v272, 122
        %v1718 = vpop.permute.xlu0 %1717
        %1719 = vrot.lane.b32.xlu0 %v273, 122
        %v1720 = vpop.permute.xlu0 %1719
        %1721 = vrot.lane.b32.xlu0 %v274, 122
        %v1722 = vpop.permute.xlu0 %1721
        %1723 = vrot.lane.b32.xlu0 %v283, 122
        %v1724 = vpop.permute.xlu0 %1723
        %1725 = vrot.lane.b32.xlu0 %v284, 122
        %v1726 = vpop.permute.xlu0 %1725
        %1727 = vrot.lane.b32.xlu0 %v285, 122
        %v1728 = vpop.permute.xlu0 %1727
        %1729 = vrot.lane.b32.xlu0 %v286, 122
        %v1730 = vpop.permute.xlu0 %1729
        %1731 = vrot.lane.b32.xlu0 %v287, 122
        %v1732 = vpop.permute.xlu0 %1731
        %1733 = vrot.lane.b32.xlu0 %v288, 122
        %v1734 = vpop.permute.xlu0 %1733
        %1735 = vrot.lane.b32.xlu0 %v289, 122
        %v1736 = vpop.permute.xlu0 %1735
        %1737 = vrot.lane.b32.xlu0 %v290, 122
        %v1738 = vpop.permute.xlu0 %1737
        %1739 = vrot.lane.b32.xlu0 %v291, 122
        %v1740 = vpop.permute.xlu0 %1739
        %1741 = vrot.lane.b32.xlu0 %v292, 122
        %v1742 = vpop.permute.xlu0 %1741
        %1743 = vrot.lane.b32.xlu0 %v293, 122
        %v1744 = vpop.permute.xlu0 %1743
        %1745 = vrot.lane.b32.xlu0 %v294, 122
        %v1746 = vpop.permute.xlu0 %1745
        %1747 = vrot.lane.b32.xlu0 %v295, 122
        %v1748 = vpop.permute.xlu0 %1747
        %1749 = vrot.lane.b32.xlu0 %v296, 122
        %v1750 = vpop.permute.xlu0 %1749
        %1751 = vrot.lane.b32.xlu0 %v297, 122
        %v1752 = vpop.permute.xlu0 %1751
        %1753 = vrot.lane.b32.xlu0 %v298, 122
        %v1754 = vpop.permute.xlu0 %1753
        %1755 = vrot.lane.b32.xlu0 %v299, 122
        %v1756 = vpop.permute.xlu0 %1755
        %1757 = vrot.lane.b32.xlu0 %v300, 122
        %v1758 = vpop.permute.xlu0 %1757
        %1759 = vrot.lane.b32.xlu0 %v301, 122
        %v1760 = vpop.permute.xlu0 %1759
        %1761 = vrot.lane.b32.xlu0 %v302, 122
        %v1762 = vpop.permute.xlu0 %1761
        %1763 = vrot.lane.b32.xlu0 %v303, 122
        %v1764 = vpop.permute.xlu0 %1763
        %1765 = vrot.lane.b32.xlu0 %v304, 122
        %v1766 = vpop.permute.xlu0 %1765
        %1767 = vrot.lane.b32.xlu0 %v305, 122
        %v1768 = vpop.permute.xlu0 %1767
        %1769 = vrot.lane.b32.xlu0 %v306, 122
        %v1770 = vpop.permute.xlu0 %1769
        %1771 = vrot.lane.b32.xlu0 %v307, 122
        %v1772 = vpop.permute.xlu0 %1771
        %1773 = vrot.lane.b32.xlu0 %v308, 122
        %v1774 = vpop.permute.xlu0 %1773
        %1775 = vrot.lane.b32.xlu0 %v309, 122
        %v1776 = vpop.permute.xlu0 %1775
        %1777 = vrot.lane.b32.xlu0 %v310, 122
        %v1778 = vpop.permute.xlu0 %1777
        %1779 = vrot.lane.b32.xlu0 %v311, 122
        %v1780 = vpop.permute.xlu0 %1779
        %1781 = vrot.lane.b32.xlu0 %v312, 122
        %v1782 = vpop.permute.xlu0 %1781
        %1783 = vrot.lane.b32.xlu0 %v313, 122
        %v1784 = vpop.permute.xlu0 %1783
        %1785 = vrot.lane.b32.xlu0 %v314, 122
        %v1786 = vpop.permute.xlu0 %1785
        %v1851 = vadd.f32 %v1595, %v1660
        %v1852 = vadd.f32 %v1596, %v1662
        %v1853 = vadd.f32 %v1597, %v1664
        %v1854 = vadd.f32 %v1598, %v1666
        %v1855 = vadd.f32 %v1599, %v1668
        %v1856 = vadd.f32 %v1600, %v1670
        %v1857 = vadd.f32 %v1601, %v1672
        %v1858 = vadd.f32 %v1602, %v1674
        %v1859 = vadd.f32 %v1603, %v1676
        %v1860 = vadd.f32 %v1604, %v1678
        %v1861 = vadd.f32 %v1605, %v1680
        %v1862 = vadd.f32 %v1606, %v1682
        %v1863 = vadd.f32 %v1607, %v1684
        %v1864 = vadd.f32 %v1608, %v1686
        %v1865 = vadd.f32 %v1609, %v1688
        %v1866 = vadd.f32 %v1610, %v1690
        %v1867 = vadd.f32 %v1611, %v1692
        %v1868 = vadd.f32 %v1612, %v1694
        %v1869 = vadd.f32 %v1613, %v1696
        %v1870 = vadd.f32 %v1614, %v1698
        %v1871 = vadd.f32 %v1615, %v1700
        %v1872 = vadd.f32 %v1616, %v1702
        %v1873 = vadd.f32 %v1617, %v1704
        %v1874 = vadd.f32 %v1618, %v1706
        %v1875 = vadd.f32 %v1619, %v1708
        %v1876 = vadd.f32 %v1620, %v1710
        %v1877 = vadd.f32 %v1621, %v1712
        %v1878 = vadd.f32 %v1622, %v1714
        %v1879 = vadd.f32 %v1623, %v1716
        %v1880 = vadd.f32 %v1624, %v1718
        %v1881 = vadd.f32 %v1625, %v1720
        %v1882 = vadd.f32 %v1626, %v1722
        %v1883 = vadd.f32 %v1627, %v1724
        %v1884 = vadd.f32 %v1628, %v1726
        %v1885 = vadd.f32 %v1629, %v1728
        %v1886 = vadd.f32 %v1630, %v1730
        %v1887 = vadd.f32 %v1631, %v1732
        %v1888 = vadd.f32 %v1632, %v1734
        %v1889 = vadd.f32 %v1633, %v1736
        %v1890 = vadd.f32 %v1634, %v1738
        %v1891 = vadd.f32 %v1635, %v1740
        %v1892 = vadd.f32 %v1636, %v1742
        %v1893 = vadd.f32 %v1637, %v1744
        %v1894 = vadd.f32 %v1638, %v1746
        %v1895 = vadd.f32 %v1639, %v1748
        %v1896 = vadd.f32 %v1640, %v1750
        %v1897 = vadd.f32 %v1641, %v1752
        %v1898 = vadd.f32 %v1642, %v1754
        %v1899 = vadd.f32 %v1643, %v1756
        %v1900 = vadd.f32 %v1644, %v1758
        %v1901 = vadd.f32 %v1645, %v1760
        %v1902 = vadd.f32 %v1646, %v1762
        %v1903 = vadd.f32 %v1647, %v1764
        %v1904 = vadd.f32 %v1648, %v1766
        %v1905 = vadd.f32 %v1649, %v1768
        %v1906 = vadd.f32 %v1650, %v1770
        %v1907 = vadd.f32 %v1651, %v1772
        %v1908 = vadd.f32 %v1652, %v1774
        %v1909 = vadd.f32 %v1653, %v1776
        %v1910 = vadd.f32 %v1654, %v1778
        %v1911 = vadd.f32 %v1655, %v1780
        %v1912 = vadd.f32 %v1656, %v1782
        %v1913 = vadd.f32 %v1657, %v1784
        %v1914 = vadd.f32 %v1658, %v1786
        %vm1963 = vcmask 1046528
        %v1964 = vrot.slane %v1851, 1
        %v1965 = vrot.slane %v1852, 1
        %v1966 = vsel %vm1963, %v1964, %v1965
        %v1967 = vrot.slane %v1853, 1
        %v1968 = vsel %vm1963, %v1965, %v1967
        %v1969 = vrot.slane %v1855, 1
        %v1970 = vrot.slane %v1856, 1
        %v1971 = vsel %vm1963, %v1969, %v1970
        %v1972 = vrot.slane %v1857, 1
        %v1973 = vsel %vm1963, %v1970, %v1972
        %v1974 = vrot.slane %v1859, 1
        %v1975 = vrot.slane %v1860, 1
        %v1976 = vsel %vm1963, %v1974, %v1975
        %v1977 = vrot.slane %v1861, 1
        %v1978 = vsel %vm1963, %v1975, %v1977
        %v1979 = vrot.slane %v1863, 1
        %v1980 = vrot.slane %v1864, 1
        %v1981 = vsel %vm1963, %v1979, %v1980
        %v1982 = vrot.slane %v1865, 1
        %v1983 = vsel %vm1963, %v1980, %v1982
        %v1984 = vrot.slane %v1867, 1
        %v1985 = vrot.slane %v1868, 1
        %v1986 = vsel %vm1963, %v1984, %v1985
        %v1987 = vrot.slane %v1869, 1
        %v1988 = vsel %vm1963, %v1985, %v1987
        %v1989 = vrot.slane %v1871, 1
        %v1990 = vrot.slane %v1872, 1
        %v1991 = vsel %vm1963, %v1989, %v1990
        %v1992 = vrot.slane %v1873, 1
        %v1993 = vsel %vm1963, %v1990, %v1992
        %v1994 = vrot.slane %v1875, 1
        %v1995 = vrot.slane %v1876, 1
        %v1996 = vsel %vm1963, %v1994, %v1995
        %v1997 = vrot.slane %v1877, 1
        %v1998 = vsel %vm1963, %v1995, %v1997
        %v1999 = vrot.slane %v1879, 1
        %v2000 = vrot.slane %v1880, 1
        %v2001 = vsel %vm1963, %v1999, %v2000
        %v2002 = vrot.slane %v1881, 1
        %v2003 = vsel %vm1963, %v2000, %v2002
        %v2004 = vrot.slane %v1883, 1
        %v2005 = vrot.slane %v1884, 1
        %v2006 = vsel %vm1963, %v2004, %v2005
        %v2007 = vrot.slane %v1885, 1
        %v2008 = vsel %vm1963, %v2005, %v2007
        %v2009 = vrot.slane %v1887, 1
        %v2010 = vrot.slane %v1888, 1
        %v2011 = vsel %vm1963, %v2009, %v2010
        %v2012 = vrot.slane %v1889, 1
        %v2013 = vsel %vm1963, %v2010, %v2012
        %v2014 = vrot.slane %v1891, 1
        %v2015 = vrot.slane %v1892, 1
        %v2016 = vsel %vm1963, %v2014, %v2015
        %v2017 = vrot.slane %v1893, 1
        %v2018 = vsel %vm1963, %v2015, %v2017
        %v2019 = vrot.slane %v1895, 1
        %v2020 = vrot.slane %v1896, 1
        %v2021 = vsel %vm1963, %v2019, %v2020
        %v2022 = vrot.slane %v1897, 1
        %v2023 = vsel %vm1963, %v2020, %v2022
        %v2024 = vrot.slane %v1899, 1
        %v2025 = vrot.slane %v1900, 1
        %v2026 = vsel %vm1963, %v2024, %v2025
        %v2027 = vrot.slane %v1901, 1
        %v2028 = vsel %vm1963, %v2025, %v2027
        %v2029 = vrot.slane %v1903, 1
        %v2030 = vrot.slane %v1904, 1
        %v2031 = vsel %vm1963, %v2029, %v2030
        %v2032 = vrot.slane %v1905, 1
        %v2033 = vsel %vm1963, %v2030, %v2032
        %v2034 = vrot.slane %v1907, 1
        %v2035 = vrot.slane %v1908, 1
        %v2036 = vsel %vm1963, %v2034, %v2035
        %v2037 = vrot.slane %v1909, 1
        %v2038 = vsel %vm1963, %v2035, %v2037
        %v2039 = vrot.slane %v1911, 1
        %v2040 = vrot.slane %v1912, 1
        %v2041 = vsel %vm1963, %v2039, %v2040
        %v2042 = vrot.slane %v1913, 1
        %v2043 = vsel %vm1963, %v2040, %v2042
        %v2092 = vadd.f32 %v1851, %v1966
        %v2093 = vadd.f32 %v1852, %v1968
        %v2094 = vadd.f32 %v1853, %v1967
        %v2095 = vadd.f32 %v1855, %v1971
        %v2096 = vadd.f32 %v1856, %v1973
        %v2097 = vadd.f32 %v1857, %v1972
        %v2098 = vadd.f32 %v1859, %v1976
        %v2099 = vadd.f32 %v1860, %v1978
        %v2100 = vadd.f32 %v1861, %v1977
        %v2101 = vadd.f32 %v1863, %v1981
        %v2102 = vadd.f32 %v1864, %v1983
        %v2103 = vadd.f32 %v1865, %v1982
        %v2104 = vadd.f32 %v1867, %v1986
        %v2105 = vadd.f32 %v1868, %v1988
        %v2106 = vadd.f32 %v1869, %v1987
        %v2107 = vadd.f32 %v1871, %v1991
        %v2108 = vadd.f32 %v1872, %v1993
        %v2109 = vadd.f32 %v1873, %v1992
        %v2110 = vadd.f32 %v1875, %v1996
        %v2111 = vadd.f32 %v1876, %v1998
        %v2112 = vadd.f32 %v1877, %v1997
        %v2113 = vadd.f32 %v1879, %v2001
        %v2114 = vadd.f32 %v1880, %v2003
        %v2115 = vadd.f32 %v1881, %v2002
        %v2116 = vadd.f32 %v1883, %v2006
        %v2117 = vadd.f32 %v1884, %v2008
        %v2118 = vadd.f32 %v1885, %v2007
        %v2119 = vadd.f32 %v1887, %v2011
        %v2120 = vadd.f32 %v1888, %v2013
        %v2121 = vadd.f32 %v1889, %v2012
        %v2122 = vadd.f32 %v1891, %v2016
        %v2123 = vadd.f32 %v1892, %v2018
        %v2124 = vadd.f32 %v1893, %v2017
        %v2125 = vadd.f32 %v1895, %v2021
        %v2126 = vadd.f32 %v1896, %v2023
        %v2127 = vadd.f32 %v1897, %v2022
        %v2128 = vadd.f32 %v1899, %v2026
        %v2129 = vadd.f32 %v1900, %v2028
        %v2130 = vadd.f32 %v1901, %v2027
        %v2131 = vadd.f32 %v1903, %v2031
        %v2132 = vadd.f32 %v1904, %v2033
        %v2133 = vadd.f32 %v1905, %v2032
        %v2134 = vadd.f32 %v1907, %v2036
        %v2135 = vadd.f32 %v1908, %v2038
        %v2136 = vadd.f32 %v1909, %v2037
        %v2137 = vadd.f32 %v1911, %v2041
        %v2138 = vadd.f32 %v1912, %v2043
        %v2139 = vadd.f32 %v1913, %v2042
        %vm2140 = vcmask 1045504
        %v2141 = vrot.slane %v1851, 2
        %v2142 = vrot.slane %v1852, 2
        %v2143 = vsel %vm2140, %v2141, %v2142
        %v2144 = vrot.slane %v1853, 2
        %v2145 = vsel %vm2140, %v2142, %v2144
        %v2146 = vrot.slane %v1855, 2
        %v2147 = vrot.slane %v1856, 2
        %v2148 = vsel %vm2140, %v2146, %v2147
        %v2149 = vrot.slane %v1857, 2
        %v2150 = vsel %vm2140, %v2147, %v2149
        %v2151 = vrot.slane %v1859, 2
        %v2152 = vrot.slane %v1860, 2
        %v2153 = vsel %vm2140, %v2151, %v2152
        %v2154 = vrot.slane %v1861, 2
        %v2155 = vsel %vm2140, %v2152, %v2154
        %v2156 = vrot.slane %v1863, 2
        %v2157 = vrot.slane %v1864, 2
        %v2158 = vsel %vm2140, %v2156, %v2157
        %v2159 = vrot.slane %v1865, 2
        %v2160 = vsel %vm2140, %v2157, %v2159
        %v2161 = vrot.slane %v1867, 2
        %v2162 = vrot.slane %v1868, 2
        %v2163 = vsel %vm2140, %v2161, %v2162
        %v2164 = vrot.slane %v1869, 2
        %v2165 = vsel %vm2140, %v2162, %v2164
        %v2166 = vrot.slane %v1871, 2
        %v2167 = vrot.slane %v1872, 2
        %v2168 = vsel %vm2140, %v2166, %v2167
        %v2169 = vrot.slane %v1873, 2
        %v2170 = vsel %vm2140, %v2167, %v2169
        %v2171 = vrot.slane %v1875, 2
        %v2172 = vrot.slane %v1876, 2
        %v2173 = vsel %vm2140, %v2171, %v2172
        %v2174 = vrot.slane %v1877, 2
        %v2175 = vsel %vm2140, %v2172, %v2174
        %v2176 = vrot.slane %v1879, 2
        %v2177 = vrot.slane %v1880, 2
        %v2178 = vsel %vm2140, %v2176, %v2177
        %v2179 = vrot.slane %v1881, 2
        %v2180 = vsel %vm2140, %v2177, %v2179
        %v2181 = vrot.slane %v1883, 2
        %v2182 = vrot.slane %v1884, 2
        %v2183 = vsel %vm2140, %v2181, %v2182
        %v2184 = vrot.slane %v1885, 2
        %v2185 = vsel %vm2140, %v2182, %v2184
        %v2186 = vrot.slane %v1887, 2
        %v2187 = vrot.slane %v1888, 2
        %v2188 = vsel %vm2140, %v2186, %v2187
        %v2189 = vrot.slane %v1889, 2
        %v2190 = vsel %vm2140, %v2187, %v2189
        %v2191 = vrot.slane %v1891, 2
        %v2192 = vrot.slane %v1892, 2
        %v2193 = vsel %vm2140, %v2191, %v2192
        %v2194 = vrot.slane %v1893, 2
        %v2195 = vsel %vm2140, %v2192, %v2194
        %v2196 = vrot.slane %v1895, 2
        %v2197 = vrot.slane %v1896, 2
        %v2198 = vsel %vm2140, %v2196, %v2197
        %v2199 = vrot.slane %v1897, 2
        %v2200 = vsel %vm2140, %v2197, %v2199
        %v2201 = vrot.slane %v1899, 2
        %v2202 = vrot.slane %v1900, 2
        %v2203 = vsel %vm2140, %v2201, %v2202
        %v2204 = vrot.slane %v1901, 2
        %v2205 = vsel %vm2140, %v2202, %v2204
        %v2206 = vrot.slane %v1903, 2
        %v2207 = vrot.slane %v1904, 2
        %v2208 = vsel %vm2140, %v2206, %v2207
        %v2209 = vrot.slane %v1905, 2
        %v2210 = vsel %vm2140, %v2207, %v2209
        %v2211 = vrot.slane %v1907, 2
        %v2212 = vrot.slane %v1908, 2
        %v2213 = vsel %vm2140, %v2211, %v2212
        %v2214 = vrot.slane %v1909, 2
        %v2215 = vsel %vm2140, %v2212, %v2214
        %v2216 = vrot.slane %v1911, 2
        %v2217 = vrot.slane %v1912, 2
        %v2218 = vsel %vm2140, %v2216, %v2217
        %v2219 = vrot.slane %v1913, 2
        %v2220 = vsel %vm2140, %v2217, %v2219
        %v2269 = vadd.f32 %v2092, %v2143
        %v2270 = vadd.f32 %v2093, %v2145
        %v2271 = vadd.f32 %v2094, %v2144
        %v2272 = vadd.f32 %v2095, %v2148
        %v2273 = vadd.f32 %v2096, %v2150
        %v2274 = vadd.f32 %v2097, %v2149
        %v2275 = vadd.f32 %v2098, %v2153
        %v2276 = vadd.f32 %v2099, %v2155
        %v2277 = vadd.f32 %v2100, %v2154
        %v2278 = vadd.f32 %v2101, %v2158
        %v2279 = vadd.f32 %v2102, %v2160
        %v2280 = vadd.f32 %v2103, %v2159
        %v2281 = vadd.f32 %v2104, %v2163
        %v2282 = vadd.f32 %v2105, %v2165
        %v2283 = vadd.f32 %v2106, %v2164
        %v2284 = vadd.f32 %v2107, %v2168
        %v2285 = vadd.f32 %v2108, %v2170
        %v2286 = vadd.f32 %v2109, %v2169
        %v2287 = vadd.f32 %v2110, %v2173
        %v2288 = vadd.f32 %v2111, %v2175
        %v2289 = vadd.f32 %v2112, %v2174
        %v2290 = vadd.f32 %v2113, %v2178
        %v2291 = vadd.f32 %v2114, %v2180
        %v2292 = vadd.f32 %v2115, %v2179
        %v2293 = vadd.f32 %v2116, %v2183
        %v2294 = vadd.f32 %v2117, %v2185
        %v2295 = vadd.f32 %v2118, %v2184
        %v2296 = vadd.f32 %v2119, %v2188
        %v2297 = vadd.f32 %v2120, %v2190
        %v2298 = vadd.f32 %v2121, %v2189
        %v2299 = vadd.f32 %v2122, %v2193
        %v2300 = vadd.f32 %v2123, %v2195
        %v2301 = vadd.f32 %v2124, %v2194
        %v2302 = vadd.f32 %v2125, %v2198
        %v2303 = vadd.f32 %v2126, %v2200
        %v2304 = vadd.f32 %v2127, %v2199
        %v2305 = vadd.f32 %v2128, %v2203
        %v2306 = vadd.f32 %v2129, %v2205
        %v2307 = vadd.f32 %v2130, %v2204
        %v2308 = vadd.f32 %v2131, %v2208
        %v2309 = vadd.f32 %v2132, %v2210
        %v2310 = vadd.f32 %v2133, %v2209
        %v2311 = vadd.f32 %v2134, %v2213
        %v2312 = vadd.f32 %v2135, %v2215
        %v2313 = vadd.f32 %v2136, %v2214
        %v2314 = vadd.f32 %v2137, %v2218
        %v2315 = vadd.f32 %v2138, %v2220
        %v2316 = vadd.f32 %v2139, %v2219
        %vm2333 = vcmask 1044480
        %v2334 = vrot.slane %v1851, 3
        %v2335 = vrot.slane %v1852, 3
        %v2336 = vsel %vm2333, %v2334, %v2335
        %v2337 = vrot.slane %v1853, 3
        %v2338 = vsel %vm2333, %v2335, %v2337
        %v2339 = vrot.slane %v1854, 3
        %v2340 = vsel %vm2333, %v2337, %v2339
        %v2341 = vrot.slane %v1855, 3
        %v2342 = vrot.slane %v1856, 3
        %v2343 = vsel %vm2333, %v2341, %v2342
        %v2344 = vrot.slane %v1857, 3
        %v2345 = vsel %vm2333, %v2342, %v2344
        %v2346 = vrot.slane %v1858, 3
        %v2347 = vsel %vm2333, %v2344, %v2346
        %v2348 = vrot.slane %v1859, 3
        %v2349 = vrot.slane %v1860, 3
        %v2350 = vsel %vm2333, %v2348, %v2349
        %v2351 = vrot.slane %v1861, 3
        %v2352 = vsel %vm2333, %v2349, %v2351
        %v2353 = vrot.slane %v1862, 3
        %v2354 = vsel %vm2333, %v2351, %v2353
        %v2355 = vrot.slane %v1863, 3
        %v2356 = vrot.slane %v1864, 3
        %v2357 = vsel %vm2333, %v2355, %v2356
        %v2358 = vrot.slane %v1865, 3
        %v2359 = vsel %vm2333, %v2356, %v2358
        %v2360 = vrot.slane %v1866, 3
        %v2361 = vsel %vm2333, %v2358, %v2360
        %v2362 = vrot.slane %v1867, 3
        %v2363 = vrot.slane %v1868, 3
        %v2364 = vsel %vm2333, %v2362, %v2363
        %v2365 = vrot.slane %v1869, 3
        %v2366 = vsel %vm2333, %v2363, %v2365
        %v2367 = vrot.slane %v1870, 3
        %v2368 = vsel %vm2333, %v2365, %v2367
        %v2369 = vrot.slane %v1871, 3
        %v2370 = vrot.slane %v1872, 3
        %v2371 = vsel %vm2333, %v2369, %v2370
        %v2372 = vrot.slane %v1873, 3
        %v2373 = vsel %vm2333, %v2370, %v2372
        %v2374 = vrot.slane %v1874, 3
        %v2375 = vsel %vm2333, %v2372, %v2374
        %v2376 = vrot.slane %v1875, 3
        %v2377 = vrot.slane %v1876, 3
        %v2378 = vsel %vm2333, %v2376, %v2377
        %v2379 = vrot.slane %v1877, 3
        %v2380 = vsel %vm2333, %v2377, %v2379
        %v2381 = vrot.slane %v1878, 3
        %v2382 = vsel %vm2333, %v2379, %v2381
        %v2383 = vrot.slane %v1879, 3
        %v2384 = vrot.slane %v1880, 3
        %v2385 = vsel %vm2333, %v2383, %v2384
        %v2386 = vrot.slane %v1881, 3
        %v2387 = vsel %vm2333, %v2384, %v2386
        %v2388 = vrot.slane %v1882, 3
        %v2389 = vsel %vm2333, %v2386, %v2388
        %v2390 = vrot.slane %v1883, 3
        %v2391 = vrot.slane %v1884, 3
        %v2392 = vsel %vm2333, %v2390, %v2391
        %v2393 = vrot.slane %v1885, 3
        %v2394 = vsel %vm2333, %v2391, %v2393
        %v2395 = vrot.slane %v1886, 3
        %v2396 = vsel %vm2333, %v2393, %v2395
        %v2397 = vrot.slane %v1887, 3
        %v2398 = vrot.slane %v1888, 3
        %v2399 = vsel %vm2333, %v2397, %v2398
        %v2400 = vrot.slane %v1889, 3
        %v2401 = vsel %vm2333, %v2398, %v2400
        %v2402 = vrot.slane %v1890, 3
        %v2403 = vsel %vm2333, %v2400, %v2402
        %v2404 = vrot.slane %v1891, 3
        %v2405 = vrot.slane %v1892, 3
        %v2406 = vsel %vm2333, %v2404, %v2405
        %v2407 = vrot.slane %v1893, 3
        %v2408 = vsel %vm2333, %v2405, %v2407
        %v2409 = vrot.slane %v1894, 3
        %v2410 = vsel %vm2333, %v2407, %v2409
        %v2411 = vrot.slane %v1895, 3
        %v2412 = vrot.slane %v1896, 3
        %v2413 = vsel %vm2333, %v2411, %v2412
        %v2414 = vrot.slane %v1897, 3
        %v2415 = vsel %vm2333, %v2412, %v2414
        %v2416 = vrot.slane %v1898, 3
        %v2417 = vsel %vm2333, %v2414, %v2416
        %v2418 = vrot.slane %v1899, 3
        %v2419 = vrot.slane %v1900, 3
        %v2420 = vsel %vm2333, %v2418, %v2419
        %v2421 = vrot.slane %v1901, 3
        %v2422 = vsel %vm2333, %v2419, %v2421
        %v2423 = vrot.slane %v1902, 3
        %v2424 = vsel %vm2333, %v2421, %v2423
        %v2425 = vrot.slane %v1903, 3
        %v2426 = vrot.slane %v1904, 3
        %v2427 = vsel %vm2333, %v2425, %v2426
        %v2428 = vrot.slane %v1905, 3
        %v2429 = vsel %vm2333, %v2426, %v2428
        %v2430 = vrot.slane %v1906, 3
        %v2431 = vsel %vm2333, %v2428, %v2430
        %v2432 = vrot.slane %v1907, 3
        %v2433 = vrot.slane %v1908, 3
        %v2434 = vsel %vm2333, %v2432, %v2433
        %v2435 = vrot.slane %v1909, 3
        %v2436 = vsel %vm2333, %v2433, %v2435
        %v2437 = vrot.slane %v1910, 3
        %v2438 = vsel %vm2333, %v2435, %v2437
        %v2439 = vrot.slane %v1911, 3
        %v2440 = vrot.slane %v1912, 3
        %v2441 = vsel %vm2333, %v2439, %v2440
        %v2442 = vrot.slane %v1913, 3
        %v2443 = vsel %vm2333, %v2440, %v2442
        %v2444 = vrot.slane %v1914, 3
        %v2445 = vsel %vm2333, %v2442, %v2444
        %v2494 = vadd.f32 %v2269, %v2336
        %v2495 = vadd.f32 %v2270, %v2338
        %v2496 = vadd.f32 %v2271, %v2340
        %v2497 = vadd.f32 %v2272, %v2343
        %v2498 = vadd.f32 %v2273, %v2345
        %v2499 = vadd.f32 %v2274, %v2347
        %v2500 = vadd.f32 %v2275, %v2350
        %v2501 = vadd.f32 %v2276, %v2352
        %v2502 = vadd.f32 %v2277, %v2354
        %v2503 = vadd.f32 %v2278, %v2357
        %v2504 = vadd.f32 %v2279, %v2359
        %v2505 = vadd.f32 %v2280, %v2361
        %v2506 = vadd.f32 %v2281, %v2364
        %v2507 = vadd.f32 %v2282, %v2366
        %v2508 = vadd.f32 %v2283, %v2368
        %v2509 = vadd.f32 %v2284, %v2371
        %v2510 = vadd.f32 %v2285, %v2373
        %v2511 = vadd.f32 %v2286, %v2375
        %v2512 = vadd.f32 %v2287, %v2378
        %v2513 = vadd.f32 %v2288, %v2380
        %v2514 = vadd.f32 %v2289, %v2382
        %v2515 = vadd.f32 %v2290, %v2385
        %v2516 = vadd.f32 %v2291, %v2387
        %v2517 = vadd.f32 %v2292, %v2389
        %v2518 = vadd.f32 %v2293, %v2392
        %v2519 = vadd.f32 %v2294, %v2394
        %v2520 = vadd.f32 %v2295, %v2396
        %v2521 = vadd.f32 %v2296, %v2399
        %v2522 = vadd.f32 %v2297, %v2401
        %v2523 = vadd.f32 %v2298, %v2403
        %v2524 = vadd.f32 %v2299, %v2406
        %v2525 = vadd.f32 %v2300, %v2408
        %v2526 = vadd.f32 %v2301, %v2410
        %v2527 = vadd.f32 %v2302, %v2413
        %v2528 = vadd.f32 %v2303, %v2415
        %v2529 = vadd.f32 %v2304, %v2417
        %v2530 = vadd.f32 %v2305, %v2420
        %v2531 = vadd.f32 %v2306, %v2422
        %v2532 = vadd.f32 %v2307, %v2424
        %v2533 = vadd.f32 %v2308, %v2427
        %v2534 = vadd.f32 %v2309, %v2429
        %v2535 = vadd.f32 %v2310, %v2431
        %v2536 = vadd.f32 %v2311, %v2434
        %v2537 = vadd.f32 %v2312, %v2436
        %v2538 = vadd.f32 %v2313, %v2438
        %v2539 = vadd.f32 %v2314, %v2441
        %v2540 = vadd.f32 %v2315, %v2443
        %v2541 = vadd.f32 %v2316, %v2445
        %vm2542 = vcmask 1043456
        %v2543 = vrot.slane %v1851, 4
        %v2544 = vrot.slane %v1852, 4
        %v2545 = vsel %vm2542, %v2543, %v2544
        %v2546 = vrot.slane %v1853, 4
        %v2547 = vsel %vm2542, %v2544, %v2546
        %v2548 = vrot.slane %v1854, 4
        %v2549 = vsel %vm2542, %v2546, %v2548
        %v2550 = vrot.slane %v1855, 4
        %v2551 = vrot.slane %v1856, 4
        %v2552 = vsel %vm2542, %v2550, %v2551
        %v2553 = vrot.slane %v1857, 4
        %v2554 = vsel %vm2542, %v2551, %v2553
        %v2555 = vrot.slane %v1858, 4
        %v2556 = vsel %vm2542, %v2553, %v2555
        %v2557 = vrot.slane %v1859, 4
        %v2558 = vrot.slane %v1860, 4
        %v2559 = vsel %vm2542, %v2557, %v2558
        %v2560 = vrot.slane %v1861, 4
        %v2561 = vsel %vm2542, %v2558, %v2560
        %v2562 = vrot.slane %v1862, 4
        %v2563 = vsel %vm2542, %v2560, %v2562
        %v2564 = vrot.slane %v1863, 4
        %v2565 = vrot.slane %v1864, 4
        %v2566 = vsel %vm2542, %v2564, %v2565
        %v2567 = vrot.slane %v1865, 4
        %v2568 = vsel %vm2542, %v2565, %v2567
        %v2569 = vrot.slane %v1866, 4
        %v2570 = vsel %vm2542, %v2567, %v2569
        %v2571 = vrot.slane %v1867, 4
        %v2572 = vrot.slane %v1868, 4
        %v2573 = vsel %vm2542, %v2571, %v2572
        %v2574 = vrot.slane %v1869, 4
        %v2575 = vsel %vm2542, %v2572, %v2574
        %v2576 = vrot.slane %v1870, 4
        %v2577 = vsel %vm2542, %v2574, %v2576
        %v2578 = vrot.slane %v1871, 4
        %v2579 = vrot.slane %v1872, 4
        %v2580 = vsel %vm2542, %v2578, %v2579
        %v2581 = vrot.slane %v1873, 4
        %v2582 = vsel %vm2542, %v2579, %v2581
        %v2583 = vrot.slane %v1874, 4
        %v2584 = vsel %vm2542, %v2581, %v2583
        %v2585 = vrot.slane %v1875, 4
        %v2586 = vrot.slane %v1876, 4
        %v2587 = vsel %vm2542, %v2585, %v2586
        %v2588 = vrot.slane %v1877, 4
        %v2589 = vsel %vm2542, %v2586, %v2588
        %v2590 = vrot.slane %v1878, 4
        %v2591 = vsel %vm2542, %v2588, %v2590
        %v2592 = vrot.slane %v1879, 4
        %v2593 = vrot.slane %v1880, 4
        %v2594 = vsel %vm2542, %v2592, %v2593
        %v2595 = vrot.slane %v1881, 4
        %v2596 = vsel %vm2542, %v2593, %v2595
        %v2597 = vrot.slane %v1882, 4
        %v2598 = vsel %vm2542, %v2595, %v2597
        %v2599 = vrot.slane %v1883, 4
        %v2600 = vrot.slane %v1884, 4
        %v2601 = vsel %vm2542, %v2599, %v2600
        %v2602 = vrot.slane %v1885, 4
        %v2603 = vsel %vm2542, %v2600, %v2602
        %v2604 = vrot.slane %v1886, 4
        %v2605 = vsel %vm2542, %v2602, %v2604
        %v2606 = vrot.slane %v1887, 4
        %v2607 = vrot.slane %v1888, 4
        %v2608 = vsel %vm2542, %v2606, %v2607
        %v2609 = vrot.slane %v1889, 4
        %v2610 = vsel %vm2542, %v2607, %v2609
        %v2611 = vrot.slane %v1890, 4
        %v2612 = vsel %vm2542, %v2609, %v2611
        %v2613 = vrot.slane %v1891, 4
        %v2614 = vrot.slane %v1892, 4
        %v2615 = vsel %vm2542, %v2613, %v2614
        %v2616 = vrot.slane %v1893, 4
        %v2617 = vsel %vm2542, %v2614, %v2616
        %v2618 = vrot.slane %v1894, 4
        %v2619 = vsel %vm2542, %v2616, %v2618
        %v2620 = vrot.slane %v1895, 4
        %v2621 = vrot.slane %v1896, 4
        %v2622 = vsel %vm2542, %v2620, %v2621
        %v2623 = vrot.slane %v1897, 4
        %v2624 = vsel %vm2542, %v2621, %v2623
        %v2625 = vrot.slane %v1898, 4
        %v2626 = vsel %vm2542, %v2623, %v2625
        %v2627 = vrot.slane %v1899, 4
        %v2628 = vrot.slane %v1900, 4
        %v2629 = vsel %vm2542, %v2627, %v2628
        %v2630 = vrot.slane %v1901, 4
        %v2631 = vsel %vm2542, %v2628, %v2630
        %v2632 = vrot.slane %v1902, 4
        %v2633 = vsel %vm2542, %v2630, %v2632
        %v2634 = vrot.slane %v1903, 4
        %v2635 = vrot.slane %v1904, 4
        %v2636 = vsel %vm2542, %v2634, %v2635
        %v2637 = vrot.slane %v1905, 4
        %v2638 = vsel %vm2542, %v2635, %v2637
        %v2639 = vrot.slane %v1906, 4
        %v2640 = vsel %vm2542, %v2637, %v2639
        %v2641 = vrot.slane %v1907, 4
        %v2642 = vrot.slane %v1908, 4
        %v2643 = vsel %vm2542, %v2641, %v2642
        %v2644 = vrot.slane %v1909, 4
        %v2645 = vsel %vm2542, %v2642, %v2644
        %v2646 = vrot.slane %v1910, 4
        %v2647 = vsel %vm2542, %v2644, %v2646
        %v2648 = vrot.slane %v1911, 4
        %v2649 = vrot.slane %v1912, 4
        %v2650 = vsel %vm2542, %v2648, %v2649
        %v2651 = vrot.slane %v1913, 4
        %v2652 = vsel %vm2542, %v2649, %v2651
        %v2653 = vrot.slane %v1914, 4
        %v2654 = vsel %vm2542, %v2651, %v2653
        %v2703 = vadd.f32 %v2494, %v2545
        %v2704 = vadd.f32 %v2495, %v2547
        %v2705 = vadd.f32 %v2496, %v2549
        %v2706 = vadd.f32 %v2497, %v2552
        %v2707 = vadd.f32 %v2498, %v2554
        %v2708 = vadd.f32 %v2499, %v2556
        %v2709 = vadd.f32 %v2500, %v2559
        %v2710 = vadd.f32 %v2501, %v2561
        %v2711 = vadd.f32 %v2502, %v2563
        %v2712 = vadd.f32 %v2503, %v2566
        %v2713 = vadd.f32 %v2504, %v2568
        %v2714 = vadd.f32 %v2505, %v2570
        %v2715 = vadd.f32 %v2506, %v2573
        %v2716 = vadd.f32 %v2507, %v2575
        %v2717 = vadd.f32 %v2508, %v2577
        %v2718 = vadd.f32 %v2509, %v2580
        %v2719 = vadd.f32 %v2510, %v2582
        %v2720 = vadd.f32 %v2511, %v2584
        %v2721 = vadd.f32 %v2512, %v2587
        %v2722 = vadd.f32 %v2513, %v2589
        %v2723 = vadd.f32 %v2514, %v2591
        %v2724 = vadd.f32 %v2515, %v2594
        %v2725 = vadd.f32 %v2516, %v2596
        %v2726 = vadd.f32 %v2517, %v2598
        %v2727 = vadd.f32 %v2518, %v2601
        %v2728 = vadd.f32 %v2519, %v2603
        %v2729 = vadd.f32 %v2520, %v2605
        %v2730 = vadd.f32 %v2521, %v2608
        %v2731 = vadd.f32 %v2522, %v2610
        %v2732 = vadd.f32 %v2523, %v2612
        %v2733 = vadd.f32 %v2524, %v2615
        %v2734 = vadd.f32 %v2525, %v2617
        %v2735 = vadd.f32 %v2526, %v2619
        %v2736 = vadd.f32 %v2527, %v2622
        %v2737 = vadd.f32 %v2528, %v2624
        %v2738 = vadd.f32 %v2529, %v2626
        %v2739 = vadd.f32 %v2530, %v2629
        %v2740 = vadd.f32 %v2531, %v2631
        %v2741 = vadd.f32 %v2532, %v2633
        %v2742 = vadd.f32 %v2533, %v2636
        %v2743 = vadd.f32 %v2534, %v2638
        %v2744 = vadd.f32 %v2535, %v2640
        %v2745 = vadd.f32 %v2536, %v2643
        %v2746 = vadd.f32 %v2537, %v2645
        %v2747 = vadd.f32 %v2538, %v2647
        %v2748 = vadd.f32 %v2539, %v2650
        %v2749 = vadd.f32 %v2540, %v2652
        %v2750 = vadd.f32 %v2541, %v2654
        %vm2751 = vcmask 1042432
        %v2752 = vrot.slane %v1851, 5
        %v2753 = vrot.slane %v1852, 5
        %v2754 = vsel %vm2751, %v2752, %v2753
        %v2755 = vrot.slane %v1853, 5
        %v2756 = vsel %vm2751, %v2753, %v2755
        %v2757 = vrot.slane %v1854, 5
        %v2758 = vsel %vm2751, %v2755, %v2757
        %v2759 = vrot.slane %v1855, 5
        %v2760 = vrot.slane %v1856, 5
        %v2761 = vsel %vm2751, %v2759, %v2760
        %v2762 = vrot.slane %v1857, 5
        %v2763 = vsel %vm2751, %v2760, %v2762
        %v2764 = vrot.slane %v1858, 5
        %v2765 = vsel %vm2751, %v2762, %v2764
        %v2766 = vrot.slane %v1859, 5
        %v2767 = vrot.slane %v1860, 5
        %v2768 = vsel %vm2751, %v2766, %v2767
        %v2769 = vrot.slane %v1861, 5
        %v2770 = vsel %vm2751, %v2767, %v2769
        %v2771 = vrot.slane %v1862, 5
        %v2772 = vsel %vm2751, %v2769, %v2771
        %v2773 = vrot.slane %v1863, 5
        %v2774 = vrot.slane %v1864, 5
        %v2775 = vsel %vm2751, %v2773, %v2774
        %v2776 = vrot.slane %v1865, 5
        %v2777 = vsel %vm2751, %v2774, %v2776
        %v2778 = vrot.slane %v1866, 5
        %v2779 = vsel %vm2751, %v2776, %v2778
        %v2780 = vrot.slane %v1867, 5
        %v2781 = vrot.slane %v1868, 5
        %v2782 = vsel %vm2751, %v2780, %v2781
        %v2783 = vrot.slane %v1869, 5
        %v2784 = vsel %vm2751, %v2781, %v2783
        %v2785 = vrot.slane %v1870, 5
        %v2786 = vsel %vm2751, %v2783, %v2785
        %v2787 = vrot.slane %v1871, 5
        %v2788 = vrot.slane %v1872, 5
        %v2789 = vsel %vm2751, %v2787, %v2788
        %v2790 = vrot.slane %v1873, 5
        %v2791 = vsel %vm2751, %v2788, %v2790
        %v2792 = vrot.slane %v1874, 5
        %v2793 = vsel %vm2751, %v2790, %v2792
        %v2794 = vrot.slane %v1875, 5
        %v2795 = vrot.slane %v1876, 5
        %v2796 = vsel %vm2751, %v2794, %v2795
        %v2797 = vrot.slane %v1877, 5
        %v2798 = vsel %vm2751, %v2795, %v2797
        %v2799 = vrot.slane %v1878, 5
        %v2800 = vsel %vm2751, %v2797, %v2799
        %v2801 = vrot.slane %v1879, 5
        %v2802 = vrot.slane %v1880, 5
        %v2803 = vsel %vm2751, %v2801, %v2802
        %v2804 = vrot.slane %v1881, 5
        %v2805 = vsel %vm2751, %v2802, %v2804
        %v2806 = vrot.slane %v1882, 5
        %v2807 = vsel %vm2751, %v2804, %v2806
        %v2808 = vrot.slane %v1883, 5
        %v2809 = vrot.slane %v1884, 5
        %v2810 = vsel %vm2751, %v2808, %v2809
        %v2811 = vrot.slane %v1885, 5
        %v2812 = vsel %vm2751, %v2809, %v2811
        %v2813 = vrot.slane %v1886, 5
        %v2814 = vsel %vm2751, %v2811, %v2813
        %v2815 = vrot.slane %v1887, 5
        %v2816 = vrot.slane %v1888, 5
        %v2817 = vsel %vm2751, %v2815, %v2816
        %v2818 = vrot.slane %v1889, 5
        %v2819 = vsel %vm2751, %v2816, %v2818
        %v2820 = vrot.slane %v1890, 5
        %v2821 = vsel %vm2751, %v2818, %v2820
        %v2822 = vrot.slane %v1891, 5
        %v2823 = vrot.slane %v1892, 5
        %v2824 = vsel %vm2751, %v2822, %v2823
        %v2825 = vrot.slane %v1893, 5
        %v2826 = vsel %vm2751, %v2823, %v2825
        %v2827 = vrot.slane %v1894, 5
        %v2828 = vsel %vm2751, %v2825, %v2827
        %v2829 = vrot.slane %v1895, 5
        %v2830 = vrot.slane %v1896, 5
        %v2831 = vsel %vm2751, %v2829, %v2830
        %v2832 = vrot.slane %v1897, 5
        %v2833 = vsel %vm2751, %v2830, %v2832
        %v2834 = vrot.slane %v1898, 5
        %v2835 = vsel %vm2751, %v2832, %v2834
        %v2836 = vrot.slane %v1899, 5
        %v2837 = vrot.slane %v1900, 5
        %v2838 = vsel %vm2751, %v2836, %v2837
        %v2839 = vrot.slane %v1901, 5
        %v2840 = vsel %vm2751, %v2837, %v2839
        %v2841 = vrot.slane %v1902, 5
        %v2842 = vsel %vm2751, %v2839, %v2841
        %v2843 = vrot.slane %v1903, 5
        %v2844 = vrot.slane %v1904, 5
        %v2845 = vsel %vm2751, %v2843, %v2844
        %v2846 = vrot.slane %v1905, 5
        %v2847 = vsel %vm2751, %v2844, %v2846
        %v2848 = vrot.slane %v1906, 5
        %v2849 = vsel %vm2751, %v2846, %v2848
        %v2850 = vrot.slane %v1907, 5
        %v2851 = vrot.slane %v1908, 5
        %v2852 = vsel %vm2751, %v2850, %v2851
        %v2853 = vrot.slane %v1909, 5
        %v2854 = vsel %vm2751, %v2851, %v2853
        %v2855 = vrot.slane %v1910, 5
        %v2856 = vsel %vm2751, %v2853, %v2855
        %v2857 = vrot.slane %v1911, 5
        %v2858 = vrot.slane %v1912, 5
        %v2859 = vsel %vm2751, %v2857, %v2858
        %v2860 = vrot.slane %v1913, 5
        %v2861 = vsel %vm2751, %v2858, %v2860
        %v2862 = vrot.slane %v1914, 5
        %v2863 = vsel %vm2751, %v2860, %v2862
        %v2912 = vadd.f32 %v2703, %v2754
        %v2913 = vadd.f32 %v2704, %v2756
        %v2914 = vadd.f32 %v2705, %v2758
        %v2915 = vadd.f32 %v2706, %v2761
        %v2916 = vadd.f32 %v2707, %v2763
        %v2917 = vadd.f32 %v2708, %v2765
        %v2918 = vadd.f32 %v2709, %v2768
        %v2919 = vadd.f32 %v2710, %v2770
        %v2920 = vadd.f32 %v2711, %v2772
        %v2921 = vadd.f32 %v2712, %v2775
        %v2922 = vadd.f32 %v2713, %v2777
        %v2923 = vadd.f32 %v2714, %v2779
        %v2924 = vadd.f32 %v2715, %v2782
        %v2925 = vadd.f32 %v2716, %v2784
        %v2926 = vadd.f32 %v2717, %v2786
        %v2927 = vadd.f32 %v2718, %v2789
        %v2928 = vadd.f32 %v2719, %v2791
        %v2929 = vadd.f32 %v2720, %v2793
        %v2930 = vadd.f32 %v2721, %v2796
        %v2931 = vadd.f32 %v2722, %v2798
        %v2932 = vadd.f32 %v2723, %v2800
        %v2933 = vadd.f32 %v2724, %v2803
        %v2934 = vadd.f32 %v2725, %v2805
        %v2935 = vadd.f32 %v2726, %v2807
        %v2936 = vadd.f32 %v2727, %v2810
        %v2937 = vadd.f32 %v2728, %v2812
        %v2938 = vadd.f32 %v2729, %v2814
        %v2939 = vadd.f32 %v2730, %v2817
        %v2940 = vadd.f32 %v2731, %v2819
        %v2941 = vadd.f32 %v2732, %v2821
        %v2942 = vadd.f32 %v2733, %v2824
        %v2943 = vadd.f32 %v2734, %v2826
        %v2944 = vadd.f32 %v2735, %v2828
        %v2945 = vadd.f32 %v2736, %v2831
        %v2946 = vadd.f32 %v2737, %v2833
        %v2947 = vadd.f32 %v2738, %v2835
        %v2948 = vadd.f32 %v2739, %v2838
        %v2949 = vadd.f32 %v2740, %v2840
        %v2950 = vadd.f32 %v2741, %v2842
        %v2951 = vadd.f32 %v2742, %v2845
        %v2952 = vadd.f32 %v2743, %v2847
        %v2953 = vadd.f32 %v2744, %v2849
        %v2954 = vadd.f32 %v2745, %v2852
        %v2955 = vadd.f32 %v2746, %v2854
        %v2956 = vadd.f32 %v2747, %v2856
        %v2957 = vadd.f32 %v2748, %v2859
        %v2958 = vadd.f32 %v2749, %v2861
        %v2959 = vadd.f32 %v2750, %v2863
        %vm2960 = vcmask 1041408
        %v2961 = vrot.slane %v1851, 6
        %v2962 = vrot.slane %v1852, 6
        %v2963 = vsel %vm2960, %v2961, %v2962
        %v2964 = vrot.slane %v1853, 6
        %v2965 = vsel %vm2960, %v2962, %v2964
        %v2966 = vrot.slane %v1854, 6
        %v2967 = vsel %vm2960, %v2964, %v2966
        %v2968 = vrot.slane %v1855, 6
        %v2969 = vrot.slane %v1856, 6
        %v2970 = vsel %vm2960, %v2968, %v2969
        %v2971 = vrot.slane %v1857, 6
        %v2972 = vsel %vm2960, %v2969, %v2971
        %v2973 = vrot.slane %v1858, 6
        %v2974 = vsel %vm2960, %v2971, %v2973
        %v2975 = vrot.slane %v1859, 6
        %v2976 = vrot.slane %v1860, 6
        %v2977 = vsel %vm2960, %v2975, %v2976
        %v2978 = vrot.slane %v1861, 6
        %v2979 = vsel %vm2960, %v2976, %v2978
        %v2980 = vrot.slane %v1862, 6
        %v2981 = vsel %vm2960, %v2978, %v2980
        %v2982 = vrot.slane %v1863, 6
        %v2983 = vrot.slane %v1864, 6
        %v2984 = vsel %vm2960, %v2982, %v2983
        %v2985 = vrot.slane %v1865, 6
        %v2986 = vsel %vm2960, %v2983, %v2985
        %v2987 = vrot.slane %v1866, 6
        %v2988 = vsel %vm2960, %v2985, %v2987
        %v2989 = vrot.slane %v1867, 6
        %v2990 = vrot.slane %v1868, 6
        %v2991 = vsel %vm2960, %v2989, %v2990
        %v2992 = vrot.slane %v1869, 6
        %v2993 = vsel %vm2960, %v2990, %v2992
        %v2994 = vrot.slane %v1870, 6
        %v2995 = vsel %vm2960, %v2992, %v2994
        %v2996 = vrot.slane %v1871, 6
        %v2997 = vrot.slane %v1872, 6
        %v2998 = vsel %vm2960, %v2996, %v2997
        %v2999 = vrot.slane %v1873, 6
        %v3000 = vsel %vm2960, %v2997, %v2999
        %v3001 = vrot.slane %v1874, 6
        %v3002 = vsel %vm2960, %v2999, %v3001
        %v3003 = vrot.slane %v1875, 6
        %v3004 = vrot.slane %v1876, 6
        %v3005 = vsel %vm2960, %v3003, %v3004
        %v3006 = vrot.slane %v1877, 6
        %v3007 = vsel %vm2960, %v3004, %v3006
        %v3008 = vrot.slane %v1878, 6
        %v3009 = vsel %vm2960, %v3006, %v3008
        %v3010 = vrot.slane %v1879, 6
        %v3011 = vrot.slane %v1880, 6
        %v3012 = vsel %vm2960, %v3010, %v3011
        %v3013 = vrot.slane %v1881, 6
        %v3014 = vsel %vm2960, %v3011, %v3013
        %v3015 = vrot.slane %v1882, 6
        %v3016 = vsel %vm2960, %v3013, %v3015
        %v3017 = vrot.slane %v1883, 6
        %v3018 = vrot.slane %v1884, 6
        %v3019 = vsel %vm2960, %v3017, %v3018
        %v3020 = vrot.slane %v1885, 6
        %v3021 = vsel %vm2960, %v3018, %v3020
        %v3022 = vrot.slane %v1886, 6
        %v3023 = vsel %vm2960, %v3020, %v3022
        %v3024 = vrot.slane %v1887, 6
        %v3025 = vrot.slane %v1888, 6
        %v3026 = vsel %vm2960, %v3024, %v3025
        %v3027 = vrot.slane %v1889, 6
        %v3028 = vsel %vm2960, %v3025, %v3027
        %v3029 = vrot.slane %v1890, 6
        %v3030 = vsel %vm2960, %v3027, %v3029
        %v3031 = vrot.slane %v1891, 6
        %v3032 = vrot.slane %v1892, 6
        %v3033 = vsel %vm2960, %v3031, %v3032
        %v3034 = vrot.slane %v1893, 6
        %v3035 = vsel %vm2960, %v3032, %v3034
        %v3036 = vrot.slane %v1894, 6
        %v3037 = vsel %vm2960, %v3034, %v3036
        %v3038 = vrot.slane %v1895, 6
        %v3039 = vrot.slane %v1896, 6
        %v3040 = vsel %vm2960, %v3038, %v3039
        %v3041 = vrot.slane %v1897, 6
        %v3042 = vsel %vm2960, %v3039, %v3041
        %v3043 = vrot.slane %v1898, 6
        %v3044 = vsel %vm2960, %v3041, %v3043
        %v3045 = vrot.slane %v1899, 6
        %v3046 = vrot.slane %v1900, 6
        %v3047 = vsel %vm2960, %v3045, %v3046
        %v3048 = vrot.slane %v1901, 6
        %v3049 = vsel %vm2960, %v3046, %v3048
        %v3050 = vrot.slane %v1902, 6
        %v3051 = vsel %vm2960, %v3048, %v3050
        %v3052 = vrot.slane %v1903, 6
        %v3053 = vrot.slane %v1904, 6
        %v3054 = vsel %vm2960, %v3052, %v3053
        %v3055 = vrot.slane %v1905, 6
        %v3056 = vsel %vm2960, %v3053, %v3055
        %v3057 = vrot.slane %v1906, 6
        %v3058 = vsel %vm2960, %v3055, %v3057
        %v3059 = vrot.slane %v1907, 6
        %v3060 = vrot.slane %v1908, 6
        %v3061 = vsel %vm2960, %v3059, %v3060
        %v3062 = vrot.slane %v1909, 6
        %v3063 = vsel %vm2960, %v3060, %v3062
        %v3064 = vrot.slane %v1910, 6
        %v3065 = vsel %vm2960, %v3062, %v3064
        %v3066 = vrot.slane %v1911, 6
        %v3067 = vrot.slane %v1912, 6
        %v3068 = vsel %vm2960, %v3066, %v3067
        %v3069 = vrot.slane %v1913, 6
        %v3070 = vsel %vm2960, %v3067, %v3069
        %v3071 = vrot.slane %v1914, 6
        %v3072 = vsel %vm2960, %v3069, %v3071
        %v3121 = vadd.f32 %v2912, %v2963
        %v3122 = vadd.f32 %v2913, %v2965
        %v3123 = vadd.f32 %v2914, %v2967
        %v3124 = vadd.f32 %v2915, %v2970
        %v3125 = vadd.f32 %v2916, %v2972
        %v3126 = vadd.f32 %v2917, %v2974
        %v3127 = vadd.f32 %v2918, %v2977
        %v3128 = vadd.f32 %v2919, %v2979
        %v3129 = vadd.f32 %v2920, %v2981
        %v3130 = vadd.f32 %v2921, %v2984
        %v3131 = vadd.f32 %v2922, %v2986
        %v3132 = vadd.f32 %v2923, %v2988
        %v3133 = vadd.f32 %v2924, %v2991
        %v3134 = vadd.f32 %v2925, %v2993
        %v3135 = vadd.f32 %v2926, %v2995
        %v3136 = vadd.f32 %v2927, %v2998
        %v3137 = vadd.f32 %v2928, %v3000
        %v3138 = vadd.f32 %v2929, %v3002
        %v3139 = vadd.f32 %v2930, %v3005
        %v3140 = vadd.f32 %v2931, %v3007
        %v3141 = vadd.f32 %v2932, %v3009
        %v3142 = vadd.f32 %v2933, %v3012
        %v3143 = vadd.f32 %v2934, %v3014
        %v3144 = vadd.f32 %v2935, %v3016
        %v3145 = vadd.f32 %v2936, %v3019
        %v3146 = vadd.f32 %v2937, %v3021
        %v3147 = vadd.f32 %v2938, %v3023
        %v3148 = vadd.f32 %v2939, %v3026
        %v3149 = vadd.f32 %v2940, %v3028
        %v3150 = vadd.f32 %v2941, %v3030
        %v3151 = vadd.f32 %v2942, %v3033
        %v3152 = vadd.f32 %v2943, %v3035
        %v3153 = vadd.f32 %v2944, %v3037
        %v3154 = vadd.f32 %v2945, %v3040
        %v3155 = vadd.f32 %v2946, %v3042
        %v3156 = vadd.f32 %v2947, %v3044
        %v3157 = vadd.f32 %v2948, %v3047
        %v3158 = vadd.f32 %v2949, %v3049
        %v3159 = vadd.f32 %v2950, %v3051
        %v3160 = vadd.f32 %v2951, %v3054
        %v3161 = vadd.f32 %v2952, %v3056
        %v3162 = vadd.f32 %v2953, %v3058
        %v3163 = vadd.f32 %v2954, %v3061
        %v3164 = vadd.f32 %v2955, %v3063
        %v3165 = vadd.f32 %v2956, %v3065
        %v3166 = vadd.f32 %v2957, %v3068
        %v3167 = vadd.f32 %v2958, %v3070
        %v3168 = vadd.f32 %v2959, %v3072
        %v3169 = vmul.f32 %v3121, %v275
        %v3170 = vmul.f32 %v3122, %v276
        %v3171 = vmul.f32 %v3123, %v277
        %v3172 = vmul.f32 %v3124, %v275
        %v3173 = vmul.f32 %v3125, %v276
        %v3174 = vmul.f32 %v3126, %v277
        %v3175 = vmul.f32 %v3127, %v275
        %v3176 = vmul.f32 %v3128, %v276
        %v3177 = vmul.f32 %v3129, %v277
        %v3178 = vmul.f32 %v3130, %v275
        %v3179 = vmul.f32 %v3131, %v276
        %v3180 = vmul.f32 %v3132, %v277
        %v3181 = vmul.f32 %v3133, %v275
        %v3182 = vmul.f32 %v3134, %v276
        %v3183 = vmul.f32 %v3135, %v277
        %v3184 = vmul.f32 %v3136, %v275
        %v3185 = vmul.f32 %v3137, %v276
        %v3186 = vmul.f32 %v3138, %v277
        %v3187 = vmul.f32 %v3139, %v275
        %v3188 = vmul.f32 %v3140, %v276
        %v3189 = vmul.f32 %v3141, %v277
        %v3190 = vmul.f32 %v3142, %v275
        %v3191 = vmul.f32 %v3143, %v276
        %v3192 = vmul.f32 %v3144, %v277
        %v3193 = vmul.f32 %v3145, %v275
        %v3194 = vmul.f32 %v3146, %v276
        %v3195 = vmul.f32 %v3147, %v277
        %v3196 = vmul.f32 %v3148, %v275
        %v3197 = vmul.f32 %v3149, %v276
        %v3198 = vmul.f32 %v3150, %v277
        %v3199 = vmul.f32 %v3151, %v275
        %v3200 = vmul.f32 %v3152, %v276
        %v3201 = vmul.f32 %v3153, %v277
        %v3202 = vmul.f32 %v3154, %v275
        %v3203 = vmul.f32 %v3155, %v276
        %v3204 = vmul.f32 %v3156, %v277
        %v3205 = vmul.f32 %v3157, %v275
        %v3206 = vmul.f32 %v3158, %v276
        %v3207 = vmul.f32 %v3159, %v277
        %v3208 = vmul.f32 %v3160, %v275
        %v3209 = vmul.f32 %v3161, %v276
        %v3210 = vmul.f32 %v3162, %v277
        %v3211 = vmul.f32 %v3163, %v275
        %v3212 = vmul.f32 %v3164, %v276
        %v3213 = vmul.f32 %v3165, %v277
        %v3214 = vmul.f32 %v3166, %v275
        %v3215 = vmul.f32 %v3167, %v276
        %v3216 = vmul.f32 %v3168, %v277
        %v3217 = vmul.f32 %v3169, %v3181
        %v3218 = vmul.f32 %v3170, %v3182
        %v3219 = vmul.f32 %v3171, %v3183
        %v3220 = vmul.f32 %v3172, %v3184
        %v3221 = vmul.f32 %v3173, %v3185
        %v3222 = vmul.f32 %v3174, %v3186
        %v3223 = vmul.f32 %v3175, %v3187
        %v3224 = vmul.f32 %v3176, %v3188
        %v3225 = vmul.f32 %v3177, %v3189
        %v3226 = vmul.f32 %v3178, %v3190
        %v3227 = vmul.f32 %v3179, %v3191
        %v3228 = vmul.f32 %v3180, %v3192
        %v3229 = vsub.f32 %v3193, %v3217
        %v3230 = vsub.f32 %v3194, %v3218
        %v3231 = vsub.f32 %v3195, %v3219
        %v3232 = vsub.f32 %v3196, %v3220
        %v3233 = vsub.f32 %v3197, %v3221
        %v3234 = vsub.f32 %v3198, %v3222
        %v3235 = vsub.f32 %v3199, %v3223
        %v3236 = vsub.f32 %v3200, %v3224
        %v3237 = vsub.f32 %v3201, %v3225
        %v3238 = vsub.f32 %v3202, %v3226
        %v3239 = vsub.f32 %v3203, %v3227
        %v3240 = vsub.f32 %v3204, %v3228
        %v3241 = vmul.f32 %v3169, %v3169
        %v3242 = vmul.f32 %v3170, %v3170
        %v3243 = vmul.f32 %v3171, %v3171
        %v3244 = vmul.f32 %v3172, %v3172
        %v3245 = vmul.f32 %v3173, %v3173
        %v3246 = vmul.f32 %v3174, %v3174
        %v3247 = vmul.f32 %v3175, %v3175
        %v3248 = vmul.f32 %v3176, %v3176
        %v3249 = vmul.f32 %v3177, %v3177
        %v3250 = vmul.f32 %v3178, %v3178
        %v3251 = vmul.f32 %v3179, %v3179
        %v3252 = vmul.f32 %v3180, %v3180
        %v3253 = vsub.f32 %v3205, %v3241
        %v3254 = vsub.f32 %v3206, %v3242
        %v3255 = vsub.f32 %v3207, %v3243
        %v3256 = vsub.f32 %v3208, %v3244
        %v3257 = vsub.f32 %v3209, %v3245
        %v3258 = vsub.f32 %v3210, %v3246
        %v3259 = vsub.f32 %v3211, %v3247
        %v3260 = vsub.f32 %v3212, %v3248
        %v3261 = vsub.f32 %v3213, %v3249
        %v3262 = vsub.f32 %v3214, %v3250
        %v3263 = vsub.f32 %v3215, %v3251
        %v3264 = vsub.f32 %v3216, %v3252
        %v3265 = vadd.f32 %v3253, 1e-08
        %v3266 = vadd.f32 %v3254, 1e-08
        %v3267 = vadd.f32 %v3255, 1e-08
        %v3268 = vadd.f32 %v3256, 1e-08
        %v3269 = vadd.f32 %v3257, 1e-08
        %v3270 = vadd.f32 %v3258, 1e-08
        %v3271 = vadd.f32 %v3259, 1e-08
        %v3272 = vadd.f32 %v3260, 1e-08
        %v3273 = vadd.f32 %v3261, 1e-08
        %v3274 = vadd.f32 %v3262, 1e-08
        %v3275 = vadd.f32 %v3263, 1e-08
        %v3276 = vadd.f32 %v3264, 1e-08
        %v3277 = vrcp.pop %v3265
        %v3278 = vmul.f32 %v3229, %v3277
        %v3279 = vrcp.pop %v3266
        %v3280 = vmul.f32 %v3230, %v3279
        %v3281 = vrcp.pop %v3267
        %v3282 = vmul.f32 %v3231, %v3281
        %v3283 = vrcp.pop %v3268
        %v3284 = vmul.f32 %v3232, %v3283
        %v3285 = vrcp.pop %v3269
        %v3286 = vmul.f32 %v3233, %v3285
        %v3287 = vrcp.pop %v3270
        %v3288 = vmul.f32 %v3234, %v3287
        %v3289 = vrcp.pop %v3271
        %v3290 = vmul.f32 %v3235, %v3289
        %v3291 = vrcp.pop %v3272
        %v3292 = vmul.f32 %v3236, %v3291
        %v3293 = vrcp.pop %v3273
        %v3294 = vmul.f32 %v3237, %v3293
        %v3295 = vrcp.pop %v3274
        %v3296 = vmul.f32 %v3238, %v3295
        %v3297 = vrcp.pop %v3275
        %v3298 = vmul.f32 %v3239, %v3297
        %v3299 = vrcp.pop %v3276
        %v3300 = vmul.f32 %v3240, %v3299
        %v3301 = vmul.f32 %v3278, %v3169
        %v3302 = vmul.f32 %v3280, %v3170
        %v3303 = vmul.f32 %v3282, %v3171
        %v3304 = vmul.f32 %v3284, %v3172
        %v3305 = vmul.f32 %v3286, %v3173
        %v3306 = vmul.f32 %v3288, %v3174
        %v3307 = vmul.f32 %v3290, %v3175
        %v3308 = vmul.f32 %v3292, %v3176
        %v3309 = vmul.f32 %v3294, %v3177
        %v3310 = vmul.f32 %v3296, %v3178
        %v3311 = vmul.f32 %v3298, %v3179
        %v3312 = vmul.f32 %v3300, %v3180
        %v3313 = vsub.f32 %v3181, %v3301
        %v3314 = vsub.f32 %v3182, %v3302
        %v3315 = vsub.f32 %v3183, %v3303
        %v3316 = vsub.f32 %v3184, %v3304
        %v3317 = vsub.f32 %v3185, %v3305
        %v3318 = vsub.f32 %v3186, %v3306
        %v3319 = vsub.f32 %v3187, %v3307
        %v3320 = vsub.f32 %v3188, %v3308
        %v3321 = vsub.f32 %v3189, %v3309
        %v3322 = vsub.f32 %v3190, %v3310
        %v3323 = vsub.f32 %v3191, %v3311
        %v3324 = vsub.f32 %v3192, %v3312
        %vm3325 = vcmp.gt.f32.partialorder %v280, 0.5
        %vm3326 = vcmp.gt.f32.partialorder %v281, 0.5
        %vm3327 = vcmp.gt.f32.partialorder %v282, 0.5
        %v3328 = vsel %vm3325, 1, 0
        %v3329 = vsel %vm3326, 1, 0
        %v3330 = vsel %vm3327, 1, 0
        %vm3331 = vcmp.eq.s32.totalorder %v3328, 1
        %vm3332 = vcmp.eq.s32.totalorder %v3329, 1
        %vm3333 = vcmp.eq.s32.totalorder %v3330, 1
        %v3334 = vsel %vm3331, %v3278, 0.0
        %v3335 = vsel %vm3332, %v3280, 0.0
        %v3336 = vsel %vm3333, %v3282, 0.0
        %v3337 = vsel %vm3331, %v3284, 0.0
        %v3338 = vsel %vm3332, %v3286, 0.0
        %v3339 = vsel %vm3333, %v3288, 0.0
        %v3340 = vsel %vm3331, %v3290, 0.0
        %v3341 = vsel %vm3332, %v3292, 0.0
        %v3342 = vsel %vm3333, %v3294, 0.0
        %v3343 = vsel %vm3331, %v3296, 0.0
        %v3344 = vsel %vm3332, %v3298, 0.0
        %v3345 = vsel %vm3333, %v3300, 0.0
        %v3346 = vsel %vm3331, %v3313, 0.0
        %v3347 = vsel %vm3332, %v3314, 0.0
        %v3348 = vsel %vm3333, %v3315, 0.0
        %v3349 = vsel %vm3331, %v3316, 0.0
        %v3350 = vsel %vm3332, %v3317, 0.0
        %v3351 = vsel %vm3333, %v3318, 0.0
        %v3352 = vsel %vm3331, %v3319, 0.0
        %v3353 = vsel %vm3332, %v3320, 0.0
        %v3354 = vsel %vm3333, %v3321, 0.0
        %v3355 = vsel %vm3331, %v3322, 0.0
        %v3356 = vsel %vm3332, %v3323, 0.0
        %v3357 = vsel %vm3333, %v3324, 0.0
        %3382 = vrot.lane.b32.xlu0 %v3334, 127
        %v3383 = vpop.permute.xlu0 %3382
        %3384 = vrot.lane.b32.xlu0 %v3335, 127
        %v3385 = vpop.permute.xlu0 %3384
        %3386 = vrot.lane.b32.xlu0 %v3336, 127
        %v3387 = vpop.permute.xlu0 %3386
        %3388 = vrot.lane.b32.xlu0 %v3337, 127
        %v3389 = vpop.permute.xlu0 %3388
        %3390 = vrot.lane.b32.xlu0 %v3338, 127
        %v3391 = vpop.permute.xlu0 %3390
        %3392 = vrot.lane.b32.xlu0 %v3339, 127
        %v3393 = vpop.permute.xlu0 %3392
        %3394 = vrot.lane.b32.xlu0 %v3340, 127
        %v3395 = vpop.permute.xlu0 %3394
        %3396 = vrot.lane.b32.xlu0 %v3341, 127
        %v3397 = vpop.permute.xlu0 %3396
        %3398 = vrot.lane.b32.xlu0 %v3342, 127
        %v3399 = vpop.permute.xlu0 %3398
        %3400 = vrot.lane.b32.xlu0 %v3343, 127
        %v3401 = vpop.permute.xlu0 %3400
        %3402 = vrot.lane.b32.xlu0 %v3344, 127
        %v3403 = vpop.permute.xlu0 %3402
        %3404 = vrot.lane.b32.xlu0 %v3345, 127
        %v3405 = vpop.permute.xlu0 %3404
        %3406 = vrot.lane.b32.xlu0 %v3346, 127
        %v3407 = vpop.permute.xlu0 %3406
        %3408 = vrot.lane.b32.xlu0 %v3347, 127
        %v3409 = vpop.permute.xlu0 %3408
        %3410 = vrot.lane.b32.xlu0 %v3348, 127
        %v3411 = vpop.permute.xlu0 %3410
        %3412 = vrot.lane.b32.xlu0 %v3349, 127
        %v3413 = vpop.permute.xlu0 %3412
        %3414 = vrot.lane.b32.xlu0 %v3350, 127
        %v3415 = vpop.permute.xlu0 %3414
        %3416 = vrot.lane.b32.xlu0 %v3351, 127
        %v3417 = vpop.permute.xlu0 %3416
        %3418 = vrot.lane.b32.xlu0 %v3352, 127
        %v3419 = vpop.permute.xlu0 %3418
        %3420 = vrot.lane.b32.xlu0 %v3353, 127
        %v3421 = vpop.permute.xlu0 %3420
        %3422 = vrot.lane.b32.xlu0 %v3354, 127
        %v3423 = vpop.permute.xlu0 %3422
        %3424 = vrot.lane.b32.xlu0 %v3355, 127
        %v3425 = vpop.permute.xlu0 %3424
        %3426 = vrot.lane.b32.xlu0 %v3356, 127
        %v3427 = vpop.permute.xlu0 %3426
        %3428 = vrot.lane.b32.xlu0 %v3357, 127
        %v3429 = vpop.permute.xlu0 %3428
        %v3454 = vadd.f32 %v3334, %v3383
        %v3455 = vadd.f32 %v3335, %v3385
        %v3456 = vadd.f32 %v3336, %v3387
        %v3457 = vadd.f32 %v3337, %v3389
        %v3458 = vadd.f32 %v3338, %v3391
        %v3459 = vadd.f32 %v3339, %v3393
        %v3460 = vadd.f32 %v3340, %v3395
        %v3461 = vadd.f32 %v3341, %v3397
        %v3462 = vadd.f32 %v3342, %v3399
        %v3463 = vadd.f32 %v3343, %v3401
        %v3464 = vadd.f32 %v3344, %v3403
        %v3465 = vadd.f32 %v3345, %v3405
        %v3466 = vadd.f32 %v3346, %v3407
        %v3467 = vadd.f32 %v3347, %v3409
        %v3468 = vadd.f32 %v3348, %v3411
        %v3469 = vadd.f32 %v3349, %v3413
        %v3470 = vadd.f32 %v3350, %v3415
        %v3471 = vadd.f32 %v3351, %v3417
        %v3472 = vadd.f32 %v3352, %v3419
        %v3473 = vadd.f32 %v3353, %v3421
        %v3474 = vadd.f32 %v3354, %v3423
        %v3475 = vadd.f32 %v3355, %v3425
        %v3476 = vadd.f32 %v3356, %v3427
        %v3477 = vadd.f32 %v3357, %v3429
        %3478 = vrot.lane.b32.xlu0 %v3334, 126
        %v3479 = vpop.permute.xlu0 %3478
        %3480 = vrot.lane.b32.xlu0 %v3335, 126
        %v3481 = vpop.permute.xlu0 %3480
        %3482 = vrot.lane.b32.xlu0 %v3336, 126
        %v3483 = vpop.permute.xlu0 %3482
        %3484 = vrot.lane.b32.xlu0 %v3337, 126
        %v3485 = vpop.permute.xlu0 %3484
        %3486 = vrot.lane.b32.xlu0 %v3338, 126
        %v3487 = vpop.permute.xlu0 %3486
        %3488 = vrot.lane.b32.xlu0 %v3339, 126
        %v3489 = vpop.permute.xlu0 %3488
        %3490 = vrot.lane.b32.xlu0 %v3340, 126
        %v3491 = vpop.permute.xlu0 %3490
        %3492 = vrot.lane.b32.xlu0 %v3341, 126
        %v3493 = vpop.permute.xlu0 %3492
        %3494 = vrot.lane.b32.xlu0 %v3342, 126
        %v3495 = vpop.permute.xlu0 %3494
        %3496 = vrot.lane.b32.xlu0 %v3343, 126
        %v3497 = vpop.permute.xlu0 %3496
        %3498 = vrot.lane.b32.xlu0 %v3344, 126
        %v3499 = vpop.permute.xlu0 %3498
        %3500 = vrot.lane.b32.xlu0 %v3345, 126
        %v3501 = vpop.permute.xlu0 %3500
        %3502 = vrot.lane.b32.xlu0 %v3346, 126
        %v3503 = vpop.permute.xlu0 %3502
        %3504 = vrot.lane.b32.xlu0 %v3347, 126
        %v3505 = vpop.permute.xlu0 %3504
        %3506 = vrot.lane.b32.xlu0 %v3348, 126
        %v3507 = vpop.permute.xlu0 %3506
        %3508 = vrot.lane.b32.xlu0 %v3349, 126
        %v3509 = vpop.permute.xlu0 %3508
        %3510 = vrot.lane.b32.xlu0 %v3350, 126
        %v3511 = vpop.permute.xlu0 %3510
        %3512 = vrot.lane.b32.xlu0 %v3351, 126
        %v3513 = vpop.permute.xlu0 %3512
        %3514 = vrot.lane.b32.xlu0 %v3352, 126
        %v3515 = vpop.permute.xlu0 %3514
        %3516 = vrot.lane.b32.xlu0 %v3353, 126
        %v3517 = vpop.permute.xlu0 %3516
        %3518 = vrot.lane.b32.xlu0 %v3354, 126
        %v3519 = vpop.permute.xlu0 %3518
        %3520 = vrot.lane.b32.xlu0 %v3355, 126
        %v3521 = vpop.permute.xlu0 %3520
        %3522 = vrot.lane.b32.xlu0 %v3356, 126
        %v3523 = vpop.permute.xlu0 %3522
        %3524 = vrot.lane.b32.xlu0 %v3357, 126
        %v3525 = vpop.permute.xlu0 %3524
        %v3550 = vadd.f32 %v3454, %v3479
        %v3551 = vadd.f32 %v3455, %v3481
        %v3552 = vadd.f32 %v3456, %v3483
        %v3553 = vadd.f32 %v3457, %v3485
        %v3554 = vadd.f32 %v3458, %v3487
        %v3555 = vadd.f32 %v3459, %v3489
        %v3556 = vadd.f32 %v3460, %v3491
        %v3557 = vadd.f32 %v3461, %v3493
        %v3558 = vadd.f32 %v3462, %v3495
        %v3559 = vadd.f32 %v3463, %v3497
        %v3560 = vadd.f32 %v3464, %v3499
        %v3561 = vadd.f32 %v3465, %v3501
        %v3562 = vadd.f32 %v3466, %v3503
        %v3563 = vadd.f32 %v3467, %v3505
        %v3564 = vadd.f32 %v3468, %v3507
        %v3565 = vadd.f32 %v3469, %v3509
        %v3566 = vadd.f32 %v3470, %v3511
        %v3567 = vadd.f32 %v3471, %v3513
        %v3568 = vadd.f32 %v3472, %v3515
        %v3569 = vadd.f32 %v3473, %v3517
        %v3570 = vadd.f32 %v3474, %v3519
        %v3571 = vadd.f32 %v3475, %v3521
        %v3572 = vadd.f32 %v3476, %v3523
        %v3573 = vadd.f32 %v3477, %v3525
        %3574 = vrot.lane.b32.xlu0 %v3334, 125
        %v3575 = vpop.permute.xlu0 %3574
        %3576 = vrot.lane.b32.xlu0 %v3335, 125
        %v3577 = vpop.permute.xlu0 %3576
        %3578 = vrot.lane.b32.xlu0 %v3336, 125
        %v3579 = vpop.permute.xlu0 %3578
        %3580 = vrot.lane.b32.xlu0 %v3337, 125
        %v3581 = vpop.permute.xlu0 %3580
        %3582 = vrot.lane.b32.xlu0 %v3338, 125
        %v3583 = vpop.permute.xlu0 %3582
        %3584 = vrot.lane.b32.xlu0 %v3339, 125
        %v3585 = vpop.permute.xlu0 %3584
        %3586 = vrot.lane.b32.xlu0 %v3340, 125
        %v3587 = vpop.permute.xlu0 %3586
        %3588 = vrot.lane.b32.xlu0 %v3341, 125
        %v3589 = vpop.permute.xlu0 %3588
        %3590 = vrot.lane.b32.xlu0 %v3342, 125
        %v3591 = vpop.permute.xlu0 %3590
        %3592 = vrot.lane.b32.xlu0 %v3343, 125
        %v3593 = vpop.permute.xlu0 %3592
        %3594 = vrot.lane.b32.xlu0 %v3344, 125
        %v3595 = vpop.permute.xlu0 %3594
        %3596 = vrot.lane.b32.xlu0 %v3345, 125
        %v3597 = vpop.permute.xlu0 %3596
        %3598 = vrot.lane.b32.xlu0 %v3346, 125
        %v3599 = vpop.permute.xlu0 %3598
        %3600 = vrot.lane.b32.xlu0 %v3347, 125
        %v3601 = vpop.permute.xlu0 %3600
        %3602 = vrot.lane.b32.xlu0 %v3348, 125
        %v3603 = vpop.permute.xlu0 %3602
        %3604 = vrot.lane.b32.xlu0 %v3349, 125
        %v3605 = vpop.permute.xlu0 %3604
        %3606 = vrot.lane.b32.xlu0 %v3350, 125
        %v3607 = vpop.permute.xlu0 %3606
        %3608 = vrot.lane.b32.xlu0 %v3351, 125
        %v3609 = vpop.permute.xlu0 %3608
        %3610 = vrot.lane.b32.xlu0 %v3352, 125
        %v3611 = vpop.permute.xlu0 %3610
        %3612 = vrot.lane.b32.xlu0 %v3353, 125
        %v3613 = vpop.permute.xlu0 %3612
        %3614 = vrot.lane.b32.xlu0 %v3354, 125
        %v3615 = vpop.permute.xlu0 %3614
        %3616 = vrot.lane.b32.xlu0 %v3355, 125
        %v3617 = vpop.permute.xlu0 %3616
        %3618 = vrot.lane.b32.xlu0 %v3356, 125
        %v3619 = vpop.permute.xlu0 %3618
        %3620 = vrot.lane.b32.xlu0 %v3357, 125
        %v3621 = vpop.permute.xlu0 %3620
        %v3646 = vadd.f32 %v3550, %v3575
        %v3647 = vadd.f32 %v3551, %v3577
        %v3648 = vadd.f32 %v3552, %v3579
        %v3649 = vadd.f32 %v3553, %v3581
        %v3650 = vadd.f32 %v3554, %v3583
        %v3651 = vadd.f32 %v3555, %v3585
        %v3652 = vadd.f32 %v3556, %v3587
        %v3653 = vadd.f32 %v3557, %v3589
        %v3654 = vadd.f32 %v3558, %v3591
        %v3655 = vadd.f32 %v3559, %v3593
        %v3656 = vadd.f32 %v3560, %v3595
        %v3657 = vadd.f32 %v3561, %v3597
        %v3658 = vadd.f32 %v3562, %v3599
        %v3659 = vadd.f32 %v3563, %v3601
        %v3660 = vadd.f32 %v3564, %v3603
        %v3661 = vadd.f32 %v3565, %v3605
        %v3662 = vadd.f32 %v3566, %v3607
        %v3663 = vadd.f32 %v3567, %v3609
        %v3664 = vadd.f32 %v3568, %v3611
        %v3665 = vadd.f32 %v3569, %v3613
        %v3666 = vadd.f32 %v3570, %v3615
        %v3667 = vadd.f32 %v3571, %v3617
        %v3668 = vadd.f32 %v3572, %v3619
        %v3669 = vadd.f32 %v3573, %v3621
        %3670 = vrot.lane.b32.xlu0 %v3334, 124
        %v3671 = vpop.permute.xlu0 %3670
        %3672 = vrot.lane.b32.xlu0 %v3335, 124
        %v3673 = vpop.permute.xlu0 %3672
        %3674 = vrot.lane.b32.xlu0 %v3336, 124
        %v3675 = vpop.permute.xlu0 %3674
        %3676 = vrot.lane.b32.xlu0 %v3337, 124
        %v3677 = vpop.permute.xlu0 %3676
        %3678 = vrot.lane.b32.xlu0 %v3338, 124
        %v3679 = vpop.permute.xlu0 %3678
        %3680 = vrot.lane.b32.xlu0 %v3339, 124
        %v3681 = vpop.permute.xlu0 %3680
        %3682 = vrot.lane.b32.xlu0 %v3340, 124
        %v3683 = vpop.permute.xlu0 %3682
        %3684 = vrot.lane.b32.xlu0 %v3341, 124
        %v3685 = vpop.permute.xlu0 %3684
        %3686 = vrot.lane.b32.xlu0 %v3342, 124
        %v3687 = vpop.permute.xlu0 %3686
        %3688 = vrot.lane.b32.xlu0 %v3343, 124
        %v3689 = vpop.permute.xlu0 %3688
        %3690 = vrot.lane.b32.xlu0 %v3344, 124
        %v3691 = vpop.permute.xlu0 %3690
        %3692 = vrot.lane.b32.xlu0 %v3345, 124
        %v3693 = vpop.permute.xlu0 %3692
        %3694 = vrot.lane.b32.xlu0 %v3346, 124
        %v3695 = vpop.permute.xlu0 %3694
        %3696 = vrot.lane.b32.xlu0 %v3347, 124
        %v3697 = vpop.permute.xlu0 %3696
        %3698 = vrot.lane.b32.xlu0 %v3348, 124
        %v3699 = vpop.permute.xlu0 %3698
        %3700 = vrot.lane.b32.xlu0 %v3349, 124
        %v3701 = vpop.permute.xlu0 %3700
        %3702 = vrot.lane.b32.xlu0 %v3350, 124
        %v3703 = vpop.permute.xlu0 %3702
        %3704 = vrot.lane.b32.xlu0 %v3351, 124
        %v3705 = vpop.permute.xlu0 %3704
        %3706 = vrot.lane.b32.xlu0 %v3352, 124
        %v3707 = vpop.permute.xlu0 %3706
        %3708 = vrot.lane.b32.xlu0 %v3353, 124
        %v3709 = vpop.permute.xlu0 %3708
        %3710 = vrot.lane.b32.xlu0 %v3354, 124
        %v3711 = vpop.permute.xlu0 %3710
        %3712 = vrot.lane.b32.xlu0 %v3355, 124
        %v3713 = vpop.permute.xlu0 %3712
        %3714 = vrot.lane.b32.xlu0 %v3356, 124
        %v3715 = vpop.permute.xlu0 %3714
        %3716 = vrot.lane.b32.xlu0 %v3357, 124
        %v3717 = vpop.permute.xlu0 %3716
        %v3742 = vadd.f32 %v3646, %v3671
        %v3743 = vadd.f32 %v3647, %v3673
        %v3744 = vadd.f32 %v3648, %v3675
        %v3745 = vadd.f32 %v3649, %v3677
        %v3746 = vadd.f32 %v3650, %v3679
        %v3747 = vadd.f32 %v3651, %v3681
        %v3748 = vadd.f32 %v3652, %v3683
        %v3749 = vadd.f32 %v3653, %v3685
        %v3750 = vadd.f32 %v3654, %v3687
        %v3751 = vadd.f32 %v3655, %v3689
        %v3752 = vadd.f32 %v3656, %v3691
        %v3753 = vadd.f32 %v3657, %v3693
        %v3754 = vadd.f32 %v3658, %v3695
        %v3755 = vadd.f32 %v3659, %v3697
        %v3756 = vadd.f32 %v3660, %v3699
        %v3757 = vadd.f32 %v3661, %v3701
        %v3758 = vadd.f32 %v3662, %v3703
        %v3759 = vadd.f32 %v3663, %v3705
        %v3760 = vadd.f32 %v3664, %v3707
        %v3761 = vadd.f32 %v3665, %v3709
        %v3762 = vadd.f32 %v3666, %v3711
        %v3763 = vadd.f32 %v3667, %v3713
        %v3764 = vadd.f32 %v3668, %v3715
        %v3765 = vadd.f32 %v3669, %v3717
        %3766 = vrot.lane.b32.xlu0 %v3334, 123
        %v3767 = vpop.permute.xlu0 %3766
        %3768 = vrot.lane.b32.xlu0 %v3335, 123
        %v3769 = vpop.permute.xlu0 %3768
        %3770 = vrot.lane.b32.xlu0 %v3336, 123
        %v3771 = vpop.permute.xlu0 %3770
        %3772 = vrot.lane.b32.xlu0 %v3337, 123
        %v3773 = vpop.permute.xlu0 %3772
        %3774 = vrot.lane.b32.xlu0 %v3338, 123
        %v3775 = vpop.permute.xlu0 %3774
        %3776 = vrot.lane.b32.xlu0 %v3339, 123
        %v3777 = vpop.permute.xlu0 %3776
        %3778 = vrot.lane.b32.xlu0 %v3340, 123
        %v3779 = vpop.permute.xlu0 %3778
        %3780 = vrot.lane.b32.xlu0 %v3341, 123
        %v3781 = vpop.permute.xlu0 %3780
        %3782 = vrot.lane.b32.xlu0 %v3342, 123
        %v3783 = vpop.permute.xlu0 %3782
        %3784 = vrot.lane.b32.xlu0 %v3343, 123
        %v3785 = vpop.permute.xlu0 %3784
        %3786 = vrot.lane.b32.xlu0 %v3344, 123
        %v3787 = vpop.permute.xlu0 %3786
        %3788 = vrot.lane.b32.xlu0 %v3345, 123
        %v3789 = vpop.permute.xlu0 %3788
        %3790 = vrot.lane.b32.xlu0 %v3346, 123
        %v3791 = vpop.permute.xlu0 %3790
        %3792 = vrot.lane.b32.xlu0 %v3347, 123
        %v3793 = vpop.permute.xlu0 %3792
        %3794 = vrot.lane.b32.xlu0 %v3348, 123
        %v3795 = vpop.permute.xlu0 %3794
        %3796 = vrot.lane.b32.xlu0 %v3349, 123
        %v3797 = vpop.permute.xlu0 %3796
        %3798 = vrot.lane.b32.xlu0 %v3350, 123
        %v3799 = vpop.permute.xlu0 %3798
        %3800 = vrot.lane.b32.xlu0 %v3351, 123
        %v3801 = vpop.permute.xlu0 %3800
        %3802 = vrot.lane.b32.xlu0 %v3352, 123
        %v3803 = vpop.permute.xlu0 %3802
        %3804 = vrot.lane.b32.xlu0 %v3353, 123
        %v3805 = vpop.permute.xlu0 %3804
        %3806 = vrot.lane.b32.xlu0 %v3354, 123
        %v3807 = vpop.permute.xlu0 %3806
        %3808 = vrot.lane.b32.xlu0 %v3355, 123
        %v3809 = vpop.permute.xlu0 %3808
        %3810 = vrot.lane.b32.xlu0 %v3356, 123
        %v3811 = vpop.permute.xlu0 %3810
        %3812 = vrot.lane.b32.xlu0 %v3357, 123
        %v3813 = vpop.permute.xlu0 %3812
        %v3838 = vadd.f32 %v3742, %v3767
        %v3839 = vadd.f32 %v3743, %v3769
        %v3840 = vadd.f32 %v3744, %v3771
        %v3841 = vadd.f32 %v3745, %v3773
        %v3842 = vadd.f32 %v3746, %v3775
        %v3843 = vadd.f32 %v3747, %v3777
        %v3844 = vadd.f32 %v3748, %v3779
        %v3845 = vadd.f32 %v3749, %v3781
        %v3846 = vadd.f32 %v3750, %v3783
        %v3847 = vadd.f32 %v3751, %v3785
        %v3848 = vadd.f32 %v3752, %v3787
        %v3849 = vadd.f32 %v3753, %v3789
        %v3850 = vadd.f32 %v3754, %v3791
        %v3851 = vadd.f32 %v3755, %v3793
        %v3852 = vadd.f32 %v3756, %v3795
        %v3853 = vadd.f32 %v3757, %v3797
        %v3854 = vadd.f32 %v3758, %v3799
        %v3855 = vadd.f32 %v3759, %v3801
        %v3856 = vadd.f32 %v3760, %v3803
        %v3857 = vadd.f32 %v3761, %v3805
        %v3858 = vadd.f32 %v3762, %v3807
        %v3859 = vadd.f32 %v3763, %v3809
        %v3860 = vadd.f32 %v3764, %v3811
        %v3861 = vadd.f32 %v3765, %v3813
        %3862 = vrot.lane.b32.xlu0 %v3334, 122
        %v3863 = vpop.permute.xlu0 %3862
        %3864 = vrot.lane.b32.xlu0 %v3335, 122
        %v3865 = vpop.permute.xlu0 %3864
        %3866 = vrot.lane.b32.xlu0 %v3336, 122
        %v3867 = vpop.permute.xlu0 %3866
        %3868 = vrot.lane.b32.xlu0 %v3337, 122
        %v3869 = vpop.permute.xlu0 %3868
        %3870 = vrot.lane.b32.xlu0 %v3338, 122
        %v3871 = vpop.permute.xlu0 %3870
        %3872 = vrot.lane.b32.xlu0 %v3339, 122
        %v3873 = vpop.permute.xlu0 %3872
        %3874 = vrot.lane.b32.xlu0 %v3340, 122
        %v3875 = vpop.permute.xlu0 %3874
        %3876 = vrot.lane.b32.xlu0 %v3341, 122
        %v3877 = vpop.permute.xlu0 %3876
        %3878 = vrot.lane.b32.xlu0 %v3342, 122
        %v3879 = vpop.permute.xlu0 %3878
        %3880 = vrot.lane.b32.xlu0 %v3343, 122
        %v3881 = vpop.permute.xlu0 %3880
        %3882 = vrot.lane.b32.xlu0 %v3344, 122
        %v3883 = vpop.permute.xlu0 %3882
        %3884 = vrot.lane.b32.xlu0 %v3345, 122
        %v3885 = vpop.permute.xlu0 %3884
        %3886 = vrot.lane.b32.xlu0 %v3346, 122
        %v3887 = vpop.permute.xlu0 %3886
        %3888 = vrot.lane.b32.xlu0 %v3347, 122
        %v3889 = vpop.permute.xlu0 %3888
        %3890 = vrot.lane.b32.xlu0 %v3348, 122
        %v3891 = vpop.permute.xlu0 %3890
        %3892 = vrot.lane.b32.xlu0 %v3349, 122
        %v3893 = vpop.permute.xlu0 %3892
        %3894 = vrot.lane.b32.xlu0 %v3350, 122
        %v3895 = vpop.permute.xlu0 %3894
        %3896 = vrot.lane.b32.xlu0 %v3351, 122
        %v3897 = vpop.permute.xlu0 %3896
        %3898 = vrot.lane.b32.xlu0 %v3352, 122
        %v3899 = vpop.permute.xlu0 %3898
        %3900 = vrot.lane.b32.xlu0 %v3353, 122
        %v3901 = vpop.permute.xlu0 %3900
        %3902 = vrot.lane.b32.xlu0 %v3354, 122
        %v3903 = vpop.permute.xlu0 %3902
        %3904 = vrot.lane.b32.xlu0 %v3355, 122
        %v3905 = vpop.permute.xlu0 %3904
        %3906 = vrot.lane.b32.xlu0 %v3356, 122
        %v3907 = vpop.permute.xlu0 %3906
        %3908 = vrot.lane.b32.xlu0 %v3357, 122
        %v3909 = vpop.permute.xlu0 %3908
        %v3934 = vadd.f32 %v3838, %v3863
        %v3935 = vadd.f32 %v3839, %v3865
        %v3936 = vadd.f32 %v3840, %v3867
        %v3937 = vadd.f32 %v3841, %v3869
        %v3938 = vadd.f32 %v3842, %v3871
        %v3939 = vadd.f32 %v3843, %v3873
        %v3940 = vadd.f32 %v3844, %v3875
        %v3941 = vadd.f32 %v3845, %v3877
        %v3942 = vadd.f32 %v3846, %v3879
        %v3943 = vadd.f32 %v3847, %v3881
        %v3944 = vadd.f32 %v3848, %v3883
        %v3945 = vadd.f32 %v3849, %v3885
        %v3946 = vadd.f32 %v3850, %v3887
        %v3947 = vadd.f32 %v3851, %v3889
        %v3948 = vadd.f32 %v3852, %v3891
        %v3949 = vadd.f32 %v3853, %v3893
        %v3950 = vadd.f32 %v3854, %v3895
        %v3951 = vadd.f32 %v3855, %v3897
        %v3952 = vadd.f32 %v3856, %v3899
        %v3953 = vadd.f32 %v3857, %v3901
        %v3954 = vadd.f32 %v3858, %v3903
        %v3955 = vadd.f32 %v3859, %v3905
        %v3956 = vadd.f32 %v3860, %v3907
        %v3957 = vadd.f32 %v3861, %v3909
        %v3982 = vrot.slane %v3934, 1
        %v3983 = vrot.slane %v3935, 1
        %v3984 = vsel %vm1963, %v3982, %v3983
        %v3985 = vrot.slane %v3936, 1
        %v3986 = vsel %vm1963, %v3983, %v3985
        %v3987 = vrot.slane %v3937, 1
        %v3988 = vrot.slane %v3938, 1
        %v3989 = vsel %vm1963, %v3987, %v3988
        %v3990 = vrot.slane %v3939, 1
        %v3991 = vsel %vm1963, %v3988, %v3990
        %v3992 = vrot.slane %v3940, 1
        %v3993 = vrot.slane %v3941, 1
        %v3994 = vsel %vm1963, %v3992, %v3993
        %v3995 = vrot.slane %v3942, 1
        %v3996 = vsel %vm1963, %v3993, %v3995
        %v3997 = vrot.slane %v3943, 1
        %v3998 = vrot.slane %v3944, 1
        %v3999 = vsel %vm1963, %v3997, %v3998
        %v4000 = vrot.slane %v3945, 1
        %v4001 = vsel %vm1963, %v3998, %v4000
        %v4002 = vrot.slane %v3946, 1
        %v4003 = vrot.slane %v3947, 1
        %v4004 = vsel %vm1963, %v4002, %v4003
        %v4005 = vrot.slane %v3948, 1
        %v4006 = vsel %vm1963, %v4003, %v4005
        %v4007 = vrot.slane %v3949, 1
        %v4008 = vrot.slane %v3950, 1
        %v4009 = vsel %vm1963, %v4007, %v4008
        %v4010 = vrot.slane %v3951, 1
        %v4011 = vsel %vm1963, %v4008, %v4010
        %v4012 = vrot.slane %v3952, 1
        %v4013 = vrot.slane %v3953, 1
        %v4014 = vsel %vm1963, %v4012, %v4013
        %v4015 = vrot.slane %v3954, 1
        %v4016 = vsel %vm1963, %v4013, %v4015
        %v4017 = vrot.slane %v3955, 1
        %v4018 = vrot.slane %v3956, 1
        %v4019 = vsel %vm1963, %v4017, %v4018
        %v4020 = vrot.slane %v3957, 1
        %v4021 = vsel %vm1963, %v4018, %v4020
        %v4038 = vadd.f32 %v3934, %v3984
        %v4039 = vadd.f32 %v3935, %v3986
        %v4040 = vadd.f32 %v3937, %v3989
        %v4041 = vadd.f32 %v3938, %v3991
        %v4042 = vadd.f32 %v3940, %v3994
        %v4043 = vadd.f32 %v3941, %v3996
        %v4044 = vadd.f32 %v3943, %v3999
        %v4045 = vadd.f32 %v3944, %v4001
        %v4046 = vadd.f32 %v3946, %v4004
        %v4047 = vadd.f32 %v3947, %v4006
        %v4048 = vadd.f32 %v3949, %v4009
        %v4049 = vadd.f32 %v3950, %v4011
        %v4050 = vadd.f32 %v3952, %v4014
        %v4051 = vadd.f32 %v3953, %v4016
        %v4052 = vadd.f32 %v3955, %v4019
        %v4053 = vadd.f32 %v3956, %v4021
        %v4054 = vrot.slane %v3934, 2
        %v4055 = vrot.slane %v3935, 2
        %v4056 = vsel %vm2140, %v4054, %v4055
        %v4057 = vrot.slane %v3936, 2
        %v4058 = vsel %vm2140, %v4055, %v4057
        %v4059 = vrot.slane %v3937, 2
        %v4060 = vrot.slane %v3938, 2
        %v4061 = vsel %vm2140, %v4059, %v4060
        %v4062 = vrot.slane %v3939, 2
        %v4063 = vsel %vm2140, %v4060, %v4062
        %v4064 = vrot.slane %v3940, 2
        %v4065 = vrot.slane %v3941, 2
        %v4066 = vsel %vm2140, %v4064, %v4065
        %v4067 = vrot.slane %v3942, 2
        %v4068 = vsel %vm2140, %v4065, %v4067
        %v4069 = vrot.slane %v3943, 2
        %v4070 = vrot.slane %v3944, 2
        %v4071 = vsel %vm2140, %v4069, %v4070
        %v4072 = vrot.slane %v3945, 2
        %v4073 = vsel %vm2140, %v4070, %v4072
        %v4074 = vrot.slane %v3946, 2
        %v4075 = vrot.slane %v3947, 2
        %v4076 = vsel %vm2140, %v4074, %v4075
        %v4077 = vrot.slane %v3948, 2
        %v4078 = vsel %vm2140, %v4075, %v4077
        %v4079 = vrot.slane %v3949, 2
        %v4080 = vrot.slane %v3950, 2
        %v4081 = vsel %vm2140, %v4079, %v4080
        %v4082 = vrot.slane %v3951, 2
        %v4083 = vsel %vm2140, %v4080, %v4082
        %v4084 = vrot.slane %v3952, 2
        %v4085 = vrot.slane %v3953, 2
        %v4086 = vsel %vm2140, %v4084, %v4085
        %v4087 = vrot.slane %v3954, 2
        %v4088 = vsel %vm2140, %v4085, %v4087
        %v4089 = vrot.slane %v3955, 2
        %v4090 = vrot.slane %v3956, 2
        %v4091 = vsel %vm2140, %v4089, %v4090
        %v4092 = vrot.slane %v3957, 2
        %v4093 = vsel %vm2140, %v4090, %v4092
        %v4110 = vadd.f32 %v4038, %v4056
        %v4111 = vadd.f32 %v4039, %v4058
        %v4112 = vadd.f32 %v4040, %v4061
        %v4113 = vadd.f32 %v4041, %v4063
        %v4114 = vadd.f32 %v4042, %v4066
        %v4115 = vadd.f32 %v4043, %v4068
        %v4116 = vadd.f32 %v4044, %v4071
        %v4117 = vadd.f32 %v4045, %v4073
        %v4118 = vadd.f32 %v4046, %v4076
        %v4119 = vadd.f32 %v4047, %v4078
        %v4120 = vadd.f32 %v4048, %v4081
        %v4121 = vadd.f32 %v4049, %v4083
        %v4122 = vadd.f32 %v4050, %v4086
        %v4123 = vadd.f32 %v4051, %v4088
        %v4124 = vadd.f32 %v4052, %v4091
        %v4125 = vadd.f32 %v4053, %v4093
        %v4126 = vrot.slane %v3934, 3
        %v4127 = vrot.slane %v3935, 3
        %v4128 = vsel %vm2333, %v4126, %v4127
        %v4129 = vrot.slane %v3936, 3
        %v4130 = vsel %vm2333, %v4127, %v4129
        %v4131 = vrot.slane %v3937, 3
        %v4132 = vrot.slane %v3938, 3
        %v4133 = vsel %vm2333, %v4131, %v4132
        %v4134 = vrot.slane %v3939, 3
        %v4135 = vsel %vm2333, %v4132, %v4134
        %v4136 = vrot.slane %v3940, 3
        %v4137 = vrot.slane %v3941, 3
        %v4138 = vsel %vm2333, %v4136, %v4137
        %v4139 = vrot.slane %v3942, 3
        %v4140 = vsel %vm2333, %v4137, %v4139
        %v4141 = vrot.slane %v3943, 3
        %v4142 = vrot.slane %v3944, 3
        %v4143 = vsel %vm2333, %v4141, %v4142
        %v4144 = vrot.slane %v3945, 3
        %v4145 = vsel %vm2333, %v4142, %v4144
        %v4146 = vrot.slane %v3946, 3
        %v4147 = vrot.slane %v3947, 3
        %v4148 = vsel %vm2333, %v4146, %v4147
        %v4149 = vrot.slane %v3948, 3
        %v4150 = vsel %vm2333, %v4147, %v4149
        %v4151 = vrot.slane %v3949, 3
        %v4152 = vrot.slane %v3950, 3
        %v4153 = vsel %vm2333, %v4151, %v4152
        %v4154 = vrot.slane %v3951, 3
        %v4155 = vsel %vm2333, %v4152, %v4154
        %v4156 = vrot.slane %v3952, 3
        %v4157 = vrot.slane %v3953, 3
        %v4158 = vsel %vm2333, %v4156, %v4157
        %v4159 = vrot.slane %v3954, 3
        %v4160 = vsel %vm2333, %v4157, %v4159
        %v4161 = vrot.slane %v3955, 3
        %v4162 = vrot.slane %v3956, 3
        %v4163 = vsel %vm2333, %v4161, %v4162
        %v4164 = vrot.slane %v3957, 3
        %v4165 = vsel %vm2333, %v4162, %v4164
        %v4182 = vadd.f32 %v4110, %v4128
        %v4183 = vadd.f32 %v4111, %v4130
        %v4184 = vadd.f32 %v4112, %v4133
        %v4185 = vadd.f32 %v4113, %v4135
        %v4186 = vadd.f32 %v4114, %v4138
        %v4187 = vadd.f32 %v4115, %v4140
        %v4188 = vadd.f32 %v4116, %v4143
        %v4189 = vadd.f32 %v4117, %v4145
        %v4190 = vadd.f32 %v4118, %v4148
        %v4191 = vadd.f32 %v4119, %v4150
        %v4192 = vadd.f32 %v4120, %v4153
        %v4193 = vadd.f32 %v4121, %v4155
        %v4194 = vadd.f32 %v4122, %v4158
        %v4195 = vadd.f32 %v4123, %v4160
        %v4196 = vadd.f32 %v4124, %v4163
        %v4197 = vadd.f32 %v4125, %v4165
        %v4198 = vrot.slane %v3934, 4
        %v4199 = vrot.slane %v3935, 4
        %v4200 = vsel %vm2542, %v4198, %v4199
        %v4201 = vrot.slane %v3936, 4
        %v4202 = vsel %vm2542, %v4199, %v4201
        %v4203 = vrot.slane %v3937, 4
        %v4204 = vrot.slane %v3938, 4
        %v4205 = vsel %vm2542, %v4203, %v4204
        %v4206 = vrot.slane %v3939, 4
        %v4207 = vsel %vm2542, %v4204, %v4206
        %v4208 = vrot.slane %v3940, 4
        %v4209 = vrot.slane %v3941, 4
        %v4210 = vsel %vm2542, %v4208, %v4209
        %v4211 = vrot.slane %v3942, 4
        %v4212 = vsel %vm2542, %v4209, %v4211
        %v4213 = vrot.slane %v3943, 4
        %v4214 = vrot.slane %v3944, 4
        %v4215 = vsel %vm2542, %v4213, %v4214
        %v4216 = vrot.slane %v3945, 4
        %v4217 = vsel %vm2542, %v4214, %v4216
        %v4218 = vrot.slane %v3946, 4
        %v4219 = vrot.slane %v3947, 4
        %v4220 = vsel %vm2542, %v4218, %v4219
        %v4221 = vrot.slane %v3948, 4
        %v4222 = vsel %vm2542, %v4219, %v4221
        %v4223 = vrot.slane %v3949, 4
        %v4224 = vrot.slane %v3950, 4
        %v4225 = vsel %vm2542, %v4223, %v4224
        %v4226 = vrot.slane %v3951, 4
        %v4227 = vsel %vm2542, %v4224, %v4226
        %v4228 = vrot.slane %v3952, 4
        %v4229 = vrot.slane %v3953, 4
        %v4230 = vsel %vm2542, %v4228, %v4229
        %v4231 = vrot.slane %v3954, 4
        %v4232 = vsel %vm2542, %v4229, %v4231
        %v4233 = vrot.slane %v3955, 4
        %v4234 = vrot.slane %v3956, 4
        %v4235 = vsel %vm2542, %v4233, %v4234
        %v4236 = vrot.slane %v3957, 4
        %v4237 = vsel %vm2542, %v4234, %v4236
        %v4254 = vadd.f32 %v4182, %v4200
        %v4255 = vadd.f32 %v4183, %v4202
        %v4256 = vadd.f32 %v4184, %v4205
        %v4257 = vadd.f32 %v4185, %v4207
        %v4258 = vadd.f32 %v4186, %v4210
        %v4259 = vadd.f32 %v4187, %v4212
        %v4260 = vadd.f32 %v4188, %v4215
        %v4261 = vadd.f32 %v4189, %v4217
        %v4262 = vadd.f32 %v4190, %v4220
        %v4263 = vadd.f32 %v4191, %v4222
        %v4264 = vadd.f32 %v4192, %v4225
        %v4265 = vadd.f32 %v4193, %v4227
        %v4266 = vadd.f32 %v4194, %v4230
        %v4267 = vadd.f32 %v4195, %v4232
        %v4268 = vadd.f32 %v4196, %v4235
        %v4269 = vadd.f32 %v4197, %v4237
        %v4270 = vrot.slane %v3934, 5
        %v4271 = vrot.slane %v3935, 5
        %v4272 = vsel %vm2751, %v4270, %v4271
        %v4273 = vrot.slane %v3936, 5
        %v4274 = vsel %vm2751, %v4271, %v4273
        %v4275 = vrot.slane %v3937, 5
        %v4276 = vrot.slane %v3938, 5
        %v4277 = vsel %vm2751, %v4275, %v4276
        %v4278 = vrot.slane %v3939, 5
        %v4279 = vsel %vm2751, %v4276, %v4278
        %v4280 = vrot.slane %v3940, 5
        %v4281 = vrot.slane %v3941, 5
        %v4282 = vsel %vm2751, %v4280, %v4281
        %v4283 = vrot.slane %v3942, 5
        %v4284 = vsel %vm2751, %v4281, %v4283
        %v4285 = vrot.slane %v3943, 5
        %v4286 = vrot.slane %v3944, 5
        %v4287 = vsel %vm2751, %v4285, %v4286
        %v4288 = vrot.slane %v3945, 5
        %v4289 = vsel %vm2751, %v4286, %v4288
        %v4290 = vrot.slane %v3946, 5
        %v4291 = vrot.slane %v3947, 5
        %v4292 = vsel %vm2751, %v4290, %v4291
        %v4293 = vrot.slane %v3948, 5
        %v4294 = vsel %vm2751, %v4291, %v4293
        %v4295 = vrot.slane %v3949, 5
        %v4296 = vrot.slane %v3950, 5
        %v4297 = vsel %vm2751, %v4295, %v4296
        %v4298 = vrot.slane %v3951, 5
        %v4299 = vsel %vm2751, %v4296, %v4298
        %v4300 = vrot.slane %v3952, 5
        %v4301 = vrot.slane %v3953, 5
        %v4302 = vsel %vm2751, %v4300, %v4301
        %v4303 = vrot.slane %v3954, 5
        %v4304 = vsel %vm2751, %v4301, %v4303
        %v4305 = vrot.slane %v3955, 5
        %v4306 = vrot.slane %v3956, 5
        %v4307 = vsel %vm2751, %v4305, %v4306
        %v4308 = vrot.slane %v3957, 5
        %v4309 = vsel %vm2751, %v4306, %v4308
        %v4326 = vadd.f32 %v4254, %v4272
        %v4327 = vadd.f32 %v4255, %v4274
        %v4328 = vadd.f32 %v4256, %v4277
        %v4329 = vadd.f32 %v4257, %v4279
        %v4330 = vadd.f32 %v4258, %v4282
        %v4331 = vadd.f32 %v4259, %v4284
        %v4332 = vadd.f32 %v4260, %v4287
        %v4333 = vadd.f32 %v4261, %v4289
        %v4334 = vadd.f32 %v4262, %v4292
        %v4335 = vadd.f32 %v4263, %v4294
        %v4336 = vadd.f32 %v4264, %v4297
        %v4337 = vadd.f32 %v4265, %v4299
        %v4338 = vadd.f32 %v4266, %v4302
        %v4339 = vadd.f32 %v4267, %v4304
        %v4340 = vadd.f32 %v4268, %v4307
        %v4341 = vadd.f32 %v4269, %v4309
        %v4342 = vrot.slane %v3934, 6
        %v4343 = vrot.slane %v3935, 6
        %v4344 = vsel %vm2960, %v4342, %v4343
        %v4345 = vrot.slane %v3936, 6
        %v4346 = vsel %vm2960, %v4343, %v4345
        %v4347 = vrot.slane %v3937, 6
        %v4348 = vrot.slane %v3938, 6
        %v4349 = vsel %vm2960, %v4347, %v4348
        %v4350 = vrot.slane %v3939, 6
        %v4351 = vsel %vm2960, %v4348, %v4350
        %v4352 = vrot.slane %v3940, 6
        %v4353 = vrot.slane %v3941, 6
        %v4354 = vsel %vm2960, %v4352, %v4353
        %v4355 = vrot.slane %v3942, 6
        %v4356 = vsel %vm2960, %v4353, %v4355
        %v4357 = vrot.slane %v3943, 6
        %v4358 = vrot.slane %v3944, 6
        %v4359 = vsel %vm2960, %v4357, %v4358
        %v4360 = vrot.slane %v3945, 6
        %v4361 = vsel %vm2960, %v4358, %v4360
        %v4362 = vrot.slane %v3946, 6
        %v4363 = vrot.slane %v3947, 6
        %v4364 = vsel %vm2960, %v4362, %v4363
        %v4365 = vrot.slane %v3948, 6
        %v4366 = vsel %vm2960, %v4363, %v4365
        %v4367 = vrot.slane %v3949, 6
        %v4368 = vrot.slane %v3950, 6
        %v4369 = vsel %vm2960, %v4367, %v4368
        %v4370 = vrot.slane %v3951, 6
        %v4371 = vsel %vm2960, %v4368, %v4370
        %v4372 = vrot.slane %v3952, 6
        %v4373 = vrot.slane %v3953, 6
        %v4374 = vsel %vm2960, %v4372, %v4373
        %v4375 = vrot.slane %v3954, 6
        %v4376 = vsel %vm2960, %v4373, %v4375
        %v4377 = vrot.slane %v3955, 6
        %v4378 = vrot.slane %v3956, 6
        %v4379 = vsel %vm2960, %v4377, %v4378
        %v4380 = vrot.slane %v3957, 6
        %v4381 = vsel %vm2960, %v4378, %v4380
        %v4398 = vadd.f32 %v4326, %v4344
        %v4399 = vadd.f32 %v4327, %v4346
        %v4400 = vadd.f32 %v4328, %v4349
        %v4401 = vadd.f32 %v4329, %v4351
        %v4402 = vadd.f32 %v4330, %v4354
        %v4403 = vadd.f32 %v4331, %v4356
        %v4404 = vadd.f32 %v4332, %v4359
        %v4405 = vadd.f32 %v4333, %v4361
        %v4406 = vadd.f32 %v4334, %v4364
        %v4407 = vadd.f32 %v4335, %v4366
        %v4408 = vadd.f32 %v4336, %v4369
        %v4409 = vadd.f32 %v4337, %v4371
        %v4410 = vadd.f32 %v4338, %v4374
        %v4411 = vadd.f32 %v4339, %v4376
        %v4412 = vadd.f32 %v4340, %v4379
        %v4413 = vadd.f32 %v4341, %v4381
        %v4414 = vmul.f32 %v4398, %v278
        %v4415 = vmul.f32 %v4399, %v279
        %v4416 = vmul.f32 %v4400, %v278
        %v4417 = vmul.f32 %v4401, %v279
        %v4418 = vmul.f32 %v4402, %v278
        %v4419 = vmul.f32 %v4403, %v279
        %v4420 = vmul.f32 %v4404, %v278
        %v4421 = vmul.f32 %v4405, %v279
        %v4422 = vmul.f32 %v4406, %v278
        %v4423 = vmul.f32 %v4407, %v279
        %v4424 = vmul.f32 %v4408, %v278
        %v4425 = vmul.f32 %v4409, %v279
        %v4426 = vmul.f32 %v4410, %v278
        %v4427 = vmul.f32 %v4411, %v279
        %v4428 = vmul.f32 %v4412, %v278
        %v4429 = vmul.f32 %v4413, %v279
        %v4430 = vrot.slane %v243, 6
        %v4431 = vrot.slane %v244, 6
        %v4432 = vsel %vm2960, %v4430, %v4431
        %v4433 = vrot.slane %v245, 6
        %v4434 = vsel %vm2960, %v4431, %v4433
        %v4435 = vrot.slane %v247, 6
        %v4436 = vrot.slane %v248, 6
        %v4437 = vsel %vm2960, %v4435, %v4436
        %v4438 = vrot.slane %v249, 6
        %v4439 = vsel %vm2960, %v4436, %v4438
        %v4440 = vrot.slane %v251, 6
        %v4441 = vrot.slane %v252, 6
        %v4442 = vsel %vm2960, %v4440, %v4441
        %v4443 = vrot.slane %v253, 6
        %v4444 = vsel %vm2960, %v4441, %v4443
        %v4445 = vrot.slane %v255, 6
        %v4446 = vrot.slane %v256, 6
        %v4447 = vsel %vm2960, %v4445, %v4446
        %v4448 = vrot.slane %v257, 6
        %v4449 = vsel %vm2960, %v4446, %v4448
        %4450 = vrot.lane.b32.xlu0 %v4432, 122
        %v4451 = vpop.permute.xlu0 %4450
        %4452 = vrot.lane.b32.xlu0 %v4434, 122
        %v4453 = vpop.permute.xlu0 %4452
        %4454 = vrot.lane.b32.xlu0 %v4437, 122
        %v4455 = vpop.permute.xlu0 %4454
        %4456 = vrot.lane.b32.xlu0 %v4439, 122
        %v4457 = vpop.permute.xlu0 %4456
        %4458 = vrot.lane.b32.xlu0 %v4442, 122
        %v4459 = vpop.permute.xlu0 %4458
        %4460 = vrot.lane.b32.xlu0 %v4444, 122
        %v4461 = vpop.permute.xlu0 %4460
        %4462 = vrot.lane.b32.xlu0 %v4447, 122
        %v4463 = vpop.permute.xlu0 %4462
        %4464 = vrot.lane.b32.xlu0 %v4449, 122
        %v4465 = vpop.permute.xlu0 %4464
        %v4474 = vmul.f32 %v4414, %v4451
        %v4475 = vmul.f32 %v4415, %v4453
        %v4476 = vmul.f32 %v4416, %v4455
        %v4477 = vmul.f32 %v4417, %v4457
        %v4478 = vmul.f32 %v4418, %v4459
        %v4479 = vmul.f32 %v4419, %v4461
        %v4480 = vmul.f32 %v4420, %v4463
        %v4481 = vmul.f32 %v4421, %v4465
        %v4482 = vadd.f32 %v4474, %v4422
        %v4483 = vadd.f32 %v4475, %v4423
        %v4484 = vadd.f32 %v4476, %v4424
        %v4485 = vadd.f32 %v4477, %v4425
        %v4486 = vadd.f32 %v4478, %v4426
        %v4487 = vadd.f32 %v4479, %v4427
        %v4488 = vadd.f32 %v4480, %v4428
        %v4489 = vadd.f32 %v4481, %v4429
        %vm4490 = vcmask 130048
        %v4491 = vsel %vm4490, %v4482, 0.0
        %v4492 = vsel %vm4490, %v4484, 0.0
        %v4493 = vadd.f32 %v4491, %v4492
        %v4494 = vsel %vm4490, %v4486, 0.0
        %v4495 = vadd.f32 %v4493, %v4494
        %v4496 = vsel %vm4490, %v4488, 0.0
        %v4497 = vadd.f32 %v4495, %v4496
        %v4498 = vsel %vm4490, %v4483, 0.0
        %v4499 = vsel %vm4490, %v4485, 0.0
        %v4500 = vadd.f32 %v4498, %v4499
        %v4501 = vsel %vm4490, %v4487, 0.0
        %v4502 = vadd.f32 %v4500, %v4501
        %v4503 = vsel %vm4490, %v4489, 0.0
        %v4504 = vadd.f32 %v4502, %v4503
        %v4505 = vrcp.pop 4.0
        %v4506 = vmul.f32 %v4497, %v4505
        %v4507 = vmul.f32 %v4504, %v4505
        %4508 = vst.msk [vmem:[%s232] sm:$0xff] %vm4490, %v4506
        %4509 = vst.msk [vmem:[%s232 + $0x8] sm:$0xff] %vm4490, %v4507
        %s4510 = sand.u32 %s142, 1
        %s4511 = scalar_lea.sflag [#allocation3], %s4510
        %s4512 = sand.u32 %s142, 1
        %s4513 = smul.addr %s4512, 16
        %s4514 = scalar_lea.vmem [#allocation2], %s4513
        // Predicated region
        $region41: #{tpu_custom_call.1} parent=39 // pred_check
          %p4515 = pneg %p152
        $region42: #{tpu_custom_call.1} parent=39 // pred_check_branch
          %4517 = sbr.rel (%p4515) target = $region44
        $region43: #{tpu_custom_call.1} parent=39 // pred_region
          %s4519 = ssub.s32 256, 256
          %4520 = vsyncadd %s4511, %s4519
          %s4521 = smul.addr %s19, 2
          %s4522 = smul.addr %s4521, 128
          %s4523 = scalar_lea.hbm %s5, %s4522
          %s4524 = sshll.u32 %s4514, 4
          %s4525 = int_to_ptr.vmem [resolvable:$true] %s4524
          %4530 = dma.vmem_to_hbm [thread:$0]  %s4525, 256, %s4523, %s4511, 128, 128, 8
        $region44: #{tpu_custom_call.1} parent=39 // pred_fallthru
          _
      $region40: #{tpu_custom_call.1} parent=5 // pred_fallthru
        _
      %p4531 = scmp.le.s32.totalorder 2, %s14
      // Predicated region
      $region45: #{tpu_custom_call.1} parent=5 // pred_check
        %p4532 = pneg %p4531
      $region46: #{tpu_custom_call.1} parent=5 // pred_check_branch
        %4534 = sbr.rel (%p4532) target = $region48
      $region47: #{tpu_custom_call.1} parent=5 // pred_region
        %s4535 = ssub.s32 %s14, 2
        // Predicated region
        $region49: #{tpu_custom_call.1} parent=47 // pred_check
          %p4536 = pneg %p158
        $region50: #{tpu_custom_call.1} parent=47 // pred_check_branch
          %4538 = sbr.rel (%p4536) target = $region52
        $region51: #{tpu_custom_call.1} parent=47 // pred_region
          %s4539 = sand.u32 %s143, 1
          %s4540 = scalar_lea.sflag [#allocation3], %s4539
          %s4541 = sand.u32 %s143, 1
          %s4542 = smul.addr %s4541, 16
          %s4543 = scalar_lea.vmem [#allocation2], %s4542
          %4544 = dma.done %s4540, 256
        $region52: #{tpu_custom_call.1} parent=47 // pred_fallthru
          _
      $region48: #{tpu_custom_call.1} parent=5 // pred_fallthru
        _
    $region6: #{tpu_custom_call.1} parent=1 // loop_footer
      %s18 = sadd.s32 1, %s14
    $region7: #{tpu_custom_call.1} parent=1 // loop_footer_branch
      %13 = sbr.rel target = $region3
    $region8: #{tpu_custom_call.1} parent=1 // loop_exit
      _
    %4545 = vsyncpa [#allocation3], 1
    %s4546 = scalar_lea.sflag [#allocation3], 1
    %4547 = vsyncpa %s4546, 1

</llo_original>
